<compile_context>
chip_gen: v6e
topology: v6e:2x2x1
jax: 0.10.0
libtpu: 0.0.40
codegen_flags: <defaults>
</compile_context>

<pallas_src>
import functools
import math

import jax
import jax.numpy as jnp
from jax import lax
from jax.experimental import pallas as pl
from jax.experimental.pallas import tpu as pltpu

# ---------------- synthetic BERT config (small) ----------------
VOCAB = 128
MAX_POS = 32
TYPE_VOCAB = 2
HIDDEN = 32
NUM_LAYERS = 2
NUM_HEADS = 4
HEAD_DIM = HIDDEN // NUM_HEADS
INTERMEDIATE = 64
LN_EPS = 1e-12
MASK_BIAS = -10000.0  # HF additive-mask convention


# ---------------- in-kernel helpers ----------------
def _layernorm(x, g, b):
    mu = jnp.mean(x, axis=-1, keepdims=True)
    var = jnp.mean(jnp.square(x - mu), axis=-1, keepdims=True)
    return (x - mu) * lax.rsqrt(var + LN_EPS) * g + b


# ---------------- the fused, layer-streamed kernel ----------------
def _bert_layer_kernel(
    emb_ref,                       # [B*S, H] f32 (constant block across layers)
    bias_ref,                      # [B, 1, S] f32 additive attention bias
    emb_g_ref, emb_b_ref,          # [1, H] f32
    w_qkv_ref, b_qkv_ref,          # [1, H, 3H] bf16, [1, 1, 3H] f32
    w_ao_ref, b_ao_ref,            # [1, H, H] bf16,  [1, 1, H] f32
    ln1_g_ref, ln1_b_ref,          # [1, 1, H] f32
    w_i_ref, b_i_ref,              # [1, H, I] bf16,  [1, 1, I] f32
    w_o2_ref, b_o2_ref,            # [1, I, H] bf16,  [1, 1, H] f32
    ln2_g_ref, ln2_b_ref,          # [1, 1, H] f32
    w_pool_ref, b_pool_ref,        # [H, H] bf16, [1, H] f32
    w_fc_ref, b_fc_ref,            # [H, H] bf16, [1, H] f32
    out_ref,                       # [B, H] f32
    h_scratch,                     # VMEM [B*S, H] f32, resident across layers
    *, batch, seq,
):
    l = pl.program_id(0)
    scale = 1.0 / math.sqrt(HEAD_DIM)

    # ---- embeddings LayerNorm (only on the first grid step) ----
    @pl.when(l == 0)
    def _():
        h_scratch[...] = _layernorm(emb_ref[...], emb_g_ref[...], emb_b_ref[...])

    h = h_scratch[...]                                              # [B*S, H] f32

    # ---- fused QKV projection: one [B*S,H] x [H,3H] bf16 MXU matmul ----
    qkv = jnp.dot(h.astype(jnp.bfloat16), w_qkv_ref[0],
                  preferred_element_type=jnp.float32) + b_qkv_ref[0]
    qkv3 = qkv.reshape(batch, seq, 3 * HIDDEN)                      # [B, S, 3H]

    # additive mask bias, broadcast ONCE per layer (hoisted out of head loop)
    bias3 = jnp.broadcast_to(bias_ref[...], (batch, seq, seq))      # [B, S, S]

    # ---- attention: per-head loop, batched over the batch dim.
    # Output projection accumulated per head-slice of W_o => no concatenates.
    w_ao = w_ao_ref[0]                                              # [H, H] bf16
    attn_out = None
    for hh in range(NUM_HEADS):
        c0 = hh * HEAD_DIM
        q_h = qkv3[:, :, c0:c0 + HEAD_DIM].astype(jnp.bfloat16)                # [B,S,Dh]
        k_h = qkv3[:, :, HIDDEN + c0:HIDDEN + c0 + HEAD_DIM].astype(jnp.bfloat16)
        v_h = qkv3[:, :, 2 * HIDDEN + c0:2 * HIDDEN + c0 + HEAD_DIM].astype(jnp.bfloat16)

        s = jnp.einsum('bqd,bkd->bqk', q_h, k_h,
                       preferred_element_type=jnp.float32) * scale + bias3     # [B,S,S]
        m = jnp.max(s, axis=-1, keepdims=True)
        p = jnp.exp(s - m)
        p = p * pl.reciprocal(jnp.sum(p, axis=-1, keepdims=True), approx=True)
        ctx = jnp.einsum('bqk,bkd->bqd', p.astype(jnp.bfloat16), v_h,
                         preferred_element_type=jnp.float32)                   # [B,S,Dh]
        part = jnp.dot(ctx.reshape(batch * seq, HEAD_DIM).astype(jnp.bfloat16),
                       w_ao[c0:c0 + HEAD_DIM, :],
                       preferred_element_type=jnp.float32)                     # [B*S,H]
        attn_out = part if attn_out is None else attn_out + part
    attn_out = attn_out + b_ao_ref[0]

    # ---- residual + LayerNorm, feed-forward, residual + LayerNorm ----
    h1 = _layernorm(attn_out + h, ln1_g_ref[0], ln1_b_ref[0])

    inter = jnp.dot(h1.astype(jnp.bfloat16), w_i_ref[0],
                    preferred_element_type=jnp.float32) + b_i_ref[0]
    # TODO(synk): HF BERT uses exact (erf) GELU; tanh approximation used here.
    inter = jax.nn.gelu(inter, approximate=True)
    ffn = jnp.dot(inter.astype(jnp.bfloat16), w_o2_ref[0],
                  preferred_element_type=jnp.float32) + b_o2_ref[0]
    h2 = _layernorm(ffn + h1, ln2_g_ref[0], ln2_b_ref[0])
    h_scratch[...] = h2

    # ---- epilogue (last layer only): pooler [CLS] -> tanh, dropout=id, fc ----
    @pl.when(l == pl.num_programs(0) - 1)
    def _():
        cls = h_scratch[pl.ds(0, batch, stride=seq), :]             # strided CLS gather
        pooled = jnp.tanh(
            jnp.dot(cls.astype(jnp.bfloat16), w_pool_ref[...],
                    preferred_element_type=jnp.float32) + b_pool_ref[...])
        out = jnp.dot(pooled.astype(jnp.bfloat16), w_fc_ref[...],
                      preferred_element_type=jnp.float32) + b_fc_ref[...]
        out_ref[...] = out.astype(out_ref.dtype)


# ---------------- parameter init (deterministic, synthetic) ----------------
def _dense(key, fan_in, fan_out):
    w = jax.random.normal(key, (fan_in, fan_out), jnp.float32) * 0.02
    b = jnp.zeros((fan_out,), jnp.float32)
    return w, b


def init_params(key):
    keys = jax.random.split(key, 5 + NUM_LAYERS)
    p = {
        "word_emb": jax.random.normal(keys[0], (VOCAB, HIDDEN), jnp.float32) * 0.02,
        "pos_emb": jax.random.normal(keys[1], (MAX_POS, HIDDEN), jnp.float32) * 0.02,
        "type_emb": jax.random.normal(keys[2], (TYPE_VOCAB, HIDDEN), jnp.float32) * 0.02,
        "emb_ln_g": jnp.ones((HIDDEN,), jnp.float32),
        "emb_ln_b": jnp.zeros((HIDDEN,), jnp.float32),
    }
    layers = []
    for i in range(NUM_LAYERS):
        lk = jax.random.split(keys[3 + i], 6)
        layer = {}
        layer["wq"], layer["bq"] = _dense(lk[0], HIDDEN, HIDDEN)
        layer["wk"], layer["bk"] = _dense(lk[1], HIDDEN, HIDDEN)
        layer["wv"], layer["bv"] = _dense(lk[2], HIDDEN, HIDDEN)
        layer["wo"], layer["bo"] = _dense(lk[3], HIDDEN, HIDDEN)
        layer["ln1_g"] = jnp.ones((HIDDEN,), jnp.float32)
        layer["ln1_b"] = jnp.zeros((HIDDEN,), jnp.float32)
        layer["wi"], layer["bi"] = _dense(lk[4], HIDDEN, INTERMEDIATE)
        layer["wo2"], layer["bo2"] = _dense(lk[5], INTERMEDIATE, HIDDEN)
        layer["ln2_g"] = jnp.ones((HIDDEN,), jnp.float32)
        layer["ln2_b"] = jnp.zeros((HIDDEN,), jnp.float32)
        layers.append(layer)
    p["layers"] = layers
    kpool, kfc = jax.random.split(keys[3 + NUM_LAYERS])
    p["w_pool"], p["b_pool"] = _dense(kpool, HIDDEN, HIDDEN)
    p["w_fc"], p["b_fc"] = _dense(kfc, HIDDEN, HIDDEN)
    return p


def pack_params(p):
    """One-time packing (outside jit): stack per-layer weights on [NUM_LAYERS],
    concat QKV, cast MXU weights to bf16, pre-reshape biases / LN params."""
    L = p["layers"]
    bf16 = jnp.bfloat16

    def stack(fn):
        return jnp.stack([fn(layer) for layer in L])

    return {
        "word_emb": p["word_emb"],
        "pos_emb": p["pos_emb"],
        "type_emb": p["type_emb"],
        "emb_ln_g": p["emb_ln_g"][None, :],
        "emb_ln_b": p["emb_ln_b"][None, :],
        "w_qkv": stack(lambda l: jnp.concatenate(
            [l["wq"], l["wk"], l["wv"]], axis=1)).astype(bf16),        # [L,H,3H]
        "b_qkv": stack(lambda l: jnp.concatenate(
            [l["bq"], l["bk"], l["bv"]])[None, :]),                    # [L,1,3H]
        "w_ao": stack(lambda l: l["wo"]).astype(bf16),
        "b_ao": stack(lambda l: l["bo"][None, :]),
        "ln1_g": stack(lambda l: l["ln1_g"][None, :]),
        "ln1_b": stack(lambda l: l["ln1_b"][None, :]),
        "w_i": stack(lambda l: l["wi"]).astype(bf16),
        "b_i": stack(lambda l: l["bi"][None, :]),
        "w_o2": stack(lambda l: l["wo2"]).astype(bf16),
        "b_o2": stack(lambda l: l["bo2"][None, :]),
        "ln2_g": stack(lambda l: l["ln2_g"][None, :]),
        "ln2_b": stack(lambda l: l["ln2_b"][None, :]),
        "w_pool": p["w_pool"].astype(bf16),
        "b_pool": p["b_pool"][None, :],
        "w_fc": p["w_fc"].astype(bf16),
        "b_fc": p["b_fc"][None, :],
    }


# ---------------- forward pass ----------------
def bert_text_processor(packed, input_ids, attention_mask):
    """input_ids/attention_mask: [B, S] int32 -> [B, HIDDEN] float32."""
    B, S = input_ids.shape

    # --- embeddings: table gathers are plain-JAX glue; LN runs in-kernel ---
    # TODO(synk): fuse this gather via PrefetchScalarGridSpec + pl.Element at real sizes.
    we = jnp.take(packed["word_emb"], input_ids, axis=0)            # [B,S,H]
    pe = packed["pos_emb"][:S][None, :, :]                          # [1,S,H]
    te = packed["type_emb"][0][None, None, :]                       # token_type_ids == 0
    emb = (we + pe + te).reshape(B * S, HIDDEN).astype(jnp.float32)
    maskf = attention_mask.astype(jnp.float32)
    bias = ((1.0 - maskf) * jnp.float32(MASK_BIAS))[:, None, :]     # [B,1,S]

    kern = functools.partial(_bert_layer_kernel, batch=B, seq=S)

    grid_spec = pltpu.PrefetchScalarGridSpec(
        num_scalar_prefetch=0,
        grid=(NUM_LAYERS,),
        in_specs=[
            pl.BlockSpec((B * S, HIDDEN), lambda l: (0, 0)),               # emb
            pl.BlockSpec((B, 1, S), lambda l: (0, 0, 0)),                  # bias
            pl.BlockSpec((1, HIDDEN), lambda l: (0, 0)),                   # emb_ln_g
            pl.BlockSpec((1, HIDDEN), lambda l: (0, 0)),                   # emb_ln_b
            pl.BlockSpec((1, HIDDEN, 3 * HIDDEN), lambda l: (l, 0, 0)),    # w_qkv
            pl.BlockSpec((1, 1, 3 * HIDDEN), lambda l: (l, 0, 0)),         # b_qkv
            pl.BlockSpec((1, HIDDEN, HIDDEN), lambda l: (l, 0, 0)),        # w_ao
            pl.BlockSpec((1, 1, HIDDEN), lambda l: (l, 0, 0)),             # b_ao
            pl.BlockSpec((1, 1, HIDDEN), lambda l: (l, 0, 0)),             # ln1_g
            pl.BlockSpec((1, 1, HIDDEN), lambda l: (l, 0, 0)),             # ln1_b
            pl.BlockSpec((1, HIDDEN, INTERMEDIATE), lambda l: (l, 0, 0)),  # w_i
            pl.BlockSpec((1, 1, INTERMEDIATE), lambda l: (l, 0, 0)),       # b_i
            pl.BlockSpec((1, INTERMEDIATE, HIDDEN), lambda l: (l, 0, 0)),  # w_o2
            pl.BlockSpec((1, 1, HIDDEN), lambda l: (l, 0, 0)),             # b_o2
            pl.BlockSpec((1, 1, HIDDEN), lambda l: (l, 0, 0)),             # ln2_g
            pl.BlockSpec((1, 1, HIDDEN), lambda l: (l, 0, 0)),             # ln2_b
            pl.BlockSpec((HIDDEN, HIDDEN), lambda l: (0, 0)),              # w_pool
            pl.BlockSpec((1, HIDDEN), lambda l: (0, 0)),                   # b_pool
            pl.BlockSpec((HIDDEN, HIDDEN), lambda l: (0, 0)),              # w_fc
            pl.BlockSpec((1, HIDDEN), lambda l: (0, 0)),                   # b_fc
        ],
        out_specs=pl.BlockSpec((B, HIDDEN), lambda l: (0, 0)),
        scratch_shapes=[pltpu.VMEM((B * S, HIDDEN), jnp.float32)],
    )

    out = pl.pallas_call(
        kern,
        out_shape=jax.ShapeDtypeStruct((B, HIDDEN), jnp.float32),
        grid_spec=grid_spec,
        compiler_params=pltpu.CompilerParams(
            dimension_semantics=("arbitrary",),      # layer axis carries activations
            vmem_limit_bytes=32 * 1024 * 1024,
        ),
    )(
        emb, bias,
        packed["emb_ln_g"], packed["emb_ln_b"],
        packed["w_qkv"], packed["b_qkv"],
        packed["w_ao"], packed["b_ao"],
        packed["ln1_g"], packed["ln1_b"],
        packed["w_i"], packed["b_i"],
        packed["w_o2"], packed["b_o2"],
        packed["ln2_g"], packed["ln2_b"],
        packed["w_pool"], packed["b_pool"],
        packed["w_fc"], packed["b_fc"],
    )
    return out                                                      # [B, HIDDEN]


if __name__ == "__main__":
    key = jax.random.PRNGKey(0)
    kparam, kids = jax.random.split(key)
    params = init_params(kparam)
    packed = pack_params(params)   # one-time packing, outside jit

    B, S = 2, 8
    input_ids = jax.random.randint(kids, (B, S), 0, VOCAB, dtype=jnp.int32)
    attention_mask = jnp.ones((B, S), dtype=jnp.int32).at[1, 6:].set(0)

    fwd = jax.jit(functools.partial(bert_text_processor, packed))
    out = jax.block_until_ready(fwd(input_ids, attention_mask))
    assert out.shape == (B, HIDDEN) and out.dtype == jnp.float32
    assert bool(jnp.all(jnp.isfinite(out)))
    print("KERNEL_OK")
</pallas_src>

<mosaic_0001>
module attributes {stable_mosaic.version = 11 : i64} {
  func.func @_bert_layer_kernel(%arg0: i32, %arg1: memref<16x32xf32, #tpu.memory_space<vmem>>, %arg2: memref<2x1x8xf32, #tpu.memory_space<vmem>>, %arg3: memref<1x32xf32, #tpu.memory_space<vmem>>, %arg4: memref<1x32xf32, #tpu.memory_space<vmem>>, %arg5: memref<1x32x96xbf16, #tpu.memory_space<vmem>>, %arg6: memref<1x1x96xf32, #tpu.memory_space<vmem>>, %arg7: memref<1x32x32xbf16, #tpu.memory_space<vmem>>, %arg8: memref<1x1x32xf32, #tpu.memory_space<vmem>>, %arg9: memref<1x1x32xf32, #tpu.memory_space<vmem>>, %arg10: memref<1x1x32xf32, #tpu.memory_space<vmem>>, %arg11: memref<1x32x64xbf16, #tpu.memory_space<vmem>>, %arg12: memref<1x1x64xf32, #tpu.memory_space<vmem>>, %arg13: memref<1x64x32xbf16, #tpu.memory_space<vmem>>, %arg14: memref<1x1x32xf32, #tpu.memory_space<vmem>>, %arg15: memref<1x1x32xf32, #tpu.memory_space<vmem>>, %arg16: memref<1x1x32xf32, #tpu.memory_space<vmem>>, %arg17: memref<32x32xbf16, #tpu.memory_space<vmem>>, %arg18: memref<1x32xf32, #tpu.memory_space<vmem>>, %arg19: memref<32x32xbf16, #tpu.memory_space<vmem>>, %arg20: memref<1x32xf32, #tpu.memory_space<vmem>>, %arg21: memref<2x32xf32, #tpu.memory_space<vmem>>, %arg22: memref<16x32xf32, #tpu.memory_space<vmem>>) attributes {dimension_semantics = [#tpu.dimension_semantics<arbitrary>], iteration_bounds = array<i64: 2>, scalar_prefetch = 0 : i64, scratch_operands = 1 : i64, tpu.core_type = #tpu.core_type<tc>, window_params = [{pipeline_mode = #tpu.pipeline_mode<synchronous>, transform_indices = @transform_0, window_bounds = array<i64: 16, 32>}, {pipeline_mode = #tpu.pipeline_mode<synchronous>, transform_indices = @transform_1, window_bounds = array<i64: 2, 1, 8>}, {pipeline_mode = #tpu.pipeline_mode<synchronous>, transform_indices = @transform_2, window_bounds = array<i64: 1, 32>}, {pipeline_mode = #tpu.pipeline_mode<synchronous>, transform_indices = @transform_3, window_bounds = array<i64: 1, 32>}, {transform_indices = @transform_4, window_bounds = array<i64: 1, 32, 96>}, {transform_indices = @transform_5, window_bounds = array<i64: 1, 1, 96>}, {transform_indices = @transform_6, window_bounds = array<i64: 1, 32, 32>}, {transform_indices = @transform_7, window_bounds = array<i64: 1, 1, 32>}, {transform_indices = @transform_8, window_bounds = array<i64: 1, 1, 32>}, {transform_indices = @transform_9, window_bounds = array<i64: 1, 1, 32>}, {transform_indices = @transform_10, window_bounds = array<i64: 1, 32, 64>}, {transform_indices = @transform_11, window_bounds = array<i64: 1, 1, 64>}, {transform_indices = @transform_12, window_bounds = array<i64: 1, 64, 32>}, {transform_indices = @transform_13, window_bounds = array<i64: 1, 1, 32>}, {transform_indices = @transform_14, window_bounds = array<i64: 1, 1, 32>}, {transform_indices = @transform_15, window_bounds = array<i64: 1, 1, 32>}, {pipeline_mode = #tpu.pipeline_mode<synchronous>, transform_indices = @transform_16, window_bounds = array<i64: 32, 32>}, {pipeline_mode = #tpu.pipeline_mode<synchronous>, transform_indices = @transform_17, window_bounds = array<i64: 1, 32>}, {pipeline_mode = #tpu.pipeline_mode<synchronous>, transform_indices = @transform_18, window_bounds = array<i64: 32, 32>}, {pipeline_mode = #tpu.pipeline_mode<synchronous>, transform_indices = @transform_19, window_bounds = array<i64: 1, 32>}, {pipeline_mode = #tpu.pipeline_mode<synchronous>, transform_indices = @transform_20, window_bounds = array<i64: 2, 32>}]} {
    %c0_i32 = arith.constant 0 : i32
    %0 = arith.cmpi eq, %arg0, %c0_i32 : i32
    %1 = arith.extui %0 : i1 to i32
    %c0_i32_0 = arith.constant 0 : i32
    %2 = arith.cmpi ne, %1, %c0_i32_0 : i32
    scf.if %2 {
      %c0_84 = arith.constant 0 : index
      %c0_85 = arith.constant 0 : index
      %216 = vector.load %arg1[%c0_84, %c0_85] : memref<16x32xf32, #tpu.memory_space<vmem>>, vector<16x32xf32>
      %c0_86 = arith.constant 0 : index
      %c0_87 = arith.constant 0 : index
      %217 = vector.load %arg3[%c0_86, %c0_87] : memref<1x32xf32, #tpu.memory_space<vmem>>, vector<1x32xf32>
      %c0_88 = arith.constant 0 : index
      %c0_89 = arith.constant 0 : index
      %218 = vector.load %arg4[%c0_88, %c0_89] : memref<1x32xf32, #tpu.memory_space<vmem>>, vector<1x32xf32>
      %cst_90 = arith.constant dense<0.000000e+00> : vector<16xf32>
      %219 = vector.multi_reduction <add>, %216, %cst_90 [1] : vector<16x32xf32> to vector<16xf32>
      %220 = vector.shape_cast %219 : vector<16xf32> to vector<16x1xf32>
      %cst_91 = arith.constant 3.200000e+01 : f32
      %221 = vector.broadcast %cst_91 : f32 to vector<16x1xf32>
      %222 = arith.divf %220, %221 : vector<16x1xf32>
      %223 = vector.broadcast %222 : vector<16x1xf32> to vector<16x32xf32>
      %224 = arith.subf %216, %223 : vector<16x32xf32>
      %225 = arith.mulf %224, %224 : vector<16x32xf32>
      %cst_92 = arith.constant dense<0.000000e+00> : vector<16xf32>
      %226 = vector.multi_reduction <add>, %225, %cst_92 [1] : vector<16x32xf32> to vector<16xf32>
      %227 = vector.shape_cast %226 : vector<16xf32> to vector<16x1xf32>
      %cst_93 = arith.constant 3.200000e+01 : f32
      %228 = vector.broadcast %cst_93 : f32 to vector<16x1xf32>
      %229 = arith.divf %227, %228 : vector<16x1xf32>
      %230 = vector.broadcast %222 : vector<16x1xf32> to vector<16x32xf32>
      %231 = arith.subf %216, %230 : vector<16x32xf32>
      %cst_94 = arith.constant 9.99999996E-13 : f32
      %232 = vector.broadcast %cst_94 : f32 to vector<16x1xf32>
      %233 = arith.addf %229, %232 : vector<16x1xf32>
      %234 = math.rsqrt %233 : vector<16x1xf32>
      %235 = vector.broadcast %234 : vector<16x1xf32> to vector<16x32xf32>
      %236 = arith.mulf %231, %235 : vector<16x32xf32>
      %237 = vector.broadcast %217 : vector<1x32xf32> to vector<16x32xf32>
      %238 = arith.mulf %236, %237 : vector<16x32xf32>
      %239 = vector.broadcast %218 : vector<1x32xf32> to vector<16x32xf32>
      %240 = arith.addf %238, %239 : vector<16x32xf32>
      %c0_95 = arith.constant 0 : index
      %c0_96 = arith.constant 0 : index
      %241 = vector.load %arg22[%c0_95, %c0_96] : memref<16x32xf32, #tpu.memory_space<vmem>>, vector<16x32xf32>
      tpu.vector_store %arg22[%c0_95, %c0_96], %240 {strides = array<i32>} : memref<16x32xf32, #tpu.memory_space<vmem>>, vector<16x32xf32>,
    } else {
    }
    %c0 = arith.constant 0 : index
    %c0_1 = arith.constant 0 : index
    %3 = vector.load %arg22[%c0, %c0_1] : memref<16x32xf32, #tpu.memory_space<vmem>>, vector<16x32xf32>
    %4 = arith.truncf %3 : vector<16x32xf32> to vector<16x32xbf16>
    %c0_2 = arith.constant 0 : index
    %c0_3 = arith.constant 0 : index
    %c0_4 = arith.constant 0 : index
    %5 = vector.load %arg5[%c0_2, %c0_3, %c0_4] : memref<1x32x96xbf16, #tpu.memory_space<vmem>>, vector<1x32x96xbf16>
    %6 = vector.shape_cast %5 : vector<1x32x96xbf16> to vector<32x96xbf16>
    %cst = arith.constant dense<0.000000e+00> : vector<16x96xf32>
    %7 = tpu.matmul %4, %6, %cst {dimension_numbers = #tpu.dot_dimension_numbers<[1], [0], [0], [1], [0, 0, 1, 1], [], []>} : vector<16x32xbf16>, vector<32x96xbf16>, vector<16x96xf32> -> vector<16x96xf32>
    %c0_5 = arith.constant 0 : index
    %c0_6 = arith.constant 0 : index
    %c0_7 = arith.constant 0 : index
    %8 = vector.load %arg6[%c0_5, %c0_6, %c0_7] : memref<1x1x96xf32, #tpu.memory_space<vmem>>, vector<1x1x96xf32>
    %9 = vector.shape_cast %8 : vector<1x1x96xf32> to vector<1x96xf32>
    %10 = vector.broadcast %9 : vector<1x96xf32> to vector<16x96xf32>
    %11 = arith.addf %7, %10 : vector<16x96xf32>
    %12 = vector.shape_cast %11 : vector<16x96xf32> to vector<2x8x96xf32>
    %c0_8 = arith.constant 0 : index
    %c0_9 = arith.constant 0 : index
    %c0_10 = arith.constant 0 : index
    %13 = vector.load %arg2[%c0_8, %c0_9, %c0_10] : memref<2x1x8xf32, #tpu.memory_space<vmem>>, vector<2x1x8xf32>
    %14 = vector.shape_cast %13 : vector<2x1x8xf32> to vector<2x1x8xf32>
    %15 = vector.broadcast %14 : vector<2x1x8xf32> to vector<2x8x8xf32>
    %c0_11 = arith.constant 0 : index
    %c0_12 = arith.constant 0 : index
    %c0_13 = arith.constant 0 : index
    %16 = vector.load %arg7[%c0_11, %c0_12, %c0_13] : memref<1x32x32xbf16, #tpu.memory_space<vmem>>, vector<1x32x32xbf16>
    %17 = vector.shape_cast %16 : vector<1x32x32xbf16> to vector<32x32xbf16>
    %18 = vector.extract_strided_slice %12 {offsets = [0, 0, 0], sizes = [2, 8, 8], strides = [1, 1, 1]} : vector<2x8x96xf32> to vector<2x8x8xf32>
    %19 = arith.truncf %18 : vector<2x8x8xf32> to vector<2x8x8xbf16>
    %20 = vector.extract_strided_slice %12 {offsets = [0, 0, 32], sizes = [2, 8, 8], strides = [1, 1, 1]} : vector<2x8x96xf32> to vector<2x8x8xf32>
    %21 = arith.truncf %20 : vector<2x8x8xf32> to vector<2x8x8xbf16>
    %22 = vector.extract_strided_slice %12 {offsets = [0, 0, 64], sizes = [2, 8, 8], strides = [1, 1, 1]} : vector<2x8x96xf32> to vector<2x8x8xf32>
    %23 = arith.truncf %22 : vector<2x8x8xf32> to vector<2x8x8xbf16>
    "tpu.trace_start"() <{level = 10 : i32, message = "bqd,bkd->bqk"}> : () -> ()
    %cst_14 = arith.constant dense<0.000000e+00> : vector<2x8x8xf32>
    %24 = tpu.matmul %19, %21, %cst_14 {dimension_numbers = #tpu.dot_dimension_numbers<[2], [2], [1], [1], [0, 0, 0, 1, 1, 1], [0], [0]>} : vector<2x8x8xbf16>, vector<2x8x8xbf16>, vector<2x8x8xf32> -> vector<2x8x8xf32>
    "tpu.trace_stop"() : () -> ()
    %cst_15 = arith.constant 0.353553385 : f32
    %25 = vector.broadcast %cst_15 : f32 to vector<2x8x8xf32>
    %26 = arith.mulf %24, %25 : vector<2x8x8xf32>
    %27 = arith.addf %26, %15 : vector<2x8x8xf32>
    %cst_16 = arith.constant dense<0xFF800000> : vector<2x8xf32>
    %28 = vector.multi_reduction <maximumf>, %27, %cst_16 [2] : vector<2x8x8xf32> to vector<2x8xf32>
    %29 = vector.shape_cast %28 : vector<2x8xf32> to vector<2x8x1xf32>
    %30 = vector.broadcast %29 : vector<2x8x1xf32> to vector<2x8x8xf32>
    %31 = arith.subf %27, %30 : vector<2x8x8xf32>
    %32 = math.exp %31 : vector<2x8x8xf32>
    %cst_17 = arith.constant dense<0.000000e+00> : vector<2x8xf32>
    %33 = vector.multi_reduction <add>, %32, %cst_17 [2] : vector<2x8x8xf32> to vector<2x8xf32>
    %34 = vector.shape_cast %33 : vector<2x8xf32> to vector<2x8x1xf32>
    %35 = tpu.reciprocal %34 {approx = true} : vector<2x8x1xf32> -> vector<2x8x1xf32>
    %36 = vector.broadcast %35 : vector<2x8x1xf32> to vector<2x8x8xf32>
    %37 = arith.mulf %32, %36 : vector<2x8x8xf32>
    %38 = arith.truncf %37 : vector<2x8x8xf32> to vector<2x8x8xbf16>
    "tpu.trace_start"() <{level = 10 : i32, message = "bqk,bkd->bqd"}> : () -> ()
    %cst_18 = arith.constant dense<0.000000e+00> : vector<2x8x8xf32>
    %39 = tpu.matmul %38, %23, %cst_18 {dimension_numbers = #tpu.dot_dimension_numbers<[2], [1], [1], [2], [0, 0, 0, 1, 1, 2], [0], [0]>} : vector<2x8x8xbf16>, vector<2x8x8xbf16>, vector<2x8x8xf32> -> vector<2x8x8xf32>
    "tpu.trace_stop"() : () -> ()
    %40 = vector.shape_cast %39 : vector<2x8x8xf32> to vector<16x8xf32>
    %41 = arith.truncf %40 : vector<16x8xf32> to vector<16x8xbf16>
    %42 = vector.extract_strided_slice %17 {offsets = [0, 0], sizes = [8, 32], strides = [1, 1]} : vector<32x32xbf16> to vector<8x32xbf16>
    %cst_19 = arith.constant dense<0.000000e+00> : vector<16x32xf32>
    %43 = tpu.matmul %41, %42, %cst_19 {dimension_numbers = #tpu.dot_dimension_numbers<[1], [0], [0], [1], [0, 0, 1, 1], [], []>} : vector<16x8xbf16>, vector<8x32xbf16>, vector<16x32xf32> -> vector<16x32xf32>
    %44 = vector.extract_strided_slice %12 {offsets = [0, 0, 8], sizes = [2, 8, 8], strides = [1, 1, 1]} : vector<2x8x96xf32> to vector<2x8x8xf32>
    %45 = arith.truncf %44 : vector<2x8x8xf32> to vector<2x8x8xbf16>
    %46 = vector.extract_strided_slice %12 {offsets = [0, 0, 40], sizes = [2, 8, 8], strides = [1, 1, 1]} : vector<2x8x96xf32> to vector<2x8x8xf32>
    %47 = arith.truncf %46 : vector<2x8x8xf32> to vector<2x8x8xbf16>
    %48 = vector.extract_strided_slice %12 {offsets = [0, 0, 72], sizes = [2, 8, 8], strides = [1, 1, 1]} : vector<2x8x96xf32> to vector<2x8x8xf32>
    %49 = arith.truncf %48 : vector<2x8x8xf32> to vector<2x8x8xbf16>
    "tpu.trace_start"() <{level = 10 : i32, message = "bqd,bkd->bqk"}> : () -> ()
    %cst_20 = arith.constant dense<0.000000e+00> : vector<2x8x8xf32>
    %50 = tpu.matmul %45, %47, %cst_20 {dimension_numbers = #tpu.dot_dimension_numbers<[2], [2], [1], [1], [0, 0, 0, 1, 1, 1], [0], [0]>} : vector<2x8x8xbf16>, vector<2x8x8xbf16>, vector<2x8x8xf32> -> vector<2x8x8xf32>
    "tpu.trace_stop"() : () -> ()
    %cst_21 = arith.constant 0.353553385 : f32
    %51 = vector.broadcast %cst_21 : f32 to vector<2x8x8xf32>
    %52 = arith.mulf %50, %51 : vector<2x8x8xf32>
    %53 = arith.addf %52, %15 : vector<2x8x8xf32>
    %cst_22 = arith.constant dense<0xFF800000> : vector<2x8xf32>
    %54 = vector.multi_reduction <maximumf>, %53, %cst_22 [2] : vector<2x8x8xf32> to vector<2x8xf32>
    %55 = vector.shape_cast %54 : vector<2x8xf32> to vector<2x8x1xf32>
    %56 = vector.broadcast %55 : vector<2x8x1xf32> to vector<2x8x8xf32>
    %57 = arith.subf %53, %56 : vector<2x8x8xf32>
    %58 = math.exp %57 : vector<2x8x8xf32>
    %cst_23 = arith.constant dense<0.000000e+00> : vector<2x8xf32>
    %59 = vector.multi_reduction <add>, %58, %cst_23 [2] : vector<2x8x8xf32> to vector<2x8xf32>
    %60 = vector.shape_cast %59 : vector<2x8xf32> to vector<2x8x1xf32>
    %61 = tpu.reciprocal %60 {approx = true} : vector<2x8x1xf32> -> vector<2x8x1xf32>
    %62 = vector.broadcast %61 : vector<2x8x1xf32> to vector<2x8x8xf32>
    %63 = arith.mulf %58, %62 : vector<2x8x8xf32>
    %64 = arith.truncf %63 : vector<2x8x8xf32> to vector<2x8x8xbf16>
    "tpu.trace_start"() <{level = 10 : i32, message = "bqk,bkd->bqd"}> : () -> ()
    %cst_24 = arith.constant dense<0.000000e+00> : vector<2x8x8xf32>
    %65 = tpu.matmul %64, %49, %cst_24 {dimension_numbers = #tpu.dot_dimension_numbers<[2], [1], [1], [2], [0, 0, 0, 1, 1, 2], [0], [0]>} : vector<2x8x8xbf16>, vector<2x8x8xbf16>, vector<2x8x8xf32> -> vector<2x8x8xf32>
    "tpu.trace_stop"() : () -> ()
    %66 = vector.shape_cast %65 : vector<2x8x8xf32> to vector<16x8xf32>
    %67 = arith.truncf %66 : vector<16x8xf32> to vector<16x8xbf16>
    %68 = vector.extract_strided_slice %17 {offsets = [8, 0], sizes = [8, 32], strides = [1, 1]} : vector<32x32xbf16> to vector<8x32xbf16>
    %cst_25 = arith.constant dense<0.000000e+00> : vector<16x32xf32>
    %69 = tpu.matmul %67, %68, %cst_25 {dimension_numbers = #tpu.dot_dimension_numbers<[1], [0], [0], [1], [0, 0, 1, 1], [], []>} : vector<16x8xbf16>, vector<8x32xbf16>, vector<16x32xf32> -> vector<16x32xf32>
    %70 = arith.addf %43, %69 : vector<16x32xf32>
    %71 = vector.extract_strided_slice %12 {offsets = [0, 0, 16], sizes = [2, 8, 8], strides = [1, 1, 1]} : vector<2x8x96xf32> to vector<2x8x8xf32>
    %72 = arith.truncf %71 : vector<2x8x8xf32> to vector<2x8x8xbf16>
    %73 = vector.extract_strided_slice %12 {offsets = [0, 0, 48], sizes = [2, 8, 8], strides = [1, 1, 1]} : vector<2x8x96xf32> to vector<2x8x8xf32>
    %74 = arith.truncf %73 : vector<2x8x8xf32> to vector<2x8x8xbf16>
    %75 = vector.extract_strided_slice %12 {offsets = [0, 0, 80], sizes = [2, 8, 8], strides = [1, 1, 1]} : vector<2x8x96xf32> to vector<2x8x8xf32>
    %76 = arith.truncf %75 : vector<2x8x8xf32> to vector<2x8x8xbf16>
    "tpu.trace_start"() <{level = 10 : i32, message = "bqd,bkd->bqk"}> : () -> ()
    %cst_26 = arith.constant dense<0.000000e+00> : vector<2x8x8xf32>
    %77 = tpu.matmul %72, %74, %cst_26 {dimension_numbers = #tpu.dot_dimension_numbers<[2], [2], [1], [1], [0, 0, 0, 1, 1, 1], [0], [0]>} : vector<2x8x8xbf16>, vector<2x8x8xbf16>, vector<2x8x8xf32> -> vector<2x8x8xf32>
    "tpu.trace_stop"() : () -> ()
    %cst_27 = arith.constant 0.353553385 : f32
    %78 = vector.broadcast %cst_27 : f32 to vector<2x8x8xf32>
    %79 = arith.mulf %77, %78 : vector<2x8x8xf32>
    %80 = arith.addf %79, %15 : vector<2x8x8xf32>
    %cst_28 = arith.constant dense<0xFF800000> : vector<2x8xf32>
    %81 = vector.multi_reduction <maximumf>, %80, %cst_28 [2] : vector<2x8x8xf32> to vector<2x8xf32>
    %82 = vector.shape_cast %81 : vector<2x8xf32> to vector<2x8x1xf32>
    %83 = vector.broadcast %82 : vector<2x8x1xf32> to vector<2x8x8xf32>
    %84 = arith.subf %80, %83 : vector<2x8x8xf32>
    %85 = math.exp %84 : vector<2x8x8xf32>
    %cst_29 = arith.constant dense<0.000000e+00> : vector<2x8xf32>
    %86 = vector.multi_reduction <add>, %85, %cst_29 [2] : vector<2x8x8xf32> to vector<2x8xf32>
    %87 = vector.shape_cast %86 : vector<2x8xf32> to vector<2x8x1xf32>
    %88 = tpu.reciprocal %87 {approx = true} : vector<2x8x1xf32> -> vector<2x8x1xf32>
    %89 = vector.broadcast %88 : vector<2x8x1xf32> to vector<2x8x8xf32>
    %90 = arith.mulf %85, %89 : vector<2x8x8xf32>
    %91 = arith.truncf %90 : vector<2x8x8xf32> to vector<2x8x8xbf16>
    "tpu.trace_start"() <{level = 10 : i32, message = "bqk,bkd->bqd"}> : () -> ()
    %cst_30 = arith.constant dense<0.000000e+00> : vector<2x8x8xf32>
    %92 = tpu.matmul %91, %76, %cst_30 {dimension_numbers = #tpu.dot_dimension_numbers<[2], [1], [1], [2], [0, 0, 0, 1, 1, 2], [0], [0]>} : vector<2x8x8xbf16>, vector<2x8x8xbf16>, vector<2x8x8xf32> -> vector<2x8x8xf32>
    "tpu.trace_stop"() : () -> ()
    %93 = vector.shape_cast %92 : vector<2x8x8xf32> to vector<16x8xf32>
    %94 = arith.truncf %93 : vector<16x8xf32> to vector<16x8xbf16>
    %95 = vector.extract_strided_slice %17 {offsets = [16, 0], sizes = [8, 32], strides = [1, 1]} : vector<32x32xbf16> to vector<8x32xbf16>
    %cst_31 = arith.constant dense<0.000000e+00> : vector<16x32xf32>
    %96 = tpu.matmul %94, %95, %cst_31 {dimension_numbers = #tpu.dot_dimension_numbers<[1], [0], [0], [1], [0, 0, 1, 1], [], []>} : vector<16x8xbf16>, vector<8x32xbf16>, vector<16x32xf32> -> vector<16x32xf32>
    %97 = arith.addf %70, %96 : vector<16x32xf32>
    %98 = vector.extract_strided_slice %12 {offsets = [0, 0, 24], sizes = [2, 8, 8], strides = [1, 1, 1]} : vector<2x8x96xf32> to vector<2x8x8xf32>
    %99 = arith.truncf %98 : vector<2x8x8xf32> to vector<2x8x8xbf16>
    %100 = vector.extract_strided_slice %12 {offsets = [0, 0, 56], sizes = [2, 8, 8], strides = [1, 1, 1]} : vector<2x8x96xf32> to vector<2x8x8xf32>
    %101 = arith.truncf %100 : vector<2x8x8xf32> to vector<2x8x8xbf16>
    %102 = vector.extract_strided_slice %12 {offsets = [0, 0, 88], sizes = [2, 8, 8], strides = [1, 1, 1]} : vector<2x8x96xf32> to vector<2x8x8xf32>
    %103 = arith.truncf %102 : vector<2x8x8xf32> to vector<2x8x8xbf16>
    "tpu.trace_start"() <{level = 10 : i32, message = "bqd,bkd->bqk"}> : () -> ()
    %cst_32 = arith.constant dense<0.000000e+00> : vector<2x8x8xf32>
    %104 = tpu.matmul %99, %101, %cst_32 {dimension_numbers = #tpu.dot_dimension_numbers<[2], [2], [1], [1], [0, 0, 0, 1, 1, 1], [0], [0]>} : vector<2x8x8xbf16>, vector<2x8x8xbf16>, vector<2x8x8xf32> -> vector<2x8x8xf32>
    "tpu.trace_stop"() : () -> ()
    %cst_33 = arith.constant 0.353553385 : f32
    %105 = vector.broadcast %cst_33 : f32 to vector<2x8x8xf32>
    %106 = arith.mulf %104, %105 : vector<2x8x8xf32>
    %107 = arith.addf %106, %15 : vector<2x8x8xf32>
    %cst_34 = arith.constant dense<0xFF800000> : vector<2x8xf32>
    %108 = vector.multi_reduction <maximumf>, %107, %cst_34 [2] : vector<2x8x8xf32> to vector<2x8xf32>
    %109 = vector.shape_cast %108 : vector<2x8xf32> to vector<2x8x1xf32>
    %110 = vector.broadcast %109 : vector<2x8x1xf32> to vector<2x8x8xf32>
    %111 = arith.subf %107, %110 : vector<2x8x8xf32>
    %112 = math.exp %111 : vector<2x8x8xf32>
    %cst_35 = arith.constant dense<0.000000e+00> : vector<2x8xf32>
    %113 = vector.multi_reduction <add>, %112, %cst_35 [2] : vector<2x8x8xf32> to vector<2x8xf32>
    %114 = vector.shape_cast %113 : vector<2x8xf32> to vector<2x8x1xf32>
    %115 = tpu.reciprocal %114 {approx = true} : vector<2x8x1xf32> -> vector<2x8x1xf32>
    %116 = vector.broadcast %115 : vector<2x8x1xf32> to vector<2x8x8xf32>
    %117 = arith.mulf %112, %116 : vector<2x8x8xf32>
    %118 = arith.truncf %117 : vector<2x8x8xf32> to vector<2x8x8xbf16>
    "tpu.trace_start"() <{level = 10 : i32, message = "bqk,bkd->bqd"}> : () -> ()
    %cst_36 = arith.constant dense<0.000000e+00> : vector<2x8x8xf32>
    %119 = tpu.matmul %118, %103, %cst_36 {dimension_numbers = #tpu.dot_dimension_numbers<[2], [1], [1], [2], [0, 0, 0, 1, 1, 2], [0], [0]>} : vector<2x8x8xbf16>, vector<2x8x8xbf16>, vector<2x8x8xf32> -> vector<2x8x8xf32>
    "tpu.trace_stop"() : () -> ()
    %120 = vector.shape_cast %119 : vector<2x8x8xf32> to vector<16x8xf32>
    %121 = arith.truncf %120 : vector<16x8xf32> to vector<16x8xbf16>
    %122 = vector.extract_strided_slice %17 {offsets = [24, 0], sizes = [8, 32], strides = [1, 1]} : vector<32x32xbf16> to vector<8x32xbf16>
    %cst_37 = arith.constant dense<0.000000e+00> : vector<16x32xf32>
    %123 = tpu.matmul %121, %122, %cst_37 {dimension_numbers = #tpu.dot_dimension_numbers<[1], [0], [0], [1], [0, 0, 1, 1], [], []>} : vector<16x8xbf16>, vector<8x32xbf16>, vector<16x32xf32> -> vector<16x32xf32>
    %124 = arith.addf %97, %123 : vector<16x32xf32>
    %c0_38 = arith.constant 0 : index
    %c0_39 = arith.constant 0 : index
    %c0_40 = arith.constant 0 : index
    %125 = vector.load %arg8[%c0_38, %c0_39, %c0_40] : memref<1x1x32xf32, #tpu.memory_space<vmem>>, vector<1x1x32xf32>
    %126 = vector.shape_cast %125 : vector<1x1x32xf32> to vector<1x32xf32>
    %127 = vector.broadcast %126 : vector<1x32xf32> to vector<16x32xf32>
    %128 = arith.addf %124, %127 : vector<16x32xf32>
    %129 = arith.addf %128, %3 : vector<16x32xf32>
    %c0_41 = arith.constant 0 : index
    %c0_42 = arith.constant 0 : index
    %c0_43 = arith.constant 0 : index
    %130 = vector.load %arg9[%c0_41, %c0_42, %c0_43] : memref<1x1x32xf32, #tpu.memory_space<vmem>>, vector<1x1x32xf32>
    %131 = vector.shape_cast %130 : vector<1x1x32xf32> to vector<1x32xf32>
    %c0_44 = arith.constant 0 : index
    %c0_45 = arith.constant 0 : index
    %c0_46 = arith.constant 0 : index
    %132 = vector.load %arg10[%c0_44, %c0_45, %c0_46] : memref<1x1x32xf32, #tpu.memory_space<vmem>>, vector<1x1x32xf32>
    %133 = vector.shape_cast %132 : vector<1x1x32xf32> to vector<1x32xf32>
    %cst_47 = arith.constant dense<0.000000e+00> : vector<16xf32>
    %134 = vector.multi_reduction <add>, %129, %cst_47 [1] : vector<16x32xf32> to vector<16xf32>
    %135 = vector.shape_cast %134 : vector<16xf32> to vector<16x1xf32>
    %cst_48 = arith.constant 3.200000e+01 : f32
    %136 = vector.broadcast %cst_48 : f32 to vector<16x1xf32>
    %137 = arith.divf %135, %136 : vector<16x1xf32>
    %138 = vector.broadcast %137 : vector<16x1xf32> to vector<16x32xf32>
    %139 = arith.subf %129, %138 : vector<16x32xf32>
    %140 = arith.mulf %139, %139 : vector<16x32xf32>
    %cst_49 = arith.constant dense<0.000000e+00> : vector<16xf32>
    %141 = vector.multi_reduction <add>, %140, %cst_49 [1] : vector<16x32xf32> to vector<16xf32>
    %142 = vector.shape_cast %141 : vector<16xf32> to vector<16x1xf32>
    %cst_50 = arith.constant 3.200000e+01 : f32
    %143 = vector.broadcast %cst_50 : f32 to vector<16x1xf32>
    %144 = arith.divf %142, %143 : vector<16x1xf32>
    %145 = vector.broadcast %137 : vector<16x1xf32> to vector<16x32xf32>
    %146 = arith.subf %129, %145 : vector<16x32xf32>
    %cst_51 = arith.constant 9.99999996E-13 : f32
    %147 = vector.broadcast %cst_51 : f32 to vector<16x1xf32>
    %148 = arith.addf %144, %147 : vector<16x1xf32>
    %149 = math.rsqrt %148 : vector<16x1xf32>
    %150 = vector.broadcast %149 : vector<16x1xf32> to vector<16x32xf32>
    %151 = arith.mulf %146, %150 : vector<16x32xf32>
    %152 = vector.broadcast %131 : vector<1x32xf32> to vector<16x32xf32>
    %153 = arith.mulf %151, %152 : vector<16x32xf32>
    %154 = vector.broadcast %133 : vector<1x32xf32> to vector<16x32xf32>
    %155 = arith.addf %153, %154 : vector<16x32xf32>
    %156 = arith.truncf %155 : vector<16x32xf32> to vector<16x32xbf16>
    %c0_52 = arith.constant 0 : index
    %c0_53 = arith.constant 0 : index
    %c0_54 = arith.constant 0 : index
    %157 = vector.load %arg11[%c0_52, %c0_53, %c0_54] : memref<1x32x64xbf16, #tpu.memory_space<vmem>>, vector<1x32x64xbf16>
    %158 = vector.shape_cast %157 : vector<1x32x64xbf16> to vector<32x64xbf16>
    %cst_55 = arith.constant dense<0.000000e+00> : vector<16x64xf32>
    %159 = tpu.matmul %156, %158, %cst_55 {dimension_numbers = #tpu.dot_dimension_numbers<[1], [0], [0], [1], [0, 0, 1, 1], [], []>} : vector<16x32xbf16>, vector<32x64xbf16>, vector<16x64xf32> -> vector<16x64xf32>
    %c0_56 = arith.constant 0 : index
    %c0_57 = arith.constant 0 : index
    %c0_58 = arith.constant 0 : index
    %160 = vector.load %arg12[%c0_56, %c0_57, %c0_58] : memref<1x1x64xf32, #tpu.memory_space<vmem>>, vector<1x1x64xf32>
    %161 = vector.shape_cast %160 : vector<1x1x64xf32> to vector<1x64xf32>
    %162 = vector.broadcast %161 : vector<1x64xf32> to vector<16x64xf32>
    %163 = arith.addf %159, %162 : vector<16x64xf32>
    %164 = arith.mulf %163, %163 : vector<16x64xf32>
    %165 = arith.mulf %163, %164 : vector<16x64xf32>
    %cst_59 = arith.constant 4.471500e-02 : f32
    %166 = vector.broadcast %cst_59 : f32 to vector<16x64xf32>
    %167 = arith.mulf %166, %165 : vector<16x64xf32>
    %168 = arith.addf %163, %167 : vector<16x64xf32>
    %cst_60 = arith.constant 0.797884583 : f32
    %169 = vector.broadcast %cst_60 : f32 to vector<16x64xf32>
    %170 = arith.mulf %169, %168 : vector<16x64xf32>
    %171 = math.tanh %170 : vector<16x64xf32>
    %cst_61 = arith.constant 1.000000e+00 : f32
    %172 = vector.broadcast %cst_61 : f32 to vector<16x64xf32>
    %173 = arith.addf %172, %171 : vector<16x64xf32>
    %cst_62 = arith.constant 5.000000e-01 : f32
    %174 = vector.broadcast %cst_62 : f32 to vector<16x64xf32>
    %175 = arith.mulf %174, %173 : vector<16x64xf32>
    %176 = arith.mulf %163, %175 : vector<16x64xf32>
    %177 = arith.truncf %176 : vector<16x64xf32> to vector<16x64xbf16>
    %c0_63 = arith.constant 0 : index
    %c0_64 = arith.constant 0 : index
    %c0_65 = arith.constant 0 : index
    %178 = vector.load %arg13[%c0_63, %c0_64, %c0_65] : memref<1x64x32xbf16, #tpu.memory_space<vmem>>, vector<1x64x32xbf16>
    %179 = vector.shape_cast %178 : vector<1x64x32xbf16> to vector<64x32xbf16>
    %cst_66 = arith.constant dense<0.000000e+00> : vector<16x32xf32>
    %180 = tpu.matmul %177, %179, %cst_66 {dimension_numbers = #tpu.dot_dimension_numbers<[1], [0], [0], [1], [0, 0, 1, 1], [], []>} : vector<16x64xbf16>, vector<64x32xbf16>, vector<16x32xf32> -> vector<16x32xf32>
    %c0_67 = arith.constant 0 : index
    %c0_68 = arith.constant 0 : index
    %c0_69 = arith.constant 0 : index
    %181 = vector.load %arg14[%c0_67, %c0_68, %c0_69] : memref<1x1x32xf32, #tpu.memory_space<vmem>>, vector<1x1x32xf32>
    %182 = vector.shape_cast %181 : vector<1x1x32xf32> to vector<1x32xf32>
    %183 = vector.broadcast %182 : vector<1x32xf32> to vector<16x32xf32>
    %184 = arith.addf %180, %183 : vector<16x32xf32>
    %185 = arith.addf %184, %155 : vector<16x32xf32>
    %c0_70 = arith.constant 0 : index
    %c0_71 = arith.constant 0 : index
    %c0_72 = arith.constant 0 : index
    %186 = vector.load %arg15[%c0_70, %c0_71, %c0_72] : memref<1x1x32xf32, #tpu.memory_space<vmem>>, vector<1x1x32xf32>
    %187 = vector.shape_cast %186 : vector<1x1x32xf32> to vector<1x32xf32>
    %c0_73 = arith.constant 0 : index
    %c0_74 = arith.constant 0 : index
    %c0_75 = arith.constant 0 : index
    %188 = vector.load %arg16[%c0_73, %c0_74, %c0_75] : memref<1x1x32xf32, #tpu.memory_space<vmem>>, vector<1x1x32xf32>
    %189 = vector.shape_cast %188 : vector<1x1x32xf32> to vector<1x32xf32>
    %cst_76 = arith.constant dense<0.000000e+00> : vector<16xf32>
    %190 = vector.multi_reduction <add>, %185, %cst_76 [1] : vector<16x32xf32> to vector<16xf32>
    %191 = vector.shape_cast %190 : vector<16xf32> to vector<16x1xf32>
    %cst_77 = arith.constant 3.200000e+01 : f32
    %192 = vector.broadcast %cst_77 : f32 to vector<16x1xf32>
    %193 = arith.divf %191, %192 : vector<16x1xf32>
    %194 = vector.broadcast %193 : vector<16x1xf32> to vector<16x32xf32>
    %195 = arith.subf %185, %194 : vector<16x32xf32>
    %196 = arith.mulf %195, %195 : vector<16x32xf32>
    %cst_78 = arith.constant dense<0.000000e+00> : vector<16xf32>
    %197 = vector.multi_reduction <add>, %196, %cst_78 [1] : vector<16x32xf32> to vector<16xf32>
    %198 = vector.shape_cast %197 : vector<16xf32> to vector<16x1xf32>
    %cst_79 = arith.constant 3.200000e+01 : f32
    %199 = vector.broadcast %cst_79 : f32 to vector<16x1xf32>
    %200 = arith.divf %198, %199 : vector<16x1xf32>
    %201 = vector.broadcast %193 : vector<16x1xf32> to vector<16x32xf32>
    %202 = arith.subf %185, %201 : vector<16x32xf32>
    %cst_80 = arith.constant 9.99999996E-13 : f32
    %203 = vector.broadcast %cst_80 : f32 to vector<16x1xf32>
    %204 = arith.addf %200, %203 : vector<16x1xf32>
    %205 = math.rsqrt %204 : vector<16x1xf32>
    %206 = vector.broadcast %205 : vector<16x1xf32> to vector<16x32xf32>
    %207 = arith.mulf %202, %206 : vector<16x32xf32>
    %208 = vector.broadcast %187 : vector<1x32xf32> to vector<16x32xf32>
    %209 = arith.mulf %207, %208 : vector<16x32xf32>
    %210 = vector.broadcast %189 : vector<1x32xf32> to vector<16x32xf32>
    %211 = arith.addf %209, %210 : vector<16x32xf32>
    %c0_81 = arith.constant 0 : index
    %c0_82 = arith.constant 0 : index
    %212 = vector.load %arg22[%c0_81, %c0_82] : memref<16x32xf32, #tpu.memory_space<vmem>>, vector<16x32xf32>
    tpu.vector_store %arg22[%c0_81, %c0_82], %211 {strides = array<i32>} : memref<16x32xf32, #tpu.memory_space<vmem>>, vector<16x32xf32>,
    %c1_i32 = arith.constant 1 : i32
    %213 = arith.cmpi eq, %arg0, %c1_i32 : i32
    %214 = arith.extui %213 : i1 to i32
    %c0_i32_83 = arith.constant 0 : i32
    %215 = arith.cmpi ne, %214, %c0_i32_83 : i32
    scf.if %215 {
      %c0_84 = arith.constant 0 : index
      %c0_85 = arith.constant 0 : index
      %216 = tpu.strided_load %arg22[%c0_84, %c0_85] {strides = array<i32: 8, 1>} : memref<16x32xf32, #tpu.memory_space<vmem>>, vector<2x32xf32>
      %217 = arith.truncf %216 : vector<2x32xf32> to vector<2x32xbf16>
      %c0_86 = arith.constant 0 : index
      %c0_87 = arith.constant 0 : index
      %218 = vector.load %arg17[%c0_86, %c0_87] : memref<32x32xbf16, #tpu.memory_space<vmem>>, vector<32x32xbf16>
      %cst_88 = arith.constant dense<0.000000e+00> : vector<2x32xf32>
      %219 = tpu.matmul %217, %218, %cst_88 {dimension_numbers = #tpu.dot_dimension_numbers<[1], [0], [0], [1], [0, 0, 1, 1], [], []>} : vector<2x32xbf16>, vector<32x32xbf16>, vector<2x32xf32> -> vector<2x32xf32>
      %c0_89 = arith.constant 0 : index
      %c0_90 = arith.constant 0 : index
      %220 = vector.load %arg18[%c0_89, %c0_90] : memref<1x32xf32, #tpu.memory_space<vmem>>, vector<1x32xf32>
      %221 = vector.broadcast %220 : vector<1x32xf32> to vector<2x32xf32>
      %222 = arith.addf %219, %221 : vector<2x32xf32>
      %223 = math.tanh %222 : vector<2x32xf32>
      %224 = arith.truncf %223 : vector<2x32xf32> to vector<2x32xbf16>
      %c0_91 = arith.constant 0 : index
      %c0_92 = arith.constant 0 : index
      %225 = vector.load %arg19[%c0_91, %c0_92] : memref<32x32xbf16, #tpu.memory_space<vmem>>, vector<32x32xbf16>
      %cst_93 = arith.constant dense<0.000000e+00> : vector<2x32xf32>
      %226 = tpu.matmul %224, %225, %cst_93 {dimension_numbers = #tpu.dot_dimension_numbers<[1], [0], [0], [1], [0, 0, 1, 1], [], []>} : vector<2x32xbf16>, vector<32x32xbf16>, vector<2x32xf32> -> vector<2x32xf32>
      %c0_94 = arith.constant 0 : index
      %c0_95 = arith.constant 0 : index
      %227 = vector.load %arg20[%c0_94, %c0_95] : memref<1x32xf32, #tpu.memory_space<vmem>>, vector<1x32xf32>
      %228 = vector.broadcast %227 : vector<1x32xf32> to vector<2x32xf32>
      %229 = arith.addf %226, %228 : vector<2x32xf32>
      %c0_96 = arith.constant 0 : index
      %c0_97 = arith.constant 0 : index
      %230 = vector.load %arg21[%c0_96, %c0_97] : memref<2x32xf32, #tpu.memory_space<vmem>>, vector<2x32xf32>
      tpu.vector_store %arg21[%c0_96, %c0_97], %229 {strides = array<i32>} : memref<2x32xf32, #tpu.memory_space<vmem>>, vector<2x32xf32>,
    } else {
    }
    return
  }
  func.func @transform_0(%arg0: i32) -> (i32, i32) {
    %c0_i32 = arith.constant 0 : i32
    %c0_i32_0 = arith.constant 0 : i32
    %c0_i32_1 = arith.constant 0 : i32
    return %c0_i32, %c0_i32_0 : i32, i32
  }
  func.func @transform_1(%arg0: i32) -> (i32, i32, i32) {
    %c0_i32 = arith.constant 0 : i32
    %c0_i32_0 = arith.constant 0 : i32
    %c0_i32_1 = arith.constant 0 : i32
    %c0_i32_2 = arith.constant 0 : i32
    return %c0_i32, %c0_i32_0, %c0_i32_1 : i32, i32, i32
  }
  func.func @transform_2(%arg0: i32) -> (i32, i32) {
    %c0_i32 = arith.constant 0 : i32
    %c0_i32_0 = arith.constant 0 : i32
    %c0_i32_1 = arith.constant 0 : i32
    return %c0_i32, %c0_i32_0 : i32, i32
  }
  func.func @transform_3(%arg0: i32) -> (i32, i32) {
    %c0_i32 = arith.constant 0 : i32
    %c0_i32_0 = arith.constant 0 : i32
    %c0_i32_1 = arith.constant 0 : i32
    return %c0_i32, %c0_i32_0 : i32, i32
  }
  func.func @transform_4(%arg0: i32) -> (i32, i32, i32) {
    %c0_i32 = arith.constant 0 : i32
    %c0_i32_0 = arith.constant 0 : i32
    %c0_i32_1 = arith.constant 0 : i32
    return %arg0, %c0_i32, %c0_i32_0 : i32, i32, i32
  }
  func.func @transform_5(%arg0: i32) -> (i32, i32, i32) {
    %c0_i32 = arith.constant 0 : i32
    %c0_i32_0 = arith.constant 0 : i32
    %c0_i32_1 = arith.constant 0 : i32
    return %arg0, %c0_i32, %c0_i32_0 : i32, i32, i32
  }
  func.func @transform_6(%arg0: i32) -> (i32, i32, i32) {
    %c0_i32 = arith.constant 0 : i32
    %c0_i32_0 = arith.constant 0 : i32
    %c0_i32_1 = arith.constant 0 : i32
    return %arg0, %c0_i32, %c0_i32_0 : i32, i32, i32
  }
  func.func @transform_7(%arg0: i32) -> (i32, i32, i32) {
    %c0_i32 = arith.constant 0 : i32
    %c0_i32_0 = arith.constant 0 : i32
    %c0_i32_1 = arith.constant 0 : i32
    return %arg0, %c0_i32, %c0_i32_0 : i32, i32, i32
  }
  func.func @transform_8(%arg0: i32) -> (i32, i32, i32) {
    %c0_i32 = arith.constant 0 : i32
    %c0_i32_0 = arith.constant 0 : i32
    %c0_i32_1 = arith.constant 0 : i32
    return %arg0, %c0_i32, %c0_i32_0 : i32, i32, i32
  }
  func.func @transform_9(%arg0: i32) -> (i32, i32, i32) {
    %c0_i32 = arith.constant 0 : i32
    %c0_i32_0 = arith.constant 0 : i32
    %c0_i32_1 = arith.constant 0 : i32
    return %arg0, %c0_i32, %c0_i32_0 : i32, i32, i32
  }
  func.func @transform_10(%arg0: i32) -> (i32, i32, i32) {
    %c0_i32 = arith.constant 0 : i32
    %c0_i32_0 = arith.constant 0 : i32
    %c0_i32_1 = arith.constant 0 : i32
    return %arg0, %c0_i32, %c0_i32_0 : i32, i32, i32
  }
  func.func @transform_11(%arg0: i32) -> (i32, i32, i32) {
    %c0_i32 = arith.constant 0 : i32
    %c0_i32_0 = arith.constant 0 : i32
    %c0_i32_1 = arith.constant 0 : i32
    return %arg0, %c0_i32, %c0_i32_0 : i32, i32, i32
  }
  func.func @transform_12(%arg0: i32) -> (i32, i32, i32) {
    %c0_i32 = arith.constant 0 : i32
    %c0_i32_0 = arith.constant 0 : i32
    %c0_i32_1 = arith.constant 0 : i32
    return %arg0, %c0_i32, %c0_i32_0 : i32, i32, i32
  }
  func.func @transform_13(%arg0: i32) -> (i32, i32, i32) {
    %c0_i32 = arith.constant 0 : i32
    %c0_i32_0 = arith.constant 0 : i32
    %c0_i32_1 = arith.constant 0 : i32
    return %arg0, %c0_i32, %c0_i32_0 : i32, i32, i32
  }
  func.func @transform_14(%arg0: i32) -> (i32, i32, i32) {
    %c0_i32 = arith.constant 0 : i32
    %c0_i32_0 = arith.constant 0 : i32
    %c0_i32_1 = arith.constant 0 : i32
    return %arg0, %c0_i32, %c0_i32_0 : i32, i32, i32
  }
  func.func @transform_15(%arg0: i32) -> (i32, i32, i32) {
    %c0_i32 = arith.constant 0 : i32
    %c0_i32_0 = arith.constant 0 : i32
    %c0_i32_1 = arith.constant 0 : i32
    return %arg0, %c0_i32, %c0_i32_0 : i32, i32, i32
  }
  func.func @transform_16(%arg0: i32) -> (i32, i32) {
    %c0_i32 = arith.constant 0 : i32
    %c0_i32_0 = arith.constant 0 : i32
    %c0_i32_1 = arith.constant 0 : i32
    return %c0_i32, %c0_i32_0 : i32, i32
  }
  func.func @transform_17(%arg0: i32) -> (i32, i32) {
    %c0_i32 = arith.constant 0 : i32
    %c0_i32_0 = arith.constant 0 : i32
    %c0_i32_1 = arith.constant 0 : i32
    return %c0_i32, %c0_i32_0 : i32, i32
  }
  func.func @transform_18(%arg0: i32) -> (i32, i32) {
    %c0_i32 = arith.constant 0 : i32
    %c0_i32_0 = arith.constant 0 : i32
    %c0_i32_1 = arith.constant 0 : i32
    return %c0_i32, %c0_i32_0 : i32, i32
  }
  func.func @transform_19(%arg0: i32) -> (i32, i32) {
    %c0_i32 = arith.constant 0 : i32
    %c0_i32_0 = arith.constant 0 : i32
    %c0_i32_1 = arith.constant 0 : i32
    return %c0_i32, %c0_i32_0 : i32, i32
  }
  func.func @transform_20(%arg0: i32) -> (i32, i32) {
    %c0_i32 = arith.constant 0 : i32
    %c0_i32_0 = arith.constant 0 : i32
    %c0_i32_1 = arith.constant 0 : i32
    return %c0_i32, %c0_i32_0 : i32, i32
  }
}

</mosaic_0001>

<llo_original>
// kernel: bert_text_processor.1
$region0: #{bert_text_processor.1}
  #allocation0 [shape = 'u32[]', space=smem, size = 0x4, offset = 0x4, fixed_abs, tag = 'smem constant byte address 0x4 - core index']
  #allocation1 [shape = 'u32[144,128]{1,0:T(1,128)}', space=vmem, size = 0x12000, scoped, tag = 'internal scratch']
  #allocation2 [shape = 'f32[16,32]{1,0:T(8,128)}', space=vmem, size = 0x2000, scoped, tag = 'scratch operand']
  %s0 = inlined_call_operand.vmem [shape: f32[16,32], index: 0, kind: input, shape index: {}]
  %s1 = inlined_call_operand.vmem [shape: f32[2,1,8], index: 1, kind: input, shape index: {}]
  %s2 = inlined_call_operand.vmem [shape: f32[1,32], index: 2, kind: input, shape index: {}]
  %s3 = inlined_call_operand.vmem [shape: f32[1,32], index: 3, kind: input, shape index: {}, may-alias: {3,17,19}]
  %s4 = inlined_call_operand.vmem [shape: bf16[2,32,96], index: 4, kind: input, shape index: {}]
  %s5 = inlined_call_operand.vmem [shape: f32[2,1,96], index: 5, kind: input, shape index: {}]
  %s6 = inlined_call_operand.vmem [shape: bf16[2,32,32], index: 6, kind: input, shape index: {}]
  %s7 = inlined_call_operand.vmem [shape: f32[2,1,32], index: 7, kind: input, shape index: {}, may-alias: {7,9,13,15}]
  %s8 = inlined_call_operand.vmem [shape: f32[2,1,32], index: 8, kind: input, shape index: {}, may-alias: {8,14}]
  %s9 = inlined_call_operand.vmem [shape: f32[2,1,32], index: 9, kind: input, shape index: {}, may-alias: {7,9,13,15}]
  %s10 = inlined_call_operand.vmem [shape: bf16[2,32,64], index: 10, kind: input, shape index: {}]
  %s11 = inlined_call_operand.vmem [shape: f32[2,1,64], index: 11, kind: input, shape index: {}]
  %s12 = inlined_call_operand.vmem [shape: bf16[2,64,32], index: 12, kind: input, shape index: {}]
  %s13 = inlined_call_operand.vmem [shape: f32[2,1,32], index: 13, kind: input, shape index: {}, may-alias: {7,9,13,15}]
  %s14 = inlined_call_operand.vmem [shape: f32[2,1,32], index: 14, kind: input, shape index: {}, may-alias: {8,14}]
  %s15 = inlined_call_operand.vmem [shape: f32[2,1,32], index: 15, kind: input, shape index: {}, may-alias: {7,9,13,15}]
  %s16 = inlined_call_operand.vmem [shape: bf16[32,32], index: 16, kind: input, shape index: {}]
  %s17 = inlined_call_operand.vmem [shape: f32[1,32], index: 17, kind: input, shape index: {}, may-alias: {3,17,19}]
  %s18 = inlined_call_operand.vmem [shape: bf16[32,32], index: 18, kind: input, shape index: {}]
  %s19 = inlined_call_operand.vmem [shape: f32[1,32], index: 19, kind: input, shape index: {}, may-alias: {3,17,19}]
  %s20 = inlined_call_operand.hbm [shape: f32[2,32], index: 20, kind: output, shape index: {}]
  %s21 = sld [smem:[#allocation0]]
  $region121: #{bert_text_processor.1} parent=0
    _
  %s23 = ssub.s32 1, %s21
  %s24 = scalar_select 0, %s23, %s21
  $region1: #{bert_text_processor.1} parent=0
    #allocation3 [shape = 'u8[1024]{0}', space=vmem, size = 0x400, scoped, tag = 'output window, operand 0, single buffered']
    #allocation4 [shape = 's32[2]{0}', space=sflag, size = 0x8, scoped, tag = 'scoped memory for bert_text_processor.1']
    %25 = vsyncpa [#allocation4], 0
    loop: start=0, step=1, limit=4
    $region2: #{bert_text_processor.1} parent=1 // loop_pre_header
      _
    $region3: #{bert_text_processor.1} parent=1 // loop_header
      %s27 = sphi 0, %s31
      %p28 = scmp.ge.s32.totalorder %s27, 4
      %s35 = sphi 0, %s35
      %s37 = sphi 0, %s35
      %s38 = sphi 0, %s37
      %s52 = sphi 0, %s38
      %s56 = sphi 0, %s56
      %s58 = sphi 0, %s56
      %s59 = sphi 0, %s58
      %s73 = sphi 0, %s59
      %s77 = sphi 0, %s77
      %s79 = sphi 0, %s77
      %s80 = sphi 0, %s79
      %s94 = sphi 0, %s80
      %s98 = sphi 0, %s98
      %s100 = sphi 0, %s98
      %s101 = sphi 0, %s100
      %s115 = sphi 0, %s101
      %s121 = sphi 0, %s123
      %s124 = sphi 0, %s121
      %s125 = sphi 0, %s124
      %s141 = sphi 0, %s125
      %s147 = sphi 0, %s149
      %s150 = sphi 0, %s147
      %s151 = sphi 0, %s150
      %s167 = sphi 0, %s151
      %s173 = sphi 0, %s175
      %s176 = sphi 0, %s173
      %s177 = sphi 0, %s176
      %s193 = sphi 0, %s177
      %s199 = sphi 0, %s201
      %s202 = sphi 0, %s199
      %s203 = sphi 0, %s202
      %s219 = sphi 0, %s203
      %s225 = sphi 0, %s227
      %s228 = sphi 0, %s225
      %s229 = sphi 0, %s228
      %s245 = sphi 0, %s229
      %s251 = sphi 0, %s253
      %s254 = sphi 0, %s251
      %s255 = sphi 0, %s254
      %s271 = sphi 0, %s255
      %s277 = sphi 0, %s279
      %s280 = sphi 0, %s277
      %s281 = sphi 0, %s280
      %s297 = sphi 0, %s281
      %s303 = sphi 0, %s305
      %s306 = sphi 0, %s303
      %s307 = sphi 0, %s306
      %s323 = sphi 0, %s307
      %s329 = sphi 0, %s331
      %s332 = sphi 0, %s329
      %s333 = sphi 0, %s332
      %s349 = sphi 0, %s333
      %s355 = sphi 0, %s357
      %s358 = sphi 0, %s355
      %s359 = sphi 0, %s358
      %s375 = sphi 0, %s359
      %s381 = sphi 0, %s383
      %s384 = sphi 0, %s381
      %s385 = sphi 0, %s384
      %s401 = sphi 0, %s385
      %s407 = sphi 0, %s409
      %s410 = sphi 0, %s407
      %s411 = sphi 0, %s410
      %s427 = sphi 0, %s411
      %s431 = sphi 0, %s431
      %s433 = sphi 0, %s431
      %s434 = sphi 0, %s433
      %s448 = sphi 0, %s434
      %s452 = sphi 0, %s452
      %s454 = sphi 0, %s452
      %s455 = sphi 0, %s454
      %s469 = sphi 0, %s455
      %s473 = sphi 0, %s473
      %s475 = sphi 0, %s473
      %s476 = sphi 0, %s475
      %s490 = sphi 0, %s476
      %s494 = sphi 0, %s494
      %s496 = sphi 0, %s494
      %s497 = sphi 0, %s496
      %s511 = sphi 0, %s497
      %s515 = sphi 0, %s515
      %s517 = sphi 0, %s515
      %s518 = sphi 0, %s517
      %s532 = sphi 0, %s518
    $region4: #{bert_text_processor.1} parent=1 // loop_header_branch
      %30 = sbr.rel (%p28) target = $region8
    $region5: #{bert_text_processor.1} parent=1 // loop_body
      %s32 = ssub.s32 %s27, 1
      %s33 = ssub.s32 %s27, 2
      %s34 = sadd.s32 %s27, 1
      %s36 = sadd.s32 %s35, 1
      %p39 = scmp.eq.s32.totalorder %s27, 1
      %p40 = scmp.ne.s32.totalorder %s35, %s37
      %p41 = scmp.eq.s32.totalorder %s27, 0
      %p42 = por %p40, %p41
      %p43 = scmp.ne.s32.totalorder %s35, %s37
      %p44 = scmp.eq.s32.totalorder %s32, 1
      %p45 = por %p43, %p44
      %p46 = scmp.ne.s32.totalorder %s37, %s38
      %p47 = scmp.eq.s32.totalorder %s32, 0
      %p48 = por %p46, %p47
      %p49 = scmp.ne.s32.totalorder %s37, %s38
      %p50 = scmp.eq.s32.totalorder %s33, 1
      %p51 = por %p49, %p50
      %p53 = scmp.ne.s32.totalorder %s38, %s52
      %p54 = scmp.eq.s32.totalorder %s33, 0
      %p55 = por %p53, %p54
      %s57 = sadd.s32 %s56, 1
      %p60 = scmp.eq.s32.totalorder %s27, 1
      %p61 = scmp.ne.s32.totalorder %s56, %s58
      %p62 = scmp.eq.s32.totalorder %s27, 0
      %p63 = por %p61, %p62
      %p64 = scmp.ne.s32.totalorder %s56, %s58
      %p65 = scmp.eq.s32.totalorder %s32, 1
      %p66 = por %p64, %p65
      %p67 = scmp.ne.s32.totalorder %s58, %s59
      %p68 = scmp.eq.s32.totalorder %s32, 0
      %p69 = por %p67, %p68
      %p70 = scmp.ne.s32.totalorder %s58, %s59
      %p71 = scmp.eq.s32.totalorder %s33, 1
      %p72 = por %p70, %p71
      %p74 = scmp.ne.s32.totalorder %s59, %s73
      %p75 = scmp.eq.s32.totalorder %s33, 0
      %p76 = por %p74, %p75
      %s78 = sadd.s32 %s77, 1
      %p81 = scmp.eq.s32.totalorder %s27, 1
      %p82 = scmp.ne.s32.totalorder %s77, %s79
      %p83 = scmp.eq.s32.totalorder %s27, 0
      %p84 = por %p82, %p83
      %p85 = scmp.ne.s32.totalorder %s77, %s79
      %p86 = scmp.eq.s32.totalorder %s32, 1
      %p87 = por %p85, %p86
      %p88 = scmp.ne.s32.totalorder %s79, %s80
      %p89 = scmp.eq.s32.totalorder %s32, 0
      %p90 = por %p88, %p89
      %p91 = scmp.ne.s32.totalorder %s79, %s80
      %p92 = scmp.eq.s32.totalorder %s33, 1
      %p93 = por %p91, %p92
      %p95 = scmp.ne.s32.totalorder %s80, %s94
      %p96 = scmp.eq.s32.totalorder %s33, 0
      %p97 = por %p95, %p96
      %s99 = sadd.s32 %s98, 1
      %p102 = scmp.eq.s32.totalorder %s27, 1
      %p103 = scmp.ne.s32.totalorder %s98, %s100
      %p104 = scmp.eq.s32.totalorder %s27, 0
      %p105 = por %p103, %p104
      %p106 = scmp.ne.s32.totalorder %s98, %s100
      %p107 = scmp.eq.s32.totalorder %s32, 1
      %p108 = por %p106, %p107
      %p109 = scmp.ne.s32.totalorder %s100, %s101
      %p110 = scmp.eq.s32.totalorder %s32, 0
      %p111 = por %p109, %p110
      %p112 = scmp.ne.s32.totalorder %s100, %s101
      %p113 = scmp.eq.s32.totalorder %s33, 1
      %p114 = por %p112, %p113
      %p116 = scmp.ne.s32.totalorder %s101, %s115
      %p117 = scmp.eq.s32.totalorder %s33, 0
      %p118 = por %p116, %p117
      %s119 = ssub.s32 %s27, %s34
      %p120 = scmp.eq.s32.totalorder %s119, 0
      %s122 = sadd.s32 %s121, 1
      %s123 = scalar_select %p120, %s121, %s122
      %p126 = pneg %p120
      %p127 = scmp.eq.s32.totalorder %s27, 1
      %p128 = por %p126, %p127
      %p129 = scmp.ne.s32.totalorder %s121, %s124
      %p130 = scmp.eq.s32.totalorder %s27, 0
      %p131 = por %p129, %p130
      %p132 = scmp.ne.s32.totalorder %s121, %s124
      %p133 = scmp.eq.s32.totalorder %s32, 1
      %p134 = por %p132, %p133
      %p135 = scmp.ne.s32.totalorder %s124, %s125
      %p136 = scmp.eq.s32.totalorder %s32, 0
      %p137 = por %p135, %p136
      %p138 = scmp.ne.s32.totalorder %s124, %s125
      %p139 = scmp.eq.s32.totalorder %s33, 1
      %p140 = por %p138, %p139
      %p142 = scmp.ne.s32.totalorder %s125, %s141
      %p143 = scmp.eq.s32.totalorder %s33, 0
      %p144 = por %p142, %p143
      %s145 = ssub.s32 %s27, %s34
      %p146 = scmp.eq.s32.totalorder %s145, 0
      %s148 = sadd.s32 %s147, 1
      %s149 = scalar_select %p146, %s147, %s148
      %p152 = pneg %p146
      %p153 = scmp.eq.s32.totalorder %s27, 1
      %p154 = por %p152, %p153
      %p155 = scmp.ne.s32.totalorder %s147, %s150
      %p156 = scmp.eq.s32.totalorder %s27, 0
      %p157 = por %p155, %p156
      %p158 = scmp.ne.s32.totalorder %s147, %s150
      %p159 = scmp.eq.s32.totalorder %s32, 1
      %p160 = por %p158, %p159
      %p161 = scmp.ne.s32.totalorder %s150, %s151
      %p162 = scmp.eq.s32.totalorder %s32, 0
      %p163 = por %p161, %p162
      %p164 = scmp.ne.s32.totalorder %s150, %s151
      %p165 = scmp.eq.s32.totalorder %s33, 1
      %p166 = por %p164, %p165
      %p168 = scmp.ne.s32.totalorder %s151, %s167
      %p169 = scmp.eq.s32.totalorder %s33, 0
      %p170 = por %p168, %p169
      %s171 = ssub.s32 %s27, %s34
      %p172 = scmp.eq.s32.totalorder %s171, 0
      %s174 = sadd.s32 %s173, 1
      %s175 = scalar_select %p172, %s173, %s174
      %p178 = pneg %p172
      %p179 = scmp.eq.s32.totalorder %s27, 1
      %p180 = por %p178, %p179
      %p181 = scmp.ne.s32.totalorder %s173, %s176
      %p182 = scmp.eq.s32.totalorder %s27, 0
      %p183 = por %p181, %p182
      %p184 = scmp.ne.s32.totalorder %s173, %s176
      %p185 = scmp.eq.s32.totalorder %s32, 1
      %p186 = por %p184, %p185
      %p187 = scmp.ne.s32.totalorder %s176, %s177
      %p188 = scmp.eq.s32.totalorder %s32, 0
      %p189 = por %p187, %p188
      %p190 = scmp.ne.s32.totalorder %s176, %s177
      %p191 = scmp.eq.s32.totalorder %s33, 1
      %p192 = por %p190, %p191
      %p194 = scmp.ne.s32.totalorder %s177, %s193
      %p195 = scmp.eq.s32.totalorder %s33, 0
      %p196 = por %p194, %p195
      %s197 = ssub.s32 %s27, %s34
      %p198 = scmp.eq.s32.totalorder %s197, 0
      %s200 = sadd.s32 %s199, 1
      %s201 = scalar_select %p198, %s199, %s200
      %p204 = pneg %p198
      %p205 = scmp.eq.s32.totalorder %s27, 1
      %p206 = por %p204, %p205
      %p207 = scmp.ne.s32.totalorder %s199, %s202
      %p208 = scmp.eq.s32.totalorder %s27, 0
      %p209 = por %p207, %p208
      %p210 = scmp.ne.s32.totalorder %s199, %s202
      %p211 = scmp.eq.s32.totalorder %s32, 1
      %p212 = por %p210, %p211
      %p213 = scmp.ne.s32.totalorder %s202, %s203
      %p214 = scmp.eq.s32.totalorder %s32, 0
      %p215 = por %p213, %p214
      %p216 = scmp.ne.s32.totalorder %s202, %s203
      %p217 = scmp.eq.s32.totalorder %s33, 1
      %p218 = por %p216, %p217
      %p220 = scmp.ne.s32.totalorder %s203, %s219
      %p221 = scmp.eq.s32.totalorder %s33, 0
      %p222 = por %p220, %p221
      %s223 = ssub.s32 %s27, %s34
      %p224 = scmp.eq.s32.totalorder %s223, 0
      %s226 = sadd.s32 %s225, 1
      %s227 = scalar_select %p224, %s225, %s226
      %p230 = pneg %p224
      %p231 = scmp.eq.s32.totalorder %s27, 1
      %p232 = por %p230, %p231
      %p233 = scmp.ne.s32.totalorder %s225, %s228
      %p234 = scmp.eq.s32.totalorder %s27, 0
      %p235 = por %p233, %p234
      %p236 = scmp.ne.s32.totalorder %s225, %s228
      %p237 = scmp.eq.s32.totalorder %s32, 1
      %p238 = por %p236, %p237
      %p239 = scmp.ne.s32.totalorder %s228, %s229
      %p240 = scmp.eq.s32.totalorder %s32, 0
      %p241 = por %p239, %p240
      %p242 = scmp.ne.s32.totalorder %s228, %s229
      %p243 = scmp.eq.s32.totalorder %s33, 1
      %p244 = por %p242, %p243
      %p246 = scmp.ne.s32.totalorder %s229, %s245
      %p247 = scmp.eq.s32.totalorder %s33, 0
      %p248 = por %p246, %p247
      %s249 = ssub.s32 %s27, %s34
      %p250 = scmp.eq.s32.totalorder %s249, 0
      %s252 = sadd.s32 %s251, 1
      %s253 = scalar_select %p250, %s251, %s252
      %p256 = pneg %p250
      %p257 = scmp.eq.s32.totalorder %s27, 1
      %p258 = por %p256, %p257
      %p259 = scmp.ne.s32.totalorder %s251, %s254
      %p260 = scmp.eq.s32.totalorder %s27, 0
      %p261 = por %p259, %p260
      %p262 = scmp.ne.s32.totalorder %s251, %s254
      %p263 = scmp.eq.s32.totalorder %s32, 1
      %p264 = por %p262, %p263
      %p265 = scmp.ne.s32.totalorder %s254, %s255
      %p266 = scmp.eq.s32.totalorder %s32, 0
      %p267 = por %p265, %p266
      %p268 = scmp.ne.s32.totalorder %s254, %s255
      %p269 = scmp.eq.s32.totalorder %s33, 1
      %p270 = por %p268, %p269
      %p272 = scmp.ne.s32.totalorder %s255, %s271
      %p273 = scmp.eq.s32.totalorder %s33, 0
      %p274 = por %p272, %p273
      %s275 = ssub.s32 %s27, %s34
      %p276 = scmp.eq.s32.totalorder %s275, 0
      %s278 = sadd.s32 %s277, 1
      %s279 = scalar_select %p276, %s277, %s278
      %p282 = pneg %p276
      %p283 = scmp.eq.s32.totalorder %s27, 1
      %p284 = por %p282, %p283
      %p285 = scmp.ne.s32.totalorder %s277, %s280
      %p286 = scmp.eq.s32.totalorder %s27, 0
      %p287 = por %p285, %p286
      %p288 = scmp.ne.s32.totalorder %s277, %s280
      %p289 = scmp.eq.s32.totalorder %s32, 1
      %p290 = por %p288, %p289
      %p291 = scmp.ne.s32.totalorder %s280, %s281
      %p292 = scmp.eq.s32.totalorder %s32, 0
      %p293 = por %p291, %p292
      %p294 = scmp.ne.s32.totalorder %s280, %s281
      %p295 = scmp.eq.s32.totalorder %s33, 1
      %p296 = por %p294, %p295
      %p298 = scmp.ne.s32.totalorder %s281, %s297
      %p299 = scmp.eq.s32.totalorder %s33, 0
      %p300 = por %p298, %p299
      %s301 = ssub.s32 %s27, %s34
      %p302 = scmp.eq.s32.totalorder %s301, 0
      %s304 = sadd.s32 %s303, 1
      %s305 = scalar_select %p302, %s303, %s304
      %p308 = pneg %p302
      %p309 = scmp.eq.s32.totalorder %s27, 1
      %p310 = por %p308, %p309
      %p311 = scmp.ne.s32.totalorder %s303, %s306
      %p312 = scmp.eq.s32.totalorder %s27, 0
      %p313 = por %p311, %p312
      %p314 = scmp.ne.s32.totalorder %s303, %s306
      %p315 = scmp.eq.s32.totalorder %s32, 1
      %p316 = por %p314, %p315
      %p317 = scmp.ne.s32.totalorder %s306, %s307
      %p318 = scmp.eq.s32.totalorder %s32, 0
      %p319 = por %p317, %p318
      %p320 = scmp.ne.s32.totalorder %s306, %s307
      %p321 = scmp.eq.s32.totalorder %s33, 1
      %p322 = por %p320, %p321
      %p324 = scmp.ne.s32.totalorder %s307, %s323
      %p325 = scmp.eq.s32.totalorder %s33, 0
      %p326 = por %p324, %p325
      %s327 = ssub.s32 %s27, %s34
      %p328 = scmp.eq.s32.totalorder %s327, 0
      %s330 = sadd.s32 %s329, 1
      %s331 = scalar_select %p328, %s329, %s330
      %p334 = pneg %p328
      %p335 = scmp.eq.s32.totalorder %s27, 1
      %p336 = por %p334, %p335
      %p337 = scmp.ne.s32.totalorder %s329, %s332
      %p338 = scmp.eq.s32.totalorder %s27, 0
      %p339 = por %p337, %p338
      %p340 = scmp.ne.s32.totalorder %s329, %s332
      %p341 = scmp.eq.s32.totalorder %s32, 1
      %p342 = por %p340, %p341
      %p343 = scmp.ne.s32.totalorder %s332, %s333
      %p344 = scmp.eq.s32.totalorder %s32, 0
      %p345 = por %p343, %p344
      %p346 = scmp.ne.s32.totalorder %s332, %s333
      %p347 = scmp.eq.s32.totalorder %s33, 1
      %p348 = por %p346, %p347
      %p350 = scmp.ne.s32.totalorder %s333, %s349
      %p351 = scmp.eq.s32.totalorder %s33, 0
      %p352 = por %p350, %p351
      %s353 = ssub.s32 %s27, %s34
      %p354 = scmp.eq.s32.totalorder %s353, 0
      %s356 = sadd.s32 %s355, 1
      %s357 = scalar_select %p354, %s355, %s356
      %p360 = pneg %p354
      %p361 = scmp.eq.s32.totalorder %s27, 1
      %p362 = por %p360, %p361
      %p363 = scmp.ne.s32.totalorder %s355, %s358
      %p364 = scmp.eq.s32.totalorder %s27, 0
      %p365 = por %p363, %p364
      %p366 = scmp.ne.s32.totalorder %s355, %s358
      %p367 = scmp.eq.s32.totalorder %s32, 1
      %p368 = por %p366, %p367
      %p369 = scmp.ne.s32.totalorder %s358, %s359
      %p370 = scmp.eq.s32.totalorder %s32, 0
      %p371 = por %p369, %p370
      %p372 = scmp.ne.s32.totalorder %s358, %s359
      %p373 = scmp.eq.s32.totalorder %s33, 1
      %p374 = por %p372, %p373
      %p376 = scmp.ne.s32.totalorder %s359, %s375
      %p377 = scmp.eq.s32.totalorder %s33, 0
      %p378 = por %p376, %p377
      %s379 = ssub.s32 %s27, %s34
      %p380 = scmp.eq.s32.totalorder %s379, 0
      %s382 = sadd.s32 %s381, 1
      %s383 = scalar_select %p380, %s381, %s382
      %p386 = pneg %p380
      %p387 = scmp.eq.s32.totalorder %s27, 1
      %p388 = por %p386, %p387
      %p389 = scmp.ne.s32.totalorder %s381, %s384
      %p390 = scmp.eq.s32.totalorder %s27, 0
      %p391 = por %p389, %p390
      %p392 = scmp.ne.s32.totalorder %s381, %s384
      %p393 = scmp.eq.s32.totalorder %s32, 1
      %p394 = por %p392, %p393
      %p395 = scmp.ne.s32.totalorder %s384, %s385
      %p396 = scmp.eq.s32.totalorder %s32, 0
      %p397 = por %p395, %p396
      %p398 = scmp.ne.s32.totalorder %s384, %s385
      %p399 = scmp.eq.s32.totalorder %s33, 1
      %p400 = por %p398, %p399
      %p402 = scmp.ne.s32.totalorder %s385, %s401
      %p403 = scmp.eq.s32.totalorder %s33, 0
      %p404 = por %p402, %p403
      %s405 = ssub.s32 %s27, %s34
      %p406 = scmp.eq.s32.totalorder %s405, 0
      %s408 = sadd.s32 %s407, 1
      %s409 = scalar_select %p406, %s407, %s408
      %p412 = pneg %p406
      %p413 = scmp.eq.s32.totalorder %s27, 1
      %p414 = por %p412, %p413
      %p415 = scmp.ne.s32.totalorder %s407, %s410
      %p416 = scmp.eq.s32.totalorder %s27, 0
      %p417 = por %p415, %p416
      %p418 = scmp.ne.s32.totalorder %s407, %s410
      %p419 = scmp.eq.s32.totalorder %s32, 1
      %p420 = por %p418, %p419
      %p421 = scmp.ne.s32.totalorder %s410, %s411
      %p422 = scmp.eq.s32.totalorder %s32, 0
      %p423 = por %p421, %p422
      %p424 = scmp.ne.s32.totalorder %s410, %s411
      %p425 = scmp.eq.s32.totalorder %s33, 1
      %p426 = por %p424, %p425
      %p428 = scmp.ne.s32.totalorder %s411, %s427
      %p429 = scmp.eq.s32.totalorder %s33, 0
      %p430 = por %p428, %p429
      %s432 = sadd.s32 %s431, 1
      %p435 = scmp.eq.s32.totalorder %s27, 1
      %p436 = scmp.ne.s32.totalorder %s431, %s433
      %p437 = scmp.eq.s32.totalorder %s27, 0
      %p438 = por %p436, %p437
      %p439 = scmp.ne.s32.totalorder %s431, %s433
      %p440 = scmp.eq.s32.totalorder %s32, 1
      %p441 = por %p439, %p440
      %p442 = scmp.ne.s32.totalorder %s433, %s434
      %p443 = scmp.eq.s32.totalorder %s32, 0
      %p444 = por %p442, %p443
      %p445 = scmp.ne.s32.totalorder %s433, %s434
      %p446 = scmp.eq.s32.totalorder %s33, 1
      %p447 = por %p445, %p446
      %p449 = scmp.ne.s32.totalorder %s434, %s448
      %p450 = scmp.eq.s32.totalorder %s33, 0
      %p451 = por %p449, %p450
      %s453 = sadd.s32 %s452, 1
      %p456 = scmp.eq.s32.totalorder %s27, 1
      %p457 = scmp.ne.s32.totalorder %s452, %s454
      %p458 = scmp.eq.s32.totalorder %s27, 0
      %p459 = por %p457, %p458
      %p460 = scmp.ne.s32.totalorder %s452, %s454
      %p461 = scmp.eq.s32.totalorder %s32, 1
      %p462 = por %p460, %p461
      %p463 = scmp.ne.s32.totalorder %s454, %s455
      %p464 = scmp.eq.s32.totalorder %s32, 0
      %p465 = por %p463, %p464
      %p466 = scmp.ne.s32.totalorder %s454, %s455
      %p467 = scmp.eq.s32.totalorder %s33, 1
      %p468 = por %p466, %p467
      %p470 = scmp.ne.s32.totalorder %s455, %s469
      %p471 = scmp.eq.s32.totalorder %s33, 0
      %p472 = por %p470, %p471
      %s474 = sadd.s32 %s473, 1
      %p477 = scmp.eq.s32.totalorder %s27, 1
      %p478 = scmp.ne.s32.totalorder %s473, %s475
      %p479 = scmp.eq.s32.totalorder %s27, 0
      %p480 = por %p478, %p479
      %p481 = scmp.ne.s32.totalorder %s473, %s475
      %p482 = scmp.eq.s32.totalorder %s32, 1
      %p483 = por %p481, %p482
      %p484 = scmp.ne.s32.totalorder %s475, %s476
      %p485 = scmp.eq.s32.totalorder %s32, 0
      %p486 = por %p484, %p485
      %p487 = scmp.ne.s32.totalorder %s475, %s476
      %p488 = scmp.eq.s32.totalorder %s33, 1
      %p489 = por %p487, %p488
      %p491 = scmp.ne.s32.totalorder %s476, %s490
      %p492 = scmp.eq.s32.totalorder %s33, 0
      %p493 = por %p491, %p492
      %s495 = sadd.s32 %s494, 1
      %p498 = scmp.eq.s32.totalorder %s27, 1
      %p499 = scmp.ne.s32.totalorder %s494, %s496
      %p500 = scmp.eq.s32.totalorder %s27, 0
      %p501 = por %p499, %p500
      %p502 = scmp.ne.s32.totalorder %s494, %s496
      %p503 = scmp.eq.s32.totalorder %s32, 1
      %p504 = por %p502, %p503
      %p505 = scmp.ne.s32.totalorder %s496, %s497
      %p506 = scmp.eq.s32.totalorder %s32, 0
      %p507 = por %p505, %p506
      %p508 = scmp.ne.s32.totalorder %s496, %s497
      %p509 = scmp.eq.s32.totalorder %s33, 1
      %p510 = por %p508, %p509
      %p512 = scmp.ne.s32.totalorder %s497, %s511
      %p513 = scmp.eq.s32.totalorder %s33, 0
      %p514 = por %p512, %p513
      %s516 = sadd.s32 %s515, 1
      %p519 = scmp.eq.s32.totalorder %s27, 1
      %p520 = scmp.ne.s32.totalorder %s515, %s517
      %p521 = scmp.eq.s32.totalorder %s27, 0
      %p522 = por %p520, %p521
      %p523 = scmp.ne.s32.totalorder %s515, %s517
      %p524 = scmp.eq.s32.totalorder %s32, 1
      %p525 = por %p523, %p524
      %p526 = scmp.ne.s32.totalorder %s517, %s518
      %p527 = scmp.eq.s32.totalorder %s32, 0
      %p528 = por %p526, %p527
      %p529 = scmp.ne.s32.totalorder %s517, %s518
      %p530 = scmp.eq.s32.totalorder %s33, 1
      %p531 = por %p529, %p530
      %p533 = scmp.ne.s32.totalorder %s518, %s532
      %p534 = scmp.eq.s32.totalorder %s33, 0
      %p535 = por %p533, %p534
      %p536 = scmp.le.s32.totalorder 1, %s27
      %p537 = scmp.lt.s32.totalorder %s27, 3
      %p538 = pnand %p536, %p537
      %p539 = pneg %p538
      // Predicated region
      $region9: #{bert_text_processor.1} parent=5 // pred_check
        _
      $region10: #{bert_text_processor.1} parent=5 // pred_check_branch
        %541 = sbr.rel (%p538) target = $region12
      $region11: #{bert_text_processor.1} parent=5 // pred_region
        %s542 = ssub.s32 %s27, 1
        // Predicated region
        $region13: #{bert_text_processor.1} parent=11 // pred_check
          %p543 = pneg %p48
        $region14: #{bert_text_processor.1} parent=11 // pred_check_branch
          %545 = sbr.rel (%p543) target = $region16
        $region15: #{bert_text_processor.1} parent=11 // pred_region
          _
        $region16: #{bert_text_processor.1} parent=11 // pred_fallthru
          _
        // Predicated region
        $region17: #{bert_text_processor.1} parent=11 // pred_check
          %p546 = pneg %p69
        $region18: #{bert_text_processor.1} parent=11 // pred_check_branch
          %548 = sbr.rel (%p546) target = $region20
        $region19: #{bert_text_processor.1} parent=11 // pred_region
          _
        $region20: #{bert_text_processor.1} parent=11 // pred_fallthru
          _
        // Predicated region
        $region21: #{bert_text_processor.1} parent=11 // pred_check
          %p549 = pneg %p90
        $region22: #{bert_text_processor.1} parent=11 // pred_check_branch
          %551 = sbr.rel (%p549) target = $region24
        $region23: #{bert_text_processor.1} parent=11 // pred_region
          _
        $region24: #{bert_text_processor.1} parent=11 // pred_fallthru
          _
        // Predicated region
        $region25: #{bert_text_processor.1} parent=11 // pred_check
          %p552 = pneg %p111
        $region26: #{bert_text_processor.1} parent=11 // pred_check_branch
          %554 = sbr.rel (%p552) target = $region28
        $region27: #{bert_text_processor.1} parent=11 // pred_region
          _
        $region28: #{bert_text_processor.1} parent=11 // pred_fallthru
          _
        // Predicated region
        $region29: #{bert_text_processor.1} parent=11 // pred_check
          %p555 = pneg %p444
        $region30: #{bert_text_processor.1} parent=11 // pred_check_branch
          %557 = sbr.rel (%p555) target = $region32
        $region31: #{bert_text_processor.1} parent=11 // pred_region
          _
        $region32: #{bert_text_processor.1} parent=11 // pred_fallthru
          _
        // Predicated region
        $region33: #{bert_text_processor.1} parent=11 // pred_check
          %p558 = pneg %p465
        $region34: #{bert_text_processor.1} parent=11 // pred_check_branch
          %560 = sbr.rel (%p558) target = $region36
        $region35: #{bert_text_processor.1} parent=11 // pred_region
          _
        $region36: #{bert_text_processor.1} parent=11 // pred_fallthru
          _
        // Predicated region
        $region37: #{bert_text_processor.1} parent=11 // pred_check
          %p561 = pneg %p486
        $region38: #{bert_text_processor.1} parent=11 // pred_check_branch
          %563 = sbr.rel (%p561) target = $region40
        $region39: #{bert_text_processor.1} parent=11 // pred_region
          _
        $region40: #{bert_text_processor.1} parent=11 // pred_fallthru
          _
        // Predicated region
        $region41: #{bert_text_processor.1} parent=11 // pred_check
          %p564 = pneg %p507
        $region42: #{bert_text_processor.1} parent=11 // pred_check_branch
          %566 = sbr.rel (%p564) target = $region44
        $region43: #{bert_text_processor.1} parent=11 // pred_region
          _
        $region44: #{bert_text_processor.1} parent=11 // pred_fallthru
          _
      $region12: #{bert_text_processor.1} parent=5 // pred_fallthru
        _
      %p567 = scmp.lt.s32.totalorder %s27, 2
      // Predicated region
      $region45: #{bert_text_processor.1} parent=5 // pred_check
        %p568 = pneg %p567
      $region46: #{bert_text_processor.1} parent=5 // pred_check_branch
        %570 = sbr.rel (%p568) target = $region48
      $region47: #{bert_text_processor.1} parent=5 // pred_region
        // Predicated region
        $region49: #{bert_text_processor.1} parent=47 // pred_check
          %p571 = pneg %p131
        $region50: #{bert_text_processor.1} parent=47 // pred_check_branch
          %573 = sbr.rel (%p571) target = $region52
        $region51: #{bert_text_processor.1} parent=47 // pred_region
          %p574 = scmp.lt.s32.totalorder %s27, 1
          %s575 = scalar_select %p574, %s27, 1
          %s576 = smul.addr %s575, 4
          %s577 = smul.addr %s576, 4
          %s578 = scalar_lea.vmem %s4, %s577
        $region52: #{bert_text_processor.1} parent=47 // pred_fallthru
          _
        // Predicated region
        $region53: #{bert_text_processor.1} parent=47 // pred_check
          %p579 = pneg %p157
        $region54: #{bert_text_processor.1} parent=47 // pred_check_branch
          %581 = sbr.rel (%p579) target = $region56
        $region55: #{bert_text_processor.1} parent=47 // pred_region
          %p582 = scmp.lt.s32.totalorder %s27, 1
          %s583 = scalar_select %p582, %s27, 1
          %s584 = scalar_lea.vmem %s5, %s583
        $region56: #{bert_text_processor.1} parent=47 // pred_fallthru
          _
        // Predicated region
        $region57: #{bert_text_processor.1} parent=47 // pred_check
          %p585 = pneg %p183
        $region58: #{bert_text_processor.1} parent=47 // pred_check_branch
          %587 = sbr.rel (%p585) target = $region60
        $region59: #{bert_text_processor.1} parent=47 // pred_region
          %p588 = scmp.lt.s32.totalorder %s27, 1
          %s589 = scalar_select %p588, %s27, 1
          %s590 = smul.addr %s589, 4
          %s591 = smul.addr %s590, 4
          %s592 = scalar_lea.vmem %s6, %s591
        $region60: #{bert_text_processor.1} parent=47 // pred_fallthru
          _
        // Predicated region
        $region61: #{bert_text_processor.1} parent=47 // pred_check
          %p593 = pneg %p209
        $region62: #{bert_text_processor.1} parent=47 // pred_check_branch
          %595 = sbr.rel (%p593) target = $region64
        $region63: #{bert_text_processor.1} parent=47 // pred_region
          %p596 = scmp.lt.s32.totalorder %s27, 1
          %s597 = scalar_select %p596, %s27, 1
          %s598 = scalar_lea.vmem %s7, %s597
        $region64: #{bert_text_processor.1} parent=47 // pred_fallthru
          _
        // Predicated region
        $region65: #{bert_text_processor.1} parent=47 // pred_check
          %p599 = pneg %p235
        $region66: #{bert_text_processor.1} parent=47 // pred_check_branch
          %601 = sbr.rel (%p599) target = $region68
        $region67: #{bert_text_processor.1} parent=47 // pred_region
          %p602 = scmp.lt.s32.totalorder %s27, 1
          %s603 = scalar_select %p602, %s27, 1
          %s604 = scalar_lea.vmem %s8, %s603
        $region68: #{bert_text_processor.1} parent=47 // pred_fallthru
          _
        // Predicated region
        $region69: #{bert_text_processor.1} parent=47 // pred_check
          %p605 = pneg %p261
        $region70: #{bert_text_processor.1} parent=47 // pred_check_branch
          %607 = sbr.rel (%p605) target = $region72
        $region71: #{bert_text_processor.1} parent=47 // pred_region
          %p608 = scmp.lt.s32.totalorder %s27, 1
          %s609 = scalar_select %p608, %s27, 1
          %s610 = scalar_lea.vmem %s9, %s609
        $region72: #{bert_text_processor.1} parent=47 // pred_fallthru
          _
        // Predicated region
        $region73: #{bert_text_processor.1} parent=47 // pred_check
          %p611 = pneg %p287
        $region74: #{bert_text_processor.1} parent=47 // pred_check_branch
          %613 = sbr.rel (%p611) target = $region76
        $region75: #{bert_text_processor.1} parent=47 // pred_region
          %p614 = scmp.lt.s32.totalorder %s27, 1
          %s615 = scalar_select %p614, %s27, 1
          %s616 = smul.addr %s615, 4
          %s617 = smul.addr %s616, 4
          %s618 = scalar_lea.vmem %s10, %s617
        $region76: #{bert_text_processor.1} parent=47 // pred_fallthru
          _
        // Predicated region
        $region77: #{bert_text_processor.1} parent=47 // pred_check
          %p619 = pneg %p313
        $region78: #{bert_text_processor.1} parent=47 // pred_check_branch
          %621 = sbr.rel (%p619) target = $region80
        $region79: #{bert_text_processor.1} parent=47 // pred_region
          %p622 = scmp.lt.s32.totalorder %s27, 1
          %s623 = scalar_select %p622, %s27, 1
          %s624 = scalar_lea.vmem %s11, %s623
        $region80: #{bert_text_processor.1} parent=47 // pred_fallthru
          _
        // Predicated region
        $region81: #{bert_text_processor.1} parent=47 // pred_check
          %p625 = pneg %p339
        $region82: #{bert_text_processor.1} parent=47 // pred_check_branch
          %627 = sbr.rel (%p625) target = $region84
        $region83: #{bert_text_processor.1} parent=47 // pred_region
          %p628 = scmp.lt.s32.totalorder %s27, 1
          %s629 = scalar_select %p628, %s27, 1
          %s630 = smul.addr %s629, 8
          %s631 = smul.addr %s630, 4
          %s632 = scalar_lea.vmem %s12, %s631
        $region84: #{bert_text_processor.1} parent=47 // pred_fallthru
          _
        // Predicated region
        $region85: #{bert_text_processor.1} parent=47 // pred_check
          %p633 = pneg %p365
        $region86: #{bert_text_processor.1} parent=47 // pred_check_branch
          %635 = sbr.rel (%p633) target = $region88
        $region87: #{bert_text_processor.1} parent=47 // pred_region
          %p636 = scmp.lt.s32.totalorder %s27, 1
          %s637 = scalar_select %p636, %s27, 1
          %s638 = scalar_lea.vmem %s13, %s637
        $region88: #{bert_text_processor.1} parent=47 // pred_fallthru
          _
        // Predicated region
        $region89: #{bert_text_processor.1} parent=47 // pred_check
          %p639 = pneg %p391
        $region90: #{bert_text_processor.1} parent=47 // pred_check_branch
          %641 = sbr.rel (%p639) target = $region92
        $region91: #{bert_text_processor.1} parent=47 // pred_region
          %p642 = scmp.lt.s32.totalorder %s27, 1
          %s643 = scalar_select %p642, %s27, 1
          %s644 = scalar_lea.vmem %s14, %s643
        $region92: #{bert_text_processor.1} parent=47 // pred_fallthru
          _
        // Predicated region
        $region93: #{bert_text_processor.1} parent=47 // pred_check
          %p645 = pneg %p417
        $region94: #{bert_text_processor.1} parent=47 // pred_check_branch
          %647 = sbr.rel (%p645) target = $region96
        $region95: #{bert_text_processor.1} parent=47 // pred_region
          %p648 = scmp.lt.s32.totalorder %s27, 1
          %s649 = scalar_select %p648, %s27, 1
          %s650 = scalar_lea.vmem %s15, %s649
        $region96: #{bert_text_processor.1} parent=47 // pred_fallthru
          _
      $region48: #{bert_text_processor.1} parent=5 // pred_fallthru
        _
      %p651 = scmp.le.s32.totalorder 1, %s27
      %p652 = scmp.lt.s32.totalorder %s27, 3
      %p653 = pnand %p651, %p652
      %p654 = pneg %p653
      // Predicated region
      $region97: #{bert_text_processor.1} parent=5 // pred_check
        _
      $region98: #{bert_text_processor.1} parent=5 // pred_check_branch
        %656 = sbr.rel (%p653) target = $region100
      $region99: #{bert_text_processor.1} parent=5 // pred_region
        %s657 = ssub.s32 %s27, 1
        %p658 = pneg %p48
        %p659 = pneg %p45
        %p660 = pneg %p69
        %p661 = pneg %p66
        %p662 = pneg %p90
        %p663 = pneg %p87
        %p664 = pneg %p111
        %p665 = pneg %p108
        %p666 = scmp.lt.s32.totalorder %s32, 1
        %s667 = scalar_select %p666, %s32, 1
        %s668 = smul.addr %s667, 4
        %s669 = smul.addr %s668, 4
        %s670 = scalar_lea.vmem %s4, %s669
        %p671 = pneg %p137
        %p672 = pneg %p134
        %p673 = scmp.lt.s32.totalorder %s32, 1
        %s674 = scalar_select %p673, %s32, 1
        %s675 = scalar_lea.vmem %s5, %s674
        %p676 = pneg %p163
        %p677 = pneg %p160
        %p678 = scmp.lt.s32.totalorder %s32, 1
        %s679 = scalar_select %p678, %s32, 1
        %s680 = smul.addr %s679, 4
        %s681 = smul.addr %s680, 4
        %s682 = scalar_lea.vmem %s6, %s681
        %p683 = pneg %p189
        %p684 = pneg %p186
        %p685 = scmp.lt.s32.totalorder %s32, 1
        %s686 = scalar_select %p685, %s32, 1
        %s687 = scalar_lea.vmem %s7, %s686
        %p688 = pneg %p215
        %p689 = pneg %p212
        %p690 = scmp.lt.s32.totalorder %s32, 1
        %s691 = scalar_select %p690, %s32, 1
        %s692 = scalar_lea.vmem %s8, %s691
        %p693 = pneg %p241
        %p694 = pneg %p238
        %p695 = scmp.lt.s32.totalorder %s32, 1
        %s696 = scalar_select %p695, %s32, 1
        %s697 = scalar_lea.vmem %s9, %s696
        %p698 = pneg %p267
        %p699 = pneg %p264
        %p700 = scmp.lt.s32.totalorder %s32, 1
        %s701 = scalar_select %p700, %s32, 1
        %s702 = smul.addr %s701, 4
        %s703 = smul.addr %s702, 4
        %s704 = scalar_lea.vmem %s10, %s703
        %p705 = pneg %p293
        %p706 = pneg %p290
        %p707 = scmp.lt.s32.totalorder %s32, 1
        %s708 = scalar_select %p707, %s32, 1
        %s709 = scalar_lea.vmem %s11, %s708
        %p710 = pneg %p319
        %p711 = pneg %p316
        %p712 = scmp.lt.s32.totalorder %s32, 1
        %s713 = scalar_select %p712, %s32, 1
        %s714 = smul.addr %s713, 8
        %s715 = smul.addr %s714, 4
        %s716 = scalar_lea.vmem %s12, %s715
        %p717 = pneg %p345
        %p718 = pneg %p342
        %p719 = scmp.lt.s32.totalorder %s32, 1
        %s720 = scalar_select %p719, %s32, 1
        %s721 = scalar_lea.vmem %s13, %s720
        %p722 = pneg %p371
        %p723 = pneg %p368
        %p724 = scmp.lt.s32.totalorder %s32, 1
        %s725 = scalar_select %p724, %s32, 1
        %s726 = scalar_lea.vmem %s14, %s725
        %p727 = pneg %p397
        %p728 = pneg %p394
        %p729 = scmp.lt.s32.totalorder %s32, 1
        %s730 = scalar_select %p729, %s32, 1
        %s731 = scalar_lea.vmem %s15, %s730
        %p732 = pneg %p423
        %p733 = pneg %p420
        %p734 = pneg %p444
        %p735 = pneg %p441
        %p736 = pneg %p465
        %p737 = pneg %p462
        %p738 = pneg %p486
        %p739 = pneg %p483
        %p740 = pneg %p507
        %p741 = pneg %p504
        %p742 = pneg %p528
        %p743 = pneg %p525
        %p744 = scmp.lt.s32.totalorder %s32, 1
        %s745 = scalar_select %p744, %s32, 1
        %s746 = smul.addr %s745, 4
        %s747 = smul.addr %s746, 4
        %s748 = scalar_lea.vmem %s4, %s747
        %p749 = scmp.lt.s32.totalorder %s32, 1
        %s750 = scalar_select %p749, %s32, 1
        %s751 = scalar_lea.vmem %s5, %s750
        %p752 = scmp.lt.s32.totalorder %s32, 1
        %s753 = scalar_select %p752, %s32, 1
        %s754 = smul.addr %s753, 4
        %s755 = smul.addr %s754, 4
        %s756 = scalar_lea.vmem %s6, %s755
        %p757 = scmp.lt.s32.totalorder %s32, 1
        %s758 = scalar_select %p757, %s32, 1
        %s759 = scalar_lea.vmem %s7, %s758
        %p760 = scmp.lt.s32.totalorder %s32, 1
        %s761 = scalar_select %p760, %s32, 1
        %s762 = scalar_lea.vmem %s8, %s761
        %p763 = scmp.lt.s32.totalorder %s32, 1
        %s764 = scalar_select %p763, %s32, 1
        %s765 = scalar_lea.vmem %s9, %s764
        %p766 = scmp.lt.s32.totalorder %s32, 1
        %s767 = scalar_select %p766, %s32, 1
        %s768 = smul.addr %s767, 4
        %s769 = smul.addr %s768, 4
        %s770 = scalar_lea.vmem %s10, %s769
        %p771 = scmp.lt.s32.totalorder %s32, 1
        %s772 = scalar_select %p771, %s32, 1
        %s773 = scalar_lea.vmem %s11, %s772
        %p774 = scmp.lt.s32.totalorder %s32, 1
        %s775 = scalar_select %p774, %s32, 1
        %s776 = smul.addr %s775, 8
        %s777 = smul.addr %s776, 4
        %s778 = scalar_lea.vmem %s12, %s777
        %p779 = scmp.lt.s32.totalorder %s32, 1
        %s780 = scalar_select %p779, %s32, 1
        %s781 = scalar_lea.vmem %s13, %s780
        %p782 = scmp.lt.s32.totalorder %s32, 1
        %s783 = scalar_select %p782, %s32, 1
        %s784 = scalar_lea.vmem %s14, %s783
        %p785 = scmp.lt.s32.totalorder %s32, 1
        %s786 = scalar_select %p785, %s32, 1
        %s787 = scalar_lea.vmem %s15, %s786
        %p789 = scmp.eq.s32.totalorder %s32, 0
        // Predicated region
        $region101: #{bert_text_processor.1} parent=99 // pred_check
          %p790 = pneg %p789
        $region102: #{bert_text_processor.1} parent=99 // pred_check_branch
          %792 = sbr.rel (%p790) target = $region104
        $region103: #{bert_text_processor.1} parent=99 // pred_region
          %v793 = vld [vmem:[%s0] sm:$0xff]
          %v794 = vld [vmem:[%s0 + $0x8] sm:$0xff]
          %v795 = vld [vmem:[%s2] sm:$0x1]
          %v796 = vld [vmem:[%s3] sm:$0x1]
          %vm797 = vcmask 261120
          %v798 = vsel %vm797, %v793, 0.0
          %799 = vadd.xlane.f32.xlu0 %v798
          %v800 = vpop.xlane.xlu0 %799
          %v801 = vsel %vm797, %v794, 0.0
          %802 = vadd.xlane.f32.xlu0 %v801
          %v803 = vpop.xlane.xlu0 %802
          %v804 = vrcp.pop 32.0
          %v805 = vmul.f32 %v800, %v804
          %v806 = vmul.f32 %v803, %v804
          %v807 = vsub.f32 %v793, %v805
          %v808 = vsub.f32 %v794, %v806
          %v809 = vmul.f32 %v807, %v807
          %v810 = vmul.f32 %v808, %v808
          %v811 = vsel %vm797, %v809, 0.0
          %812 = vadd.xlane.f32.xlu0 %v811
          %v813 = vpop.xlane.xlu0 %812
          %v814 = vsel %vm797, %v810, 0.0
          %815 = vadd.xlane.f32.xlu0 %v814
          %v816 = vpop.xlane.xlu0 %815
          %v817 = vmul.f32 %v813, %v804
          %v818 = vmul.f32 %v816, %v804
          %v819 = vadd.f32 %v817, 1e-12
          %v820 = vadd.f32 %v818, 1e-12
          %v821 = vrsqrt.pop %v819
          %v822 = vrsqrt.pop %v820
          %v823 = vmul.f32 %v807, %v821
          %v824 = vmul.f32 %v808, %v822
          %v826 = vlaneseq
          %v827 = vshrl.u32 %v826, 7
          %v828 = vsub.s32 0, %v827
          %v829 = vrot.slane %v795, %v828
          %v831 = vmul.f32 %v823, %v829
          %v832 = vmul.f32 %v824, %v829
          %v834 = vlaneseq
          %v835 = vshrl.u32 %v834, 7
          %v836 = vsub.s32 0, %v835
          %v837 = vrot.slane %v796, %v836
          %v839 = vadd.f32 %v831, %v837
          %v840 = vadd.f32 %v832, %v837
          %841 = vst.msk [vmem:[#allocation2] sm:$0xff] %vm797, %v839
          %842 = vst.msk [vmem:[#allocation2 + $0x8] sm:$0xff] %vm797, %v840
        $region104: #{bert_text_processor.1} parent=99 // pred_fallthru
          _
        %v843 = vld [vmem:[#allocation2] sm:$0xff]
        %v844 = vld [vmem:[#allocation2 + $0x8] sm:$0xff]
        %v845 = vpack.c.bf16 %v844, %v843
        %v846 = vld [vmem:[%s748] sm:$0xf]
        %v847 = vld [vmem:[%s748 + $0x4] sm:$0xf]
        %v848 = vld [vmem:[%s748 + $0x8] sm:$0xf]
        %v849 = vld [vmem:[%s748 + $0xc] sm:$0xf]
        %v850 = vld [vmem:[%s751] sm:$0x1]
        %v852 = vlaneseq
        %v853 = vshrl.u32 %v852, 7
        %v854 = vsub.s32 0, %v853
        %v855 = vrot.slane %v850, %v854
        %v861 = vunpack.c.l.b16 %v846
        %v862 = vunpack.c.l.b16 %v847
        %v863 = vunpack.c.l.b16 %v848
        %v864 = vunpack.c.l.b16 %v849
        %v865 = vpack.c.b16 %v862, %v861
        %v866 = vpack.c.b16 %v864, %v863
        %vm869 = vcmask 261120
        %v871 = vsel %vm869, %v845, 0
        %873 = vmatprep.subr.bf16.mxu0 0
        %874 = vmatpush1.bf16.msra.mxu0 0
        %875 = vmatprep.subr.bf16.mxu0 0
        %876 = vmatpush1.bf16.msra.mxu0 0
        %877 = vmatprep.subr.bf16.mxu0 0
        %878 = vmatpush1.bf16.msra.mxu0 0
        %879 = vmatprep.subr.bf16.mxu0 0
        %880 = vmatpush1.bf16.msra.mxu0 0
        %881 = vmatprep.subr.bf16.mxu0 0
        %882 = vmatpush1.bf16.msra.mxu0 0
        %883 = vmatprep.subr.bf16.mxu0 0
        %884 = vmatpush1.bf16.msra.mxu0 0
        %885 = vmatprep.subr.bf16.mxu0 0
        %886 = vmatpush1.bf16.msra.mxu0 %v866
        %887 = vmatprep.subr.bf16.mxu0 0
        %888 = vmatpush1.bf16.msra.mxu0 %v865
        %889 = vmatprep.subr.bf16.mxu0 0
        %890 = vmatpush2.bf16.msra.mxu0 0
        %891 = vmatprep.subr.bf16.mxu0 0
        %892 = vmatpush2.bf16.msra.mxu0 0
        %893 = vmatprep.subr.bf16.mxu0 0
        %894 = vmatpush2.bf16.msra.mxu0 0
        %895 = vmatprep.subr.bf16.mxu0 0
        %896 = vmatpush2.bf16.msra.mxu0 0
        %897 = vmatprep.subr.bf16.mxu0 0
        %898 = vmatpush2.bf16.msra.mxu0 0
        %899 = vmatprep.subr.bf16.mxu0 0
        %900 = vmatpush2.bf16.msra.mxu0 0
        %901 = vmatprep.subr.bf16.mxu0 0
        %902 = vmatpush2.bf16.msra.mxu0 0
        %903 = vmatprep.subr.bf16.mxu0 0
        %904 = vmatpush2.bf16.msra.mxu0 0
        %905 = vmatprep.mubr.bf16.mxu0 0
        %906 = vmatmul.mubr.bf16.gmra.mxu0 %v871
        %v907 = vpop.f32.mrf.mxu0
        %v908 = vadd.f32 %v855, %v907
        %v909 = vpop.f32.mrf.mxu0
        %v910 = vpop.f32.mrf.mxu0
        %v911 = vadd.f32 %v855, %v910
        %v912 = vpop.f32.mrf.mxu0
        %913 = vdwg.mxu0
        %v914 = vld [vmem:[%s1] sm:$0x1]
        %v915 = vld [vmem:[%s1 + $0x1] sm:$0x1]
        %v918 = vlaneseq
        %v919 = vshrl.u32 %v918, 7
        %v920 = vsub.s32 0, %v919
        %v921 = vrot.slane %v914, %v920
        %v922 = vlaneseq
        %v923 = vshrl.u32 %v922, 7
        %v924 = vsub.s32 0, %v923
        %v925 = vrot.slane %v915, %v924
        %v928 = vld [vmem:[%s756] sm:$0xf]
        %v929 = vld [vmem:[%s756 + $0x4] sm:$0xf]
        %v930 = vld [vmem:[%s756 + $0x8] sm:$0xf]
        %v931 = vld [vmem:[%s756 + $0xc] sm:$0xf]
        %v932 = vpack.c.bf16 %v908, %v908
        %v933 = vpack.c.bf16 %v911, %v911
        %935 = vrot.lane.b32.xlu0 %v932, 96
        %v936 = vpop.permute.xlu0 %935
        %vm937 = vcmask 64512
        %v939 = vsel %vm937, %v932, 0
        %v942 = vsel %vm937, %v936, 0
        %944 = vmatprep.subr.bf16.mxu0 0
        %945 = vmatpush1.bf16.xpose.msra.mxu0 0
        %946 = vmatprep.subr.bf16.mxu0 0
        %947 = vmatpush1.bf16.xpose.msra.mxu0 0
        %948 = vmatprep.subr.bf16.mxu0 0
        %949 = vmatpush1.bf16.xpose.msra.mxu0 0
        %950 = vmatprep.subr.bf16.mxu0 0
        %951 = vmatpush1.bf16.xpose.msra.mxu0 0
        %952 = vmatprep.subr.bf16.mxu0 0
        %953 = vmatpush1.bf16.xpose.msra.mxu0 0
        %954 = vmatprep.subr.bf16.mxu0 0
        %955 = vmatpush1.bf16.xpose.msra.mxu0 0
        %956 = vmatprep.subr.bf16.mxu0 0
        %957 = vmatpush1.bf16.xpose.msra.mxu0 0
        %958 = vmatprep.subr.bf16.mxu0 0
        %959 = vmatpush1.bf16.xpose.msra.mxu0 %v942
        %960 = vmatprep.subr.bf16.mxu0 0
        %961 = vmatpush2.bf16.xpose.msra.mxu0 0
        %962 = vmatprep.subr.bf16.mxu0 0
        %963 = vmatpush2.bf16.xpose.msra.mxu0 0
        %964 = vmatprep.subr.bf16.mxu0 0
        %965 = vmatpush2.bf16.xpose.msra.mxu0 0
        %966 = vmatprep.subr.bf16.mxu0 0
        %967 = vmatpush2.bf16.xpose.msra.mxu0 0
        %968 = vmatprep.subr.bf16.mxu0 0
        %969 = vmatpush2.bf16.xpose.msra.mxu0 0
        %970 = vmatprep.subr.bf16.mxu0 0
        %971 = vmatpush2.bf16.xpose.msra.mxu0 0
        %972 = vmatprep.subr.bf16.mxu0 0
        %973 = vmatpush2.bf16.xpose.msra.mxu0 0
        %974 = vmatprep.subr.bf16.mxu0 0
        %975 = vmatpush2.bf16.xpose.msra.mxu0 0
        %976 = vmatprep.mubr.bf16.mxu0 0
        %977 = vmatmul.mubr.bf16.gmra.mxu0 %v939
        %v978 = vpop.f32.mrf.mxu0
        %v979 = vadd.f32 0.0, %v978
        %v980 = vpop.f32.mrf.mxu0
        %v981 = vpop.f32.mrf.mxu0
        %v982 = vpop.f32.mrf.mxu0
        %983 = vdwg.mxu0
        %985 = vrot.lane.b32.xlu0 %v933, 96
        %v986 = vpop.permute.xlu0 %985
        %v988 = vsel %vm937, %v933, 0
        %v991 = vsel %vm937, %v986, 0
        %993 = vmatprep.subr.bf16.mxu0 0
        %994 = vmatpush1.bf16.xpose.msra.mxu0 0
        %995 = vmatprep.subr.bf16.mxu0 0
        %996 = vmatpush1.bf16.xpose.msra.mxu0 0
        %997 = vmatprep.subr.bf16.mxu0 0
        %998 = vmatpush1.bf16.xpose.msra.mxu0 0
        %999 = vmatprep.subr.bf16.mxu0 0
        %1000 = vmatpush1.bf16.xpose.msra.mxu0 0
        %1001 = vmatprep.subr.bf16.mxu0 0
        %1002 = vmatpush1.bf16.xpose.msra.mxu0 0
        %1003 = vmatprep.subr.bf16.mxu0 0
        %1004 = vmatpush1.bf16.xpose.msra.mxu0 0
        %1005 = vmatprep.subr.bf16.mxu0 0
        %1006 = vmatpush1.bf16.xpose.msra.mxu0 0
        %1007 = vmatprep.subr.bf16.mxu0 0
        %1008 = vmatpush1.bf16.xpose.msra.mxu0 %v991
        %1009 = vmatprep.subr.bf16.mxu0 0
        %1010 = vmatpush2.bf16.xpose.msra.mxu0 0
        %1011 = vmatprep.subr.bf16.mxu0 0
        %1012 = vmatpush2.bf16.xpose.msra.mxu0 0
        %1013 = vmatprep.subr.bf16.mxu0 0
        %1014 = vmatpush2.bf16.xpose.msra.mxu0 0
        %1015 = vmatprep.subr.bf16.mxu0 0
        %1016 = vmatpush2.bf16.xpose.msra.mxu0 0
        %1017 = vmatprep.subr.bf16.mxu0 0
        %1018 = vmatpush2.bf16.xpose.msra.mxu0 0
        %1019 = vmatprep.subr.bf16.mxu0 0
        %1020 = vmatpush2.bf16.xpose.msra.mxu0 0
        %1021 = vmatprep.subr.bf16.mxu0 0
        %1022 = vmatpush2.bf16.xpose.msra.mxu0 0
        %1023 = vmatprep.subr.bf16.mxu0 0
        %1024 = vmatpush2.bf16.xpose.msra.mxu0 0
        %1025 = vmatprep.mubr.bf16.mxu0 0
        %1026 = vmatmul.mubr.bf16.gmra.mxu0 %v988
        %v1027 = vpop.f32.mrf.mxu0
        %v1028 = vadd.f32 0.0, %v1027
        %v1029 = vpop.f32.mrf.mxu0
        %v1030 = vpop.f32.mrf.mxu0
        %v1031 = vpop.f32.mrf.mxu0
        %1032 = vdwg.mxu0
        %v1033 = vmul.f32 %v979, 0.35355338
        %v1034 = vmul.f32 %v1028, 0.35355338
        %v1035 = vadd.f32 %v1033, %v921
        %v1036 = vadd.f32 %v1034, %v925
        %v1037 = vsel %vm937, %v1035, -inf
        %1038 = vmax.xlane.f32.xlu0 %v1037
        %v1039 = vpop.xlane.xlu0 %1038
        %v1040 = vsel %vm937, %v1036, -inf
        %1041 = vmax.xlane.f32.xlu0 %v1040
        %v1042 = vpop.xlane.xlu0 %1041
        %v1043 = vsub.f32 %v1035, %v1039
        %v1044 = vsub.f32 %v1036, %v1042
        %v1045 = vmul.f32 %v1043, 1.442695
        %v1046 = vpow.pop %v1045
        %v1047 = vmul.f32 %v1044, 1.442695
        %v1048 = vpow.pop %v1047
        %v1049 = vsel %vm937, %v1046, 0.0
        %1050 = vadd.xlane.f32.xlu0 %v1049
        %v1051 = vpop.xlane.xlu0 %1050
        %v1052 = vsel %vm937, %v1048, 0.0
        %1053 = vadd.xlane.f32.xlu0 %v1052
        %v1054 = vpop.xlane.xlu0 %1053
        %v1055 = vrcp.pop %v1051
        %v1056 = vrcp.pop %v1054
        %v1057 = vmul.f32 %v1046, %v1055
        %v1058 = vmul.f32 %v1048, %v1056
        %v1059 = vpack.c.bf16 %v1057, %v1057
        %v1060 = vpack.c.bf16 %v1058, %v1058
        %1061 = vrot.lane.b32.xlu0 %v932, 64
        %v1062 = vpop.permute.xlu0 %1061
        %v1064 = vsel %vm937, %v1059, 0
        %vm1066 = vcmask 1043456
        %v1068 = vsel %vm1066, %v1062, 0
        %1070 = vmatprep.subr.bf16.mxu0 0
        %1071 = vmatpush1.bf16.msra.mxu0 0
        %1072 = vmatprep.subr.bf16.mxu0 0
        %1073 = vmatpush1.bf16.msra.mxu0 0
        %1074 = vmatprep.subr.bf16.mxu0 0
        %1075 = vmatpush1.bf16.msra.mxu0 0
        %1076 = vmatprep.subr.bf16.mxu0 0
        %1077 = vmatpush1.bf16.msra.mxu0 0
        %1078 = vmatprep.subr.bf16.mxu0 0
        %1079 = vmatpush1.bf16.msra.mxu0 0
        %1080 = vmatprep.subr.bf16.mxu0 0
        %1081 = vmatpush1.bf16.msra.mxu0 0
        %1082 = vmatprep.subr.bf16.mxu0 0
        %1083 = vmatpush1.bf16.msra.mxu0 0
        %1084 = vmatprep.subr.bf16.mxu0 0
        %1085 = vmatpush1.bf16.msra.mxu0 %v1068
        %1086 = vmatprep.subr.bf16.mxu0 0
        %1087 = vmatpush2.bf16.msra.mxu0 0
        %1088 = vmatprep.subr.bf16.mxu0 0
        %1089 = vmatpush2.bf16.msra.mxu0 0
        %1090 = vmatprep.subr.bf16.mxu0 0
        %1091 = vmatpush2.bf16.msra.mxu0 0
        %1092 = vmatprep.subr.bf16.mxu0 0
        %1093 = vmatpush2.bf16.msra.mxu0 0
        %1094 = vmatprep.subr.bf16.mxu0 0
        %1095 = vmatpush2.bf16.msra.mxu0 0
        %1096 = vmatprep.subr.bf16.mxu0 0
        %1097 = vmatpush2.bf16.msra.mxu0 0
        %1098 = vmatprep.subr.bf16.mxu0 0
        %1099 = vmatpush2.bf16.msra.mxu0 0
        %1100 = vmatprep.subr.bf16.mxu0 0
        %1101 = vmatpush2.bf16.msra.mxu0 0
        %1102 = vmatprep.mubr.bf16.mxu0 0
        %1103 = vmatmul.mubr.bf16.gmra.mxu0 %v1064
        %v1104 = vpop.f32.mrf.mxu0
        %v1105 = vadd.f32 0.0, %v1104
        %v1106 = vpop.f32.mrf.mxu0
        %v1107 = vpop.f32.mrf.mxu0
        %v1108 = vpop.f32.mrf.mxu0
        %1109 = vdwg.mxu0
        %1110 = vrot.lane.b32.xlu0 %v933, 64
        %v1111 = vpop.permute.xlu0 %1110
        %v1113 = vsel %vm937, %v1060, 0
        %v1116 = vsel %vm1066, %v1111, 0
        %1118 = vmatprep.subr.bf16.mxu0 0
        %1119 = vmatpush1.bf16.msra.mxu0 0
        %1120 = vmatprep.subr.bf16.mxu0 0
        %1121 = vmatpush1.bf16.msra.mxu0 0
        %1122 = vmatprep.subr.bf16.mxu0 0
        %1123 = vmatpush1.bf16.msra.mxu0 0
        %1124 = vmatprep.subr.bf16.mxu0 0
        %1125 = vmatpush1.bf16.msra.mxu0 0
        %1126 = vmatprep.subr.bf16.mxu0 0
        %1127 = vmatpush1.bf16.msra.mxu0 0
        %1128 = vmatprep.subr.bf16.mxu0 0
        %1129 = vmatpush1.bf16.msra.mxu0 0
        %1130 = vmatprep.subr.bf16.mxu0 0
        %1131 = vmatpush1.bf16.msra.mxu0 0
        %1132 = vmatprep.subr.bf16.mxu0 0
        %1133 = vmatpush1.bf16.msra.mxu0 %v1116
        %1134 = vmatprep.subr.bf16.mxu0 0
        %1135 = vmatpush2.bf16.msra.mxu0 0
        %1136 = vmatprep.subr.bf16.mxu0 0
        %1137 = vmatpush2.bf16.msra.mxu0 0
        %1138 = vmatprep.subr.bf16.mxu0 0
        %1139 = vmatpush2.bf16.msra.mxu0 0
        %1140 = vmatprep.subr.bf16.mxu0 0
        %1141 = vmatpush2.bf16.msra.mxu0 0
        %1142 = vmatprep.subr.bf16.mxu0 0
        %1143 = vmatpush2.bf16.msra.mxu0 0
        %1144 = vmatprep.subr.bf16.mxu0 0
        %1145 = vmatpush2.bf16.msra.mxu0 0
        %1146 = vmatprep.subr.bf16.mxu0 0
        %1147 = vmatpush2.bf16.msra.mxu0 0
        %1148 = vmatprep.subr.bf16.mxu0 0
        %1149 = vmatpush2.bf16.msra.mxu0 0
        %1150 = vmatprep.mubr.bf16.mxu0 0
        %1151 = vmatmul.mubr.bf16.gmra.mxu0 %v1113
        %v1152 = vpop.f32.mrf.mxu0
        %v1153 = vadd.f32 0.0, %v1152
        %v1154 = vpop.f32.mrf.mxu0
        %v1155 = vpop.f32.mrf.mxu0
        %v1156 = vpop.f32.mrf.mxu0
        %1157 = vdwg.mxu0
        %v1158 = vpack.c.bf16 %v1153, %v1105
        %1159 = vrot.lane.b32.xlu0 %v932, 120
        %v1160 = vpop.permute.xlu0 %1159
        %1161 = vrot.lane.b32.xlu0 %v932, 88
        %v1162 = vpop.permute.xlu0 %1161
        %v1164 = vsel %vm937, %v1160, 0
        %v1167 = vsel %vm937, %v1162, 0
        %1169 = vmatprep.subr.bf16.mxu0 0
        %1170 = vmatpush1.bf16.xpose.msra.mxu0 0
        %1171 = vmatprep.subr.bf16.mxu0 0
        %1172 = vmatpush1.bf16.xpose.msra.mxu0 0
        %1173 = vmatprep.subr.bf16.mxu0 0
        %1174 = vmatpush1.bf16.xpose.msra.mxu0 0
        %1175 = vmatprep.subr.bf16.mxu0 0
        %1176 = vmatpush1.bf16.xpose.msra.mxu0 0
        %1177 = vmatprep.subr.bf16.mxu0 0
        %1178 = vmatpush1.bf16.xpose.msra.mxu0 0
        %1179 = vmatprep.subr.bf16.mxu0 0
        %1180 = vmatpush1.bf16.xpose.msra.mxu0 0
        %1181 = vmatprep.subr.bf16.mxu0 0
        %1182 = vmatpush1.bf16.xpose.msra.mxu0 0
        %1183 = vmatprep.subr.bf16.mxu0 0
        %1184 = vmatpush1.bf16.xpose.msra.mxu0 %v1167
        %1185 = vmatprep.subr.bf16.mxu0 0
        %1186 = vmatpush2.bf16.xpose.msra.mxu0 0
        %1187 = vmatprep.subr.bf16.mxu0 0
        %1188 = vmatpush2.bf16.xpose.msra.mxu0 0
        %1189 = vmatprep.subr.bf16.mxu0 0
        %1190 = vmatpush2.bf16.xpose.msra.mxu0 0
        %1191 = vmatprep.subr.bf16.mxu0 0
        %1192 = vmatpush2.bf16.xpose.msra.mxu0 0
        %1193 = vmatprep.subr.bf16.mxu0 0
        %1194 = vmatpush2.bf16.xpose.msra.mxu0 0
        %1195 = vmatprep.subr.bf16.mxu0 0
        %1196 = vmatpush2.bf16.xpose.msra.mxu0 0
        %1197 = vmatprep.subr.bf16.mxu0 0
        %1198 = vmatpush2.bf16.xpose.msra.mxu0 0
        %1199 = vmatprep.subr.bf16.mxu0 0
        %1200 = vmatpush2.bf16.xpose.msra.mxu0 0
        %1201 = vmatprep.mubr.bf16.mxu0 0
        %1202 = vmatmul.mubr.bf16.gmra.mxu0 %v1164
        %v1203 = vpop.f32.mrf.mxu0
        %v1204 = vadd.f32 0.0, %v1203
        %v1205 = vpop.f32.mrf.mxu0
        %v1206 = vpop.f32.mrf.mxu0
        %v1207 = vpop.f32.mrf.mxu0
        %1208 = vdwg.mxu0
        %1209 = vrot.lane.b32.xlu0 %v933, 120
        %v1210 = vpop.permute.xlu0 %1209
        %1211 = vrot.lane.b32.xlu0 %v933, 88
        %v1212 = vpop.permute.xlu0 %1211
        %v1214 = vsel %vm937, %v1210, 0
        %v1217 = vsel %vm937, %v1212, 0
        %1219 = vmatprep.subr.bf16.mxu0 0
        %1220 = vmatpush1.bf16.xpose.msra.mxu0 0
        %1221 = vmatprep.subr.bf16.mxu0 0
        %1222 = vmatpush1.bf16.xpose.msra.mxu0 0
        %1223 = vmatprep.subr.bf16.mxu0 0
        %1224 = vmatpush1.bf16.xpose.msra.mxu0 0
        %1225 = vmatprep.subr.bf16.mxu0 0
        %1226 = vmatpush1.bf16.xpose.msra.mxu0 0
        %1227 = vmatprep.subr.bf16.mxu0 0
        %1228 = vmatpush1.bf16.xpose.msra.mxu0 0
        %1229 = vmatprep.subr.bf16.mxu0 0
        %1230 = vmatpush1.bf16.xpose.msra.mxu0 0
        %1231 = vmatprep.subr.bf16.mxu0 0
        %1232 = vmatpush1.bf16.xpose.msra.mxu0 0
        %1233 = vmatprep.subr.bf16.mxu0 0
        %1234 = vmatpush1.bf16.xpose.msra.mxu0 %v1217
        %1235 = vmatprep.subr.bf16.mxu0 0
        %1236 = vmatpush2.bf16.xpose.msra.mxu0 0
        %1237 = vmatprep.subr.bf16.mxu0 0
        %1238 = vmatpush2.bf16.xpose.msra.mxu0 0
        %1239 = vmatprep.subr.bf16.mxu0 0
        %1240 = vmatpush2.bf16.xpose.msra.mxu0 0
        %1241 = vmatprep.subr.bf16.mxu0 0
        %1242 = vmatpush2.bf16.xpose.msra.mxu0 0
        %1243 = vmatprep.subr.bf16.mxu0 0
        %1244 = vmatpush2.bf16.xpose.msra.mxu0 0
        %1245 = vmatprep.subr.bf16.mxu0 0
        %1246 = vmatpush2.bf16.xpose.msra.mxu0 0
        %1247 = vmatprep.subr.bf16.mxu0 0
        %1248 = vmatpush2.bf16.xpose.msra.mxu0 0
        %1249 = vmatprep.subr.bf16.mxu0 0
        %1250 = vmatpush2.bf16.xpose.msra.mxu0 0
        %1251 = vmatprep.mubr.bf16.mxu0 0
        %1252 = vmatmul.mubr.bf16.gmra.mxu0 %v1214
        %v1253 = vpop.f32.mrf.mxu0
        %v1254 = vadd.f32 0.0, %v1253
        %v1255 = vpop.f32.mrf.mxu0
        %v1256 = vpop.f32.mrf.mxu0
        %v1257 = vpop.f32.mrf.mxu0
        %1258 = vdwg.mxu0
        %v1259 = vmul.f32 %v1204, 0.35355338
        %v1260 = vmul.f32 %v1254, 0.35355338
        %v1261 = vadd.f32 %v1259, %v921
        %v1262 = vadd.f32 %v1260, %v925
        %v1263 = vsel %vm937, %v1261, -inf
        %1264 = vmax.xlane.f32.xlu0 %v1263
        %v1265 = vpop.xlane.xlu0 %1264
        %v1266 = vsel %vm937, %v1262, -inf
        %1267 = vmax.xlane.f32.xlu0 %v1266
        %v1268 = vpop.xlane.xlu0 %1267
        %v1269 = vsub.f32 %v1261, %v1265
        %v1270 = vsub.f32 %v1262, %v1268
        %v1271 = vmul.f32 %v1269, 1.442695
        %v1272 = vpow.pop %v1271
        %v1273 = vmul.f32 %v1270, 1.442695
        %v1274 = vpow.pop %v1273
        %v1275 = vsel %vm937, %v1272, 0.0
        %1276 = vadd.xlane.f32.xlu0 %v1275
        %v1277 = vpop.xlane.xlu0 %1276
        %v1278 = vsel %vm937, %v1274, 0.0
        %1279 = vadd.xlane.f32.xlu0 %v1278
        %v1280 = vpop.xlane.xlu0 %1279
        %v1281 = vrcp.pop %v1277
        %v1282 = vrcp.pop %v1280
        %v1283 = vmul.f32 %v1272, %v1281
        %v1284 = vmul.f32 %v1274, %v1282
        %v1285 = vpack.c.bf16 %v1283, %v1283
        %v1286 = vpack.c.bf16 %v1284, %v1284
        %1287 = vrot.lane.b32.xlu0 %v932, 56
        %v1288 = vpop.permute.xlu0 %1287
        %v1290 = vsel %vm937, %v1285, 0
        %v1293 = vsel %vm1066, %v1288, 0
        %1295 = vmatprep.subr.bf16.mxu0 0
        %1296 = vmatpush1.bf16.msra.mxu0 0
        %1297 = vmatprep.subr.bf16.mxu0 0
        %1298 = vmatpush1.bf16.msra.mxu0 0
        %1299 = vmatprep.subr.bf16.mxu0 0
        %1300 = vmatpush1.bf16.msra.mxu0 0
        %1301 = vmatprep.subr.bf16.mxu0 0
        %1302 = vmatpush1.bf16.msra.mxu0 0
        %1303 = vmatprep.subr.bf16.mxu0 0
        %1304 = vmatpush1.bf16.msra.mxu0 0
        %1305 = vmatprep.subr.bf16.mxu0 0
        %1306 = vmatpush1.bf16.msra.mxu0 0
        %1307 = vmatprep.subr.bf16.mxu0 0
        %1308 = vmatpush1.bf16.msra.mxu0 0
        %1309 = vmatprep.subr.bf16.mxu0 0
        %1310 = vmatpush1.bf16.msra.mxu0 %v1293
        %1311 = vmatprep.subr.bf16.mxu0 0
        %1312 = vmatpush2.bf16.msra.mxu0 0
        %1313 = vmatprep.subr.bf16.mxu0 0
        %1314 = vmatpush2.bf16.msra.mxu0 0
        %1315 = vmatprep.subr.bf16.mxu0 0
        %1316 = vmatpush2.bf16.msra.mxu0 0
        %1317 = vmatprep.subr.bf16.mxu0 0
        %1318 = vmatpush2.bf16.msra.mxu0 0
        %1319 = vmatprep.subr.bf16.mxu0 0
        %1320 = vmatpush2.bf16.msra.mxu0 0
        %1321 = vmatprep.subr.bf16.mxu0 0
        %1322 = vmatpush2.bf16.msra.mxu0 0
        %1323 = vmatprep.subr.bf16.mxu0 0
        %1324 = vmatpush2.bf16.msra.mxu0 0
        %1325 = vmatprep.subr.bf16.mxu0 0
        %1326 = vmatpush2.bf16.msra.mxu0 0
        %1327 = vmatprep.mubr.bf16.mxu0 0
        %1328 = vmatmul.mubr.bf16.gmra.mxu0 %v1290
        %v1329 = vpop.f32.mrf.mxu0
        %v1330 = vadd.f32 0.0, %v1329
        %v1331 = vpop.f32.mrf.mxu0
        %v1332 = vpop.f32.mrf.mxu0
        %v1333 = vpop.f32.mrf.mxu0
        %1334 = vdwg.mxu0
        %1335 = vrot.lane.b32.xlu0 %v933, 56
        %v1336 = vpop.permute.xlu0 %1335
        %v1338 = vsel %vm937, %v1286, 0
        %v1341 = vsel %vm1066, %v1336, 0
        %1343 = vmatprep.subr.bf16.mxu0 0
        %1344 = vmatpush1.bf16.msra.mxu0 0
        %1345 = vmatprep.subr.bf16.mxu0 0
        %1346 = vmatpush1.bf16.msra.mxu0 0
        %1347 = vmatprep.subr.bf16.mxu0 0
        %1348 = vmatpush1.bf16.msra.mxu0 0
        %1349 = vmatprep.subr.bf16.mxu0 0
        %1350 = vmatpush1.bf16.msra.mxu0 0
        %1351 = vmatprep.subr.bf16.mxu0 0
        %1352 = vmatpush1.bf16.msra.mxu0 0
        %1353 = vmatprep.subr.bf16.mxu0 0
        %1354 = vmatpush1.bf16.msra.mxu0 0
        %1355 = vmatprep.subr.bf16.mxu0 0
        %1356 = vmatpush1.bf16.msra.mxu0 0
        %1357 = vmatprep.subr.bf16.mxu0 0
        %1358 = vmatpush1.bf16.msra.mxu0 %v1341
        %1359 = vmatprep.subr.bf16.mxu0 0
        %1360 = vmatpush2.bf16.msra.mxu0 0
        %1361 = vmatprep.subr.bf16.mxu0 0
        %1362 = vmatpush2.bf16.msra.mxu0 0
        %1363 = vmatprep.subr.bf16.mxu0 0
        %1364 = vmatpush2.bf16.msra.mxu0 0
        %1365 = vmatprep.subr.bf16.mxu0 0
        %1366 = vmatpush2.bf16.msra.mxu0 0
        %1367 = vmatprep.subr.bf16.mxu0 0
        %1368 = vmatpush2.bf16.msra.mxu0 0
        %1369 = vmatprep.subr.bf16.mxu0 0
        %1370 = vmatpush2.bf16.msra.mxu0 0
        %1371 = vmatprep.subr.bf16.mxu0 0
        %1372 = vmatpush2.bf16.msra.mxu0 0
        %1373 = vmatprep.subr.bf16.mxu0 0
        %1374 = vmatpush2.bf16.msra.mxu0 0
        %1375 = vmatprep.mubr.bf16.mxu0 0
        %1376 = vmatmul.mubr.bf16.gmra.mxu0 %v1338
        %v1377 = vpop.f32.mrf.mxu0
        %v1378 = vadd.f32 0.0, %v1377
        %v1379 = vpop.f32.mrf.mxu0
        %v1380 = vpop.f32.mrf.mxu0
        %v1381 = vpop.f32.mrf.mxu0
        %1382 = vdwg.mxu0
        %v1383 = vpack.c.bf16 %v1378, %v1330
        %v1385 = vsel %vm937, %v1383, 0
        %v1388 = vsel %vm1066, %v929, 0
        %1390 = vmatprep.subr.bf16.mxu0 0
        %1391 = vmatpush1.bf16.msra.mxu0 0
        %1392 = vmatprep.subr.bf16.mxu0 0
        %1393 = vmatpush1.bf16.msra.mxu0 0
        %1394 = vmatprep.subr.bf16.mxu0 0
        %1395 = vmatpush1.bf16.msra.mxu0 0
        %1396 = vmatprep.subr.bf16.mxu0 0
        %1397 = vmatpush1.bf16.msra.mxu0 0
        %1398 = vmatprep.subr.bf16.mxu0 0
        %1399 = vmatpush1.bf16.msra.mxu0 0
        %1400 = vmatprep.subr.bf16.mxu0 0
        %1401 = vmatpush1.bf16.msra.mxu0 0
        %1402 = vmatprep.subr.bf16.mxu0 0
        %1403 = vmatpush1.bf16.msra.mxu0 0
        %1404 = vmatprep.subr.bf16.mxu0 0
        %1405 = vmatpush1.bf16.msra.mxu0 %v1388
        %1406 = vmatprep.subr.bf16.mxu0 0
        %1407 = vmatpush2.bf16.msra.mxu0 0
        %1408 = vmatprep.subr.bf16.mxu0 0
        %1409 = vmatpush2.bf16.msra.mxu0 0
        %1410 = vmatprep.subr.bf16.mxu0 0
        %1411 = vmatpush2.bf16.msra.mxu0 0
        %1412 = vmatprep.subr.bf16.mxu0 0
        %1413 = vmatpush2.bf16.msra.mxu0 0
        %1414 = vmatprep.subr.bf16.mxu0 0
        %1415 = vmatpush2.bf16.msra.mxu0 0
        %1416 = vmatprep.subr.bf16.mxu0 0
        %1417 = vmatpush2.bf16.msra.mxu0 0
        %1418 = vmatprep.subr.bf16.mxu0 0
        %1419 = vmatpush2.bf16.msra.mxu0 0
        %1420 = vmatprep.subr.bf16.mxu0 0
        %1421 = vmatpush2.bf16.msra.mxu0 0
        %1422 = vmatprep.mubr.bf16.mxu0 0
        %1423 = vmatmul.mubr.bf16.gmra.mxu0 %v1385
        %v1424 = vpop.f32.mrf.mxu0
        %v1425 = vadd.f32 0.0, %v1424
        %v1426 = vpop.f32.mrf.mxu0
        %v1427 = vpop.f32.mrf.mxu0
        %v1428 = vadd.f32 0.0, %v1427
        %v1429 = vpop.f32.mrf.mxu0
        %1430 = vdwg.mxu0
        %v1432 = vsel %vm937, %v1158, 0
        %v1435 = vsel %vm1066, %v928, 0
        %1437 = vmatprep.subr.bf16.mxu0 0
        %1438 = vmatpush1.bf16.msra.mxu0 0
        %1439 = vmatprep.subr.bf16.mxu0 0
        %1440 = vmatpush1.bf16.msra.mxu0 0
        %1441 = vmatprep.subr.bf16.mxu0 0
        %1442 = vmatpush1.bf16.msra.mxu0 0
        %1443 = vmatprep.subr.bf16.mxu0 0
        %1444 = vmatpush1.bf16.msra.mxu0 0
        %1445 = vmatprep.subr.bf16.mxu0 0
        %1446 = vmatpush1.bf16.msra.mxu0 0
        %1447 = vmatprep.subr.bf16.mxu0 0
        %1448 = vmatpush1.bf16.msra.mxu0 0
        %1449 = vmatprep.subr.bf16.mxu0 0
        %1450 = vmatpush1.bf16.msra.mxu0 0
        %1451 = vmatprep.subr.bf16.mxu0 0
        %1452 = vmatpush1.bf16.msra.mxu0 %v1435
        %1453 = vmatprep.subr.bf16.mxu0 0
        %1454 = vmatpush2.bf16.msra.mxu0 0
        %1455 = vmatprep.subr.bf16.mxu0 0
        %1456 = vmatpush2.bf16.msra.mxu0 0
        %1457 = vmatprep.subr.bf16.mxu0 0
        %1458 = vmatpush2.bf16.msra.mxu0 0
        %1459 = vmatprep.subr.bf16.mxu0 0
        %1460 = vmatpush2.bf16.msra.mxu0 0
        %1461 = vmatprep.subr.bf16.mxu0 0
        %1462 = vmatpush2.bf16.msra.mxu0 0
        %1463 = vmatprep.subr.bf16.mxu0 0
        %1464 = vmatpush2.bf16.msra.mxu0 0
        %1465 = vmatprep.subr.bf16.mxu0 0
        %1466 = vmatpush2.bf16.msra.mxu0 0
        %1467 = vmatprep.subr.bf16.mxu0 0
        %1468 = vmatpush2.bf16.msra.mxu0 0
        %1469 = vmatprep.mubr.bf16.mxu0 0
        %1470 = vmatmul.mubr.bf16.gmra.mxu0 %v1432
        %v1471 = vpop.f32.mrf.mxu0
        %v1472 = vadd.f32 %v1425, %v1471
        %v1473 = vpop.f32.mrf.mxu0
        %v1474 = vpop.f32.mrf.mxu0
        %v1475 = vadd.f32 %v1428, %v1474
        %v1476 = vpop.f32.mrf.mxu0
        %1477 = vdwg.mxu0
        %1478 = vrot.lane.b32.xlu0 %v932, 112
        %v1479 = vpop.permute.xlu0 %1478
        %1480 = vrot.lane.b32.xlu0 %v932, 80
        %v1481 = vpop.permute.xlu0 %1480
        %v1483 = vsel %vm937, %v1479, 0
        %v1486 = vsel %vm937, %v1481, 0
        %1488 = vmatprep.subr.bf16.mxu0 0
        %1489 = vmatpush1.bf16.xpose.msra.mxu0 0
        %1490 = vmatprep.subr.bf16.mxu0 0
        %1491 = vmatpush1.bf16.xpose.msra.mxu0 0
        %1492 = vmatprep.subr.bf16.mxu0 0
        %1493 = vmatpush1.bf16.xpose.msra.mxu0 0
        %1494 = vmatprep.subr.bf16.mxu0 0
        %1495 = vmatpush1.bf16.xpose.msra.mxu0 0
        %1496 = vmatprep.subr.bf16.mxu0 0
        %1497 = vmatpush1.bf16.xpose.msra.mxu0 0
        %1498 = vmatprep.subr.bf16.mxu0 0
        %1499 = vmatpush1.bf16.xpose.msra.mxu0 0
        %1500 = vmatprep.subr.bf16.mxu0 0
        %1501 = vmatpush1.bf16.xpose.msra.mxu0 0
        %1502 = vmatprep.subr.bf16.mxu0 0
        %1503 = vmatpush1.bf16.xpose.msra.mxu0 %v1486
        %1504 = vmatprep.subr.bf16.mxu0 0
        %1505 = vmatpush2.bf16.xpose.msra.mxu0 0
        %1506 = vmatprep.subr.bf16.mxu0 0
        %1507 = vmatpush2.bf16.xpose.msra.mxu0 0
        %1508 = vmatprep.subr.bf16.mxu0 0
        %1509 = vmatpush2.bf16.xpose.msra.mxu0 0
        %1510 = vmatprep.subr.bf16.mxu0 0
        %1511 = vmatpush2.bf16.xpose.msra.mxu0 0
        %1512 = vmatprep.subr.bf16.mxu0 0
        %1513 = vmatpush2.bf16.xpose.msra.mxu0 0
        %1514 = vmatprep.subr.bf16.mxu0 0
        %1515 = vmatpush2.bf16.xpose.msra.mxu0 0
        %1516 = vmatprep.subr.bf16.mxu0 0
        %1517 = vmatpush2.bf16.xpose.msra.mxu0 0
        %1518 = vmatprep.subr.bf16.mxu0 0
        %1519 = vmatpush2.bf16.xpose.msra.mxu0 0
        %1520 = vmatprep.mubr.bf16.mxu0 0
        %1521 = vmatmul.mubr.bf16.gmra.mxu0 %v1483
        %v1522 = vpop.f32.mrf.mxu0
        %v1523 = vadd.f32 0.0, %v1522
        %v1524 = vpop.f32.mrf.mxu0
        %v1525 = vpop.f32.mrf.mxu0
        %v1526 = vpop.f32.mrf.mxu0
        %1527 = vdwg.mxu0
        %1528 = vrot.lane.b32.xlu0 %v933, 112
        %v1529 = vpop.permute.xlu0 %1528
        %1530 = vrot.lane.b32.xlu0 %v933, 80
        %v1531 = vpop.permute.xlu0 %1530
        %v1533 = vsel %vm937, %v1529, 0
        %v1536 = vsel %vm937, %v1531, 0
        %1538 = vmatprep.subr.bf16.mxu0 0
        %1539 = vmatpush1.bf16.xpose.msra.mxu0 0
        %1540 = vmatprep.subr.bf16.mxu0 0
        %1541 = vmatpush1.bf16.xpose.msra.mxu0 0
        %1542 = vmatprep.subr.bf16.mxu0 0
        %1543 = vmatpush1.bf16.xpose.msra.mxu0 0
        %1544 = vmatprep.subr.bf16.mxu0 0
        %1545 = vmatpush1.bf16.xpose.msra.mxu0 0
        %1546 = vmatprep.subr.bf16.mxu0 0
        %1547 = vmatpush1.bf16.xpose.msra.mxu0 0
        %1548 = vmatprep.subr.bf16.mxu0 0
        %1549 = vmatpush1.bf16.xpose.msra.mxu0 0
        %1550 = vmatprep.subr.bf16.mxu0 0
        %1551 = vmatpush1.bf16.xpose.msra.mxu0 0
        %1552 = vmatprep.subr.bf16.mxu0 0
        %1553 = vmatpush1.bf16.xpose.msra.mxu0 %v1536
        %1554 = vmatprep.subr.bf16.mxu0 0
        %1555 = vmatpush2.bf16.xpose.msra.mxu0 0
        %1556 = vmatprep.subr.bf16.mxu0 0
        %1557 = vmatpush2.bf16.xpose.msra.mxu0 0
        %1558 = vmatprep.subr.bf16.mxu0 0
        %1559 = vmatpush2.bf16.xpose.msra.mxu0 0
        %1560 = vmatprep.subr.bf16.mxu0 0
        %1561 = vmatpush2.bf16.xpose.msra.mxu0 0
        %1562 = vmatprep.subr.bf16.mxu0 0
        %1563 = vmatpush2.bf16.xpose.msra.mxu0 0
        %1564 = vmatprep.subr.bf16.mxu0 0
        %1565 = vmatpush2.bf16.xpose.msra.mxu0 0
        %1566 = vmatprep.subr.bf16.mxu0 0
        %1567 = vmatpush2.bf16.xpose.msra.mxu0 0
        %1568 = vmatprep.subr.bf16.mxu0 0
        %1569 = vmatpush2.bf16.xpose.msra.mxu0 0
        %1570 = vmatprep.mubr.bf16.mxu0 0
        %1571 = vmatmul.mubr.bf16.gmra.mxu0 %v1533
        %v1572 = vpop.f32.mrf.mxu0
        %v1573 = vadd.f32 0.0, %v1572
        %v1574 = vpop.f32.mrf.mxu0
        %v1575 = vpop.f32.mrf.mxu0
        %v1576 = vpop.f32.mrf.mxu0
        %1577 = vdwg.mxu0
        %v1578 = vmul.f32 %v1523, 0.35355338
        %v1579 = vmul.f32 %v1573, 0.35355338
        %v1580 = vadd.f32 %v1578, %v921
        %v1581 = vadd.f32 %v1579, %v925
        %v1582 = vsel %vm937, %v1580, -inf
        %1583 = vmax.xlane.f32.xlu0 %v1582
        %v1584 = vpop.xlane.xlu0 %1583
        %v1585 = vsel %vm937, %v1581, -inf
        %1586 = vmax.xlane.f32.xlu0 %v1585
        %v1587 = vpop.xlane.xlu0 %1586
        %v1588 = vsub.f32 %v1580, %v1584
        %v1589 = vsub.f32 %v1581, %v1587
        %v1590 = vmul.f32 %v1588, 1.442695
        %v1591 = vpow.pop %v1590
        %v1592 = vmul.f32 %v1589, 1.442695
        %v1593 = vpow.pop %v1592
        %v1594 = vsel %vm937, %v1591, 0.0
        %1595 = vadd.xlane.f32.xlu0 %v1594
        %v1596 = vpop.xlane.xlu0 %1595
        %v1597 = vsel %vm937, %v1593, 0.0
        %1598 = vadd.xlane.f32.xlu0 %v1597
        %v1599 = vpop.xlane.xlu0 %1598
        %v1600 = vrcp.pop %v1596
        %v1601 = vrcp.pop %v1599
        %v1602 = vmul.f32 %v1591, %v1600
        %v1603 = vmul.f32 %v1593, %v1601
        %v1604 = vpack.c.bf16 %v1602, %v1602
        %v1605 = vpack.c.bf16 %v1603, %v1603
        %1606 = vrot.lane.b32.xlu0 %v932, 48
        %v1607 = vpop.permute.xlu0 %1606
        %v1609 = vsel %vm937, %v1604, 0
        %v1612 = vsel %vm1066, %v1607, 0
        %1614 = vmatprep.subr.bf16.mxu0 0
        %1615 = vmatpush1.bf16.msra.mxu0 0
        %1616 = vmatprep.subr.bf16.mxu0 0
        %1617 = vmatpush1.bf16.msra.mxu0 0
        %1618 = vmatprep.subr.bf16.mxu0 0
        %1619 = vmatpush1.bf16.msra.mxu0 0
        %1620 = vmatprep.subr.bf16.mxu0 0
        %1621 = vmatpush1.bf16.msra.mxu0 0
        %1622 = vmatprep.subr.bf16.mxu0 0
        %1623 = vmatpush1.bf16.msra.mxu0 0
        %1624 = vmatprep.subr.bf16.mxu0 0
        %1625 = vmatpush1.bf16.msra.mxu0 0
        %1626 = vmatprep.subr.bf16.mxu0 0
        %1627 = vmatpush1.bf16.msra.mxu0 0
        %1628 = vmatprep.subr.bf16.mxu0 0
        %1629 = vmatpush1.bf16.msra.mxu0 %v1612
        %1630 = vmatprep.subr.bf16.mxu0 0
        %1631 = vmatpush2.bf16.msra.mxu0 0
        %1632 = vmatprep.subr.bf16.mxu0 0
        %1633 = vmatpush2.bf16.msra.mxu0 0
        %1634 = vmatprep.subr.bf16.mxu0 0
        %1635 = vmatpush2.bf16.msra.mxu0 0
        %1636 = vmatprep.subr.bf16.mxu0 0
        %1637 = vmatpush2.bf16.msra.mxu0 0
        %1638 = vmatprep.subr.bf16.mxu0 0
        %1639 = vmatpush2.bf16.msra.mxu0 0
        %1640 = vmatprep.subr.bf16.mxu0 0
        %1641 = vmatpush2.bf16.msra.mxu0 0
        %1642 = vmatprep.subr.bf16.mxu0 0
        %1643 = vmatpush2.bf16.msra.mxu0 0
        %1644 = vmatprep.subr.bf16.mxu0 0
        %1645 = vmatpush2.bf16.msra.mxu0 0
        %1646 = vmatprep.mubr.bf16.mxu0 0
        %1647 = vmatmul.mubr.bf16.gmra.mxu0 %v1609
        %v1648 = vpop.f32.mrf.mxu0
        %v1649 = vadd.f32 0.0, %v1648
        %v1650 = vpop.f32.mrf.mxu0
        %v1651 = vpop.f32.mrf.mxu0
        %v1652 = vpop.f32.mrf.mxu0
        %1653 = vdwg.mxu0
        %1654 = vrot.lane.b32.xlu0 %v933, 48
        %v1655 = vpop.permute.xlu0 %1654
        %v1657 = vsel %vm937, %v1605, 0
        %v1660 = vsel %vm1066, %v1655, 0
        %1662 = vmatprep.subr.bf16.mxu0 0
        %1663 = vmatpush1.bf16.msra.mxu0 0
        %1664 = vmatprep.subr.bf16.mxu0 0
        %1665 = vmatpush1.bf16.msra.mxu0 0
        %1666 = vmatprep.subr.bf16.mxu0 0
        %1667 = vmatpush1.bf16.msra.mxu0 0
        %1668 = vmatprep.subr.bf16.mxu0 0
        %1669 = vmatpush1.bf16.msra.mxu0 0
        %1670 = vmatprep.subr.bf16.mxu0 0
        %1671 = vmatpush1.bf16.msra.mxu0 0
        %1672 = vmatprep.subr.bf16.mxu0 0
        %1673 = vmatpush1.bf16.msra.mxu0 0
        %1674 = vmatprep.subr.bf16.mxu0 0
        %1675 = vmatpush1.bf16.msra.mxu0 0
        %1676 = vmatprep.subr.bf16.mxu0 0
        %1677 = vmatpush1.bf16.msra.mxu0 %v1660
        %1678 = vmatprep.subr.bf16.mxu0 0
        %1679 = vmatpush2.bf16.msra.mxu0 0
        %1680 = vmatprep.subr.bf16.mxu0 0
        %1681 = vmatpush2.bf16.msra.mxu0 0
        %1682 = vmatprep.subr.bf16.mxu0 0
        %1683 = vmatpush2.bf16.msra.mxu0 0
        %1684 = vmatprep.subr.bf16.mxu0 0
        %1685 = vmatpush2.bf16.msra.mxu0 0
        %1686 = vmatprep.subr.bf16.mxu0 0
        %1687 = vmatpush2.bf16.msra.mxu0 0
        %1688 = vmatprep.subr.bf16.mxu0 0
        %1689 = vmatpush2.bf16.msra.mxu0 0
        %1690 = vmatprep.subr.bf16.mxu0 0
        %1691 = vmatpush2.bf16.msra.mxu0 0
        %1692 = vmatprep.subr.bf16.mxu0 0
        %1693 = vmatpush2.bf16.msra.mxu0 0
        %1694 = vmatprep.mubr.bf16.mxu0 0
        %1695 = vmatmul.mubr.bf16.gmra.mxu0 %v1657
        %v1696 = vpop.f32.mrf.mxu0
        %v1697 = vadd.f32 0.0, %v1696
        %v1698 = vpop.f32.mrf.mxu0
        %v1699 = vpop.f32.mrf.mxu0
        %v1700 = vpop.f32.mrf.mxu0
        %1701 = vdwg.mxu0
        %v1702 = vpack.c.bf16 %v1697, %v1649
        %v1704 = vsel %vm937, %v1702, 0
        %v1707 = vsel %vm1066, %v930, 0
        %1709 = vmatprep.subr.bf16.mxu0 0
        %1710 = vmatpush1.bf16.msra.mxu0 0
        %1711 = vmatprep.subr.bf16.mxu0 0
        %1712 = vmatpush1.bf16.msra.mxu0 0
        %1713 = vmatprep.subr.bf16.mxu0 0
        %1714 = vmatpush1.bf16.msra.mxu0 0
        %1715 = vmatprep.subr.bf16.mxu0 0
        %1716 = vmatpush1.bf16.msra.mxu0 0
        %1717 = vmatprep.subr.bf16.mxu0 0
        %1718 = vmatpush1.bf16.msra.mxu0 0
        %1719 = vmatprep.subr.bf16.mxu0 0
        %1720 = vmatpush1.bf16.msra.mxu0 0
        %1721 = vmatprep.subr.bf16.mxu0 0
        %1722 = vmatpush1.bf16.msra.mxu0 0
        %1723 = vmatprep.subr.bf16.mxu0 0
        %1724 = vmatpush1.bf16.msra.mxu0 %v1707
        %1725 = vmatprep.subr.bf16.mxu0 0
        %1726 = vmatpush2.bf16.msra.mxu0 0
        %1727 = vmatprep.subr.bf16.mxu0 0
        %1728 = vmatpush2.bf16.msra.mxu0 0
        %1729 = vmatprep.subr.bf16.mxu0 0
        %1730 = vmatpush2.bf16.msra.mxu0 0
        %1731 = vmatprep.subr.bf16.mxu0 0
        %1732 = vmatpush2.bf16.msra.mxu0 0
        %1733 = vmatprep.subr.bf16.mxu0 0
        %1734 = vmatpush2.bf16.msra.mxu0 0
        %1735 = vmatprep.subr.bf16.mxu0 0
        %1736 = vmatpush2.bf16.msra.mxu0 0
        %1737 = vmatprep.subr.bf16.mxu0 0
        %1738 = vmatpush2.bf16.msra.mxu0 0
        %1739 = vmatprep.subr.bf16.mxu0 0
        %1740 = vmatpush2.bf16.msra.mxu0 0
        %1741 = vmatprep.mubr.bf16.mxu0 0
        %1742 = vmatmul.mubr.bf16.gmra.mxu0 %v1704
        %v1743 = vpop.f32.mrf.mxu0
        %v1744 = vadd.f32 0.0, %v1743
        %v1745 = vpop.f32.mrf.mxu0
        %v1746 = vpop.f32.mrf.mxu0
        %v1747 = vadd.f32 0.0, %v1746
        %v1748 = vpop.f32.mrf.mxu0
        %1749 = vdwg.mxu0
        %v1750 = vadd.f32 %v1472, %v1744
        %v1751 = vadd.f32 %v1475, %v1747
        %1752 = vrot.lane.b32.xlu0 %v932, 104
        %v1753 = vpop.permute.xlu0 %1752
        %1754 = vrot.lane.b32.xlu0 %v932, 72
        %v1755 = vpop.permute.xlu0 %1754
        %v1757 = vsel %vm937, %v1753, 0
        %v1760 = vsel %vm937, %v1755, 0
        %1762 = vmatprep.subr.bf16.mxu0 0
        %1763 = vmatpush1.bf16.xpose.msra.mxu0 0
        %1764 = vmatprep.subr.bf16.mxu0 0
        %1765 = vmatpush1.bf16.xpose.msra.mxu0 0
        %1766 = vmatprep.subr.bf16.mxu0 0
        %1767 = vmatpush1.bf16.xpose.msra.mxu0 0
        %1768 = vmatprep.subr.bf16.mxu0 0
        %1769 = vmatpush1.bf16.xpose.msra.mxu0 0
        %1770 = vmatprep.subr.bf16.mxu0 0
        %1771 = vmatpush1.bf16.xpose.msra.mxu0 0
        %1772 = vmatprep.subr.bf16.mxu0 0
        %1773 = vmatpush1.bf16.xpose.msra.mxu0 0
        %1774 = vmatprep.subr.bf16.mxu0 0
        %1775 = vmatpush1.bf16.xpose.msra.mxu0 0
        %1776 = vmatprep.subr.bf16.mxu0 0
        %1777 = vmatpush1.bf16.xpose.msra.mxu0 %v1760
        %1778 = vmatprep.subr.bf16.mxu0 0
        %1779 = vmatpush2.bf16.xpose.msra.mxu0 0
        %1780 = vmatprep.subr.bf16.mxu0 0
        %1781 = vmatpush2.bf16.xpose.msra.mxu0 0
        %1782 = vmatprep.subr.bf16.mxu0 0
        %1783 = vmatpush2.bf16.xpose.msra.mxu0 0
        %1784 = vmatprep.subr.bf16.mxu0 0
        %1785 = vmatpush2.bf16.xpose.msra.mxu0 0
        %1786 = vmatprep.subr.bf16.mxu0 0
        %1787 = vmatpush2.bf16.xpose.msra.mxu0 0
        %1788 = vmatprep.subr.bf16.mxu0 0
        %1789 = vmatpush2.bf16.xpose.msra.mxu0 0
        %1790 = vmatprep.subr.bf16.mxu0 0
        %1791 = vmatpush2.bf16.xpose.msra.mxu0 0
        %1792 = vmatprep.subr.bf16.mxu0 0
        %1793 = vmatpush2.bf16.xpose.msra.mxu0 0
        %1794 = vmatprep.mubr.bf16.mxu0 0
        %1795 = vmatmul.mubr.bf16.gmra.mxu0 %v1757
        %v1796 = vpop.f32.mrf.mxu0
        %v1797 = vadd.f32 0.0, %v1796
        %v1798 = vpop.f32.mrf.mxu0
        %v1799 = vpop.f32.mrf.mxu0
        %v1800 = vpop.f32.mrf.mxu0
        %1801 = vdwg.mxu0
        %1802 = vrot.lane.b32.xlu0 %v933, 104
        %v1803 = vpop.permute.xlu0 %1802
        %1804 = vrot.lane.b32.xlu0 %v933, 72
        %v1805 = vpop.permute.xlu0 %1804
        %v1807 = vsel %vm937, %v1803, 0
        %v1810 = vsel %vm937, %v1805, 0
        %1812 = vmatprep.subr.bf16.mxu0 0
        %1813 = vmatpush1.bf16.xpose.msra.mxu0 0
        %1814 = vmatprep.subr.bf16.mxu0 0
        %1815 = vmatpush1.bf16.xpose.msra.mxu0 0
        %1816 = vmatprep.subr.bf16.mxu0 0
        %1817 = vmatpush1.bf16.xpose.msra.mxu0 0
        %1818 = vmatprep.subr.bf16.mxu0 0
        %1819 = vmatpush1.bf16.xpose.msra.mxu0 0
        %1820 = vmatprep.subr.bf16.mxu0 0
        %1821 = vmatpush1.bf16.xpose.msra.mxu0 0
        %1822 = vmatprep.subr.bf16.mxu0 0
        %1823 = vmatpush1.bf16.xpose.msra.mxu0 0
        %1824 = vmatprep.subr.bf16.mxu0 0
        %1825 = vmatpush1.bf16.xpose.msra.mxu0 0
        %1826 = vmatprep.subr.bf16.mxu0 0
        %1827 = vmatpush1.bf16.xpose.msra.mxu0 %v1810
        %1828 = vmatprep.subr.bf16.mxu0 0
        %1829 = vmatpush2.bf16.xpose.msra.mxu0 0
        %1830 = vmatprep.subr.bf16.mxu0 0
        %1831 = vmatpush2.bf16.xpose.msra.mxu0 0
        %1832 = vmatprep.subr.bf16.mxu0 0
        %1833 = vmatpush2.bf16.xpose.msra.mxu0 0
        %1834 = vmatprep.subr.bf16.mxu0 0
        %1835 = vmatpush2.bf16.xpose.msra.mxu0 0
        %1836 = vmatprep.subr.bf16.mxu0 0
        %1837 = vmatpush2.bf16.xpose.msra.mxu0 0
        %1838 = vmatprep.subr.bf16.mxu0 0
        %1839 = vmatpush2.bf16.xpose.msra.mxu0 0
        %1840 = vmatprep.subr.bf16.mxu0 0
        %1841 = vmatpush2.bf16.xpose.msra.mxu0 0
        %1842 = vmatprep.subr.bf16.mxu0 0
        %1843 = vmatpush2.bf16.xpose.msra.mxu0 0
        %1844 = vmatprep.mubr.bf16.mxu0 0
        %1845 = vmatmul.mubr.bf16.gmra.mxu0 %v1807
        %v1846 = vpop.f32.mrf.mxu0
        %v1847 = vadd.f32 0.0, %v1846
        %v1848 = vpop.f32.mrf.mxu0
        %v1849 = vpop.f32.mrf.mxu0
        %v1850 = vpop.f32.mrf.mxu0
        %1851 = vdwg.mxu0
        %v1852 = vmul.f32 %v1797, 0.35355338
        %v1853 = vmul.f32 %v1847, 0.35355338
        %v1854 = vadd.f32 %v1852, %v921
        %v1855 = vadd.f32 %v1853, %v925
        %v1856 = vsel %vm937, %v1854, -inf
        %1857 = vmax.xlane.f32.xlu0 %v1856
        %v1858 = vpop.xlane.xlu0 %1857
        %v1859 = vsel %vm937, %v1855, -inf
        %1860 = vmax.xlane.f32.xlu0 %v1859
        %v1861 = vpop.xlane.xlu0 %1860
        %v1862 = vsub.f32 %v1854, %v1858
        %v1863 = vsub.f32 %v1855, %v1861
        %v1864 = vmul.f32 %v1862, 1.442695
        %v1865 = vpow.pop %v1864
        %v1866 = vmul.f32 %v1863, 1.442695
        %v1867 = vpow.pop %v1866
        %v1868 = vsel %vm937, %v1865, 0.0
        %1869 = vadd.xlane.f32.xlu0 %v1868
        %v1870 = vpop.xlane.xlu0 %1869
        %v1871 = vsel %vm937, %v1867, 0.0
        %1872 = vadd.xlane.f32.xlu0 %v1871
        %v1873 = vpop.xlane.xlu0 %1872
        %v1874 = vrcp.pop %v1870
        %v1875 = vrcp.pop %v1873
        %v1876 = vmul.f32 %v1865, %v1874
        %v1877 = vmul.f32 %v1867, %v1875
        %v1878 = vpack.c.bf16 %v1876, %v1876
        %v1879 = vpack.c.bf16 %v1877, %v1877
        %1880 = vrot.lane.b32.xlu0 %v932, 40
        %v1881 = vpop.permute.xlu0 %1880
        %v1883 = vsel %vm937, %v1878, 0
        %v1886 = vsel %vm1066, %v1881, 0
        %1888 = vmatprep.subr.bf16.mxu0 0
        %1889 = vmatpush1.bf16.msra.mxu0 0
        %1890 = vmatprep.subr.bf16.mxu0 0
        %1891 = vmatpush1.bf16.msra.mxu0 0
        %1892 = vmatprep.subr.bf16.mxu0 0
        %1893 = vmatpush1.bf16.msra.mxu0 0
        %1894 = vmatprep.subr.bf16.mxu0 0
        %1895 = vmatpush1.bf16.msra.mxu0 0
        %1896 = vmatprep.subr.bf16.mxu0 0
        %1897 = vmatpush1.bf16.msra.mxu0 0
        %1898 = vmatprep.subr.bf16.mxu0 0
        %1899 = vmatpush1.bf16.msra.mxu0 0
        %1900 = vmatprep.subr.bf16.mxu0 0
        %1901 = vmatpush1.bf16.msra.mxu0 0
        %1902 = vmatprep.subr.bf16.mxu0 0
        %1903 = vmatpush1.bf16.msra.mxu0 %v1886
        %1904 = vmatprep.subr.bf16.mxu0 0
        %1905 = vmatpush2.bf16.msra.mxu0 0
        %1906 = vmatprep.subr.bf16.mxu0 0
        %1907 = vmatpush2.bf16.msra.mxu0 0
        %1908 = vmatprep.subr.bf16.mxu0 0
        %1909 = vmatpush2.bf16.msra.mxu0 0
        %1910 = vmatprep.subr.bf16.mxu0 0
        %1911 = vmatpush2.bf16.msra.mxu0 0
        %1912 = vmatprep.subr.bf16.mxu0 0
        %1913 = vmatpush2.bf16.msra.mxu0 0
        %1914 = vmatprep.subr.bf16.mxu0 0
        %1915 = vmatpush2.bf16.msra.mxu0 0
        %1916 = vmatprep.subr.bf16.mxu0 0
        %1917 = vmatpush2.bf16.msra.mxu0 0
        %1918 = vmatprep.subr.bf16.mxu0 0
        %1919 = vmatpush2.bf16.msra.mxu0 0
        %1920 = vmatprep.mubr.bf16.mxu0 0
        %1921 = vmatmul.mubr.bf16.gmra.mxu0 %v1883
        %v1922 = vpop.f32.mrf.mxu0
        %v1923 = vadd.f32 0.0, %v1922
        %v1924 = vpop.f32.mrf.mxu0
        %v1925 = vpop.f32.mrf.mxu0
        %v1926 = vpop.f32.mrf.mxu0
        %1927 = vdwg.mxu0
        %1928 = vrot.lane.b32.xlu0 %v933, 40
        %v1929 = vpop.permute.xlu0 %1928
        %v1931 = vsel %vm937, %v1879, 0
        %v1934 = vsel %vm1066, %v1929, 0
        %1936 = vmatprep.subr.bf16.mxu0 0
        %1937 = vmatpush1.bf16.msra.mxu0 0
        %1938 = vmatprep.subr.bf16.mxu0 0
        %1939 = vmatpush1.bf16.msra.mxu0 0
        %1940 = vmatprep.subr.bf16.mxu0 0
        %1941 = vmatpush1.bf16.msra.mxu0 0
        %1942 = vmatprep.subr.bf16.mxu0 0
        %1943 = vmatpush1.bf16.msra.mxu0 0
        %1944 = vmatprep.subr.bf16.mxu0 0
        %1945 = vmatpush1.bf16.msra.mxu0 0
        %1946 = vmatprep.subr.bf16.mxu0 0
        %1947 = vmatpush1.bf16.msra.mxu0 0
        %1948 = vmatprep.subr.bf16.mxu0 0
        %1949 = vmatpush1.bf16.msra.mxu0 0
        %1950 = vmatprep.subr.bf16.mxu0 0
        %1951 = vmatpush1.bf16.msra.mxu0 %v1934
        %1952 = vmatprep.subr.bf16.mxu0 0
        %1953 = vmatpush2.bf16.msra.mxu0 0
        %1954 = vmatprep.subr.bf16.mxu0 0
        %1955 = vmatpush2.bf16.msra.mxu0 0
        %1956 = vmatprep.subr.bf16.mxu0 0
        %1957 = vmatpush2.bf16.msra.mxu0 0
        %1958 = vmatprep.subr.bf16.mxu0 0
        %1959 = vmatpush2.bf16.msra.mxu0 0
        %1960 = vmatprep.subr.bf16.mxu0 0
        %1961 = vmatpush2.bf16.msra.mxu0 0
        %1962 = vmatprep.subr.bf16.mxu0 0
        %1963 = vmatpush2.bf16.msra.mxu0 0
        %1964 = vmatprep.subr.bf16.mxu0 0
        %1965 = vmatpush2.bf16.msra.mxu0 0
        %1966 = vmatprep.subr.bf16.mxu0 0
        %1967 = vmatpush2.bf16.msra.mxu0 0
        %1968 = vmatprep.mubr.bf16.mxu0 0
        %1969 = vmatmul.mubr.bf16.gmra.mxu0 %v1931
        %v1970 = vpop.f32.mrf.mxu0
        %v1971 = vadd.f32 0.0, %v1970
        %v1972 = vpop.f32.mrf.mxu0
        %v1973 = vpop.f32.mrf.mxu0
        %v1974 = vpop.f32.mrf.mxu0
        %1975 = vdwg.mxu0
        %v1976 = vpack.c.bf16 %v1971, %v1923
        %v1978 = vsel %vm937, %v1976, 0
        %v1981 = vsel %vm1066, %v931, 0
        %1983 = vmatprep.subr.bf16.mxu0 0
        %1984 = vmatpush1.bf16.msra.mxu0 0
        %1985 = vmatprep.subr.bf16.mxu0 0
        %1986 = vmatpush1.bf16.msra.mxu0 0
        %1987 = vmatprep.subr.bf16.mxu0 0
        %1988 = vmatpush1.bf16.msra.mxu0 0
        %1989 = vmatprep.subr.bf16.mxu0 0
        %1990 = vmatpush1.bf16.msra.mxu0 0
        %1991 = vmatprep.subr.bf16.mxu0 0
        %1992 = vmatpush1.bf16.msra.mxu0 0
        %1993 = vmatprep.subr.bf16.mxu0 0
        %1994 = vmatpush1.bf16.msra.mxu0 0
        %1995 = vmatprep.subr.bf16.mxu0 0
        %1996 = vmatpush1.bf16.msra.mxu0 0
        %1997 = vmatprep.subr.bf16.mxu0 0
        %1998 = vmatpush1.bf16.msra.mxu0 %v1981
        %1999 = vmatprep.subr.bf16.mxu0 0
        %2000 = vmatpush2.bf16.msra.mxu0 0
        %2001 = vmatprep.subr.bf16.mxu0 0
        %2002 = vmatpush2.bf16.msra.mxu0 0
        %2003 = vmatprep.subr.bf16.mxu0 0
        %2004 = vmatpush2.bf16.msra.mxu0 0
        %2005 = vmatprep.subr.bf16.mxu0 0
        %2006 = vmatpush2.bf16.msra.mxu0 0
        %2007 = vmatprep.subr.bf16.mxu0 0
        %2008 = vmatpush2.bf16.msra.mxu0 0
        %2009 = vmatprep.subr.bf16.mxu0 0
        %2010 = vmatpush2.bf16.msra.mxu0 0
        %2011 = vmatprep.subr.bf16.mxu0 0
        %2012 = vmatpush2.bf16.msra.mxu0 0
        %2013 = vmatprep.subr.bf16.mxu0 0
        %2014 = vmatpush2.bf16.msra.mxu0 0
        %2015 = vmatprep.mubr.bf16.mxu0 0
        %2016 = vmatmul.mubr.bf16.gmra.mxu0 %v1978
        %v2017 = vpop.f32.mrf.mxu0
        %v2018 = vadd.f32 0.0, %v2017
        %v2019 = vpop.f32.mrf.mxu0
        %v2020 = vpop.f32.mrf.mxu0
        %v2021 = vadd.f32 0.0, %v2020
        %v2022 = vpop.f32.mrf.mxu0
        %2023 = vdwg.mxu0
        %v2024 = vadd.f32 %v1750, %v2018
        %v2025 = vadd.f32 %v1751, %v2021
        %v2026 = vld [vmem:[%s759] sm:$0x1]
        %v2028 = vlaneseq
        %v2029 = vshrl.u32 %v2028, 7
        %v2030 = vsub.s32 0, %v2029
        %v2031 = vrot.slane %v2026, %v2030
        %v2033 = vadd.f32 %v2024, %v2031
        %v2034 = vadd.f32 %v2025, %v2031
        %v2035 = vadd.f32 %v2033, %v843
        %v2036 = vadd.f32 %v2034, %v844
        %v2037 = vld [vmem:[%s762] sm:$0x1]
        %v2038 = vld [vmem:[%s765] sm:$0x1]
        %v2039 = vsel %vm869, %v2035, 0.0
        %2040 = vadd.xlane.f32.xlu0 %v2039
        %v2041 = vpop.xlane.xlu0 %2040
        %v2042 = vsel %vm869, %v2036, 0.0
        %2043 = vadd.xlane.f32.xlu0 %v2042
        %v2044 = vpop.xlane.xlu0 %2043
        %v2045 = vrcp.pop 32.0
        %v2046 = vmul.f32 %v2041, %v2045
        %v2047 = vmul.f32 %v2044, %v2045
        %v2048 = vsub.f32 %v2035, %v2046
        %v2049 = vsub.f32 %v2036, %v2047
        %v2050 = vmul.f32 %v2048, %v2048
        %v2051 = vmul.f32 %v2049, %v2049
        %v2052 = vsel %vm869, %v2050, 0.0
        %2053 = vadd.xlane.f32.xlu0 %v2052
        %v2054 = vpop.xlane.xlu0 %2053
        %v2055 = vsel %vm869, %v2051, 0.0
        %2056 = vadd.xlane.f32.xlu0 %v2055
        %v2057 = vpop.xlane.xlu0 %2056
        %v2058 = vmul.f32 %v2054, %v2045
        %v2059 = vmul.f32 %v2057, %v2045
        %v2060 = vadd.f32 %v2058, 1e-12
        %v2061 = vadd.f32 %v2059, 1e-12
        %v2062 = vrsqrt.pop %v2060
        %v2063 = vrsqrt.pop %v2061
        %v2064 = vmul.f32 %v2048, %v2062
        %v2065 = vmul.f32 %v2049, %v2063
        %v2067 = vlaneseq
        %v2068 = vshrl.u32 %v2067, 7
        %v2069 = vsub.s32 0, %v2068
        %v2070 = vrot.slane %v2037, %v2069
        %v2072 = vmul.f32 %v2064, %v2070
        %v2073 = vmul.f32 %v2065, %v2070
        %v2075 = vlaneseq
        %v2076 = vshrl.u32 %v2075, 7
        %v2077 = vsub.s32 0, %v2076
        %v2078 = vrot.slane %v2038, %v2077
        %v2080 = vadd.f32 %v2072, %v2078
        %v2081 = vadd.f32 %v2073, %v2078
        %v2082 = vpack.c.bf16 %v2081, %v2080
        %v2083 = vld [vmem:[%s770] sm:$0xf]
        %v2084 = vld [vmem:[%s770 + $0x4] sm:$0xf]
        %v2085 = vld [vmem:[%s770 + $0x8] sm:$0xf]
        %v2086 = vld [vmem:[%s770 + $0xc] sm:$0xf]
        %v2087 = vld [vmem:[%s773] sm:$0x1]
        %v2089 = vlaneseq
        %v2090 = vshrl.u32 %v2089, 7
        %v2091 = vsub.s32 0, %v2090
        %v2092 = vrot.slane %v2087, %v2091
        %v2098 = vunpack.c.l.b16 %v2083
        %v2099 = vunpack.c.l.b16 %v2084
        %v2100 = vunpack.c.l.b16 %v2085
        %v2101 = vunpack.c.l.b16 %v2086
        %v2102 = vpack.c.b16 %v2099, %v2098
        %v2103 = vpack.c.b16 %v2101, %v2100
        %v2107 = vsel %vm869, %v2082, 0
        %2109 = vmatprep.subr.bf16.mxu0 0
        %2110 = vmatpush1.bf16.msra.mxu0 0
        %2111 = vmatprep.subr.bf16.mxu0 0
        %2112 = vmatpush1.bf16.msra.mxu0 0
        %2113 = vmatprep.subr.bf16.mxu0 0
        %2114 = vmatpush1.bf16.msra.mxu0 0
        %2115 = vmatprep.subr.bf16.mxu0 0
        %2116 = vmatpush1.bf16.msra.mxu0 0
        %2117 = vmatprep.subr.bf16.mxu0 0
        %2118 = vmatpush1.bf16.msra.mxu0 0
        %2119 = vmatprep.subr.bf16.mxu0 0
        %2120 = vmatpush1.bf16.msra.mxu0 0
        %2121 = vmatprep.subr.bf16.mxu0 0
        %2122 = vmatpush1.bf16.msra.mxu0 %v2103
        %2123 = vmatprep.subr.bf16.mxu0 0
        %2124 = vmatpush1.bf16.msra.mxu0 %v2102
        %2125 = vmatprep.subr.bf16.mxu0 0
        %2126 = vmatpush2.bf16.msra.mxu0 0
        %2127 = vmatprep.subr.bf16.mxu0 0
        %2128 = vmatpush2.bf16.msra.mxu0 0
        %2129 = vmatprep.subr.bf16.mxu0 0
        %2130 = vmatpush2.bf16.msra.mxu0 0
        %2131 = vmatprep.subr.bf16.mxu0 0
        %2132 = vmatpush2.bf16.msra.mxu0 0
        %2133 = vmatprep.subr.bf16.mxu0 0
        %2134 = vmatpush2.bf16.msra.mxu0 0
        %2135 = vmatprep.subr.bf16.mxu0 0
        %2136 = vmatpush2.bf16.msra.mxu0 0
        %2137 = vmatprep.subr.bf16.mxu0 0
        %2138 = vmatpush2.bf16.msra.mxu0 0
        %2139 = vmatprep.subr.bf16.mxu0 0
        %2140 = vmatpush2.bf16.msra.mxu0 0
        %2141 = vmatprep.mubr.bf16.mxu0 0
        %2142 = vmatmul.mubr.bf16.gmra.mxu0 %v2107
        %v2143 = vpop.f32.mrf.mxu0
        %v2144 = vadd.f32 %v2092, %v2143
        %v2145 = vpop.f32.mrf.mxu0
        %v2146 = vpop.f32.mrf.mxu0
        %v2147 = vadd.f32 %v2092, %v2146
        %v2148 = vpop.f32.mrf.mxu0
        %2149 = vdwg.mxu0
        %v2150 = vmul.f32 %v2144, %v2144
        %v2151 = vmul.f32 %v2147, %v2147
        %v2152 = vmul.f32 %v2144, %v2150
        %v2153 = vmul.f32 %v2147, %v2151
        %v2154 = vmul.f32 %v2152, 0.044715
        %v2155 = vmul.f32 %v2153, 0.044715
        %v2156 = vadd.f32 %v2144, %v2154
        %v2157 = vadd.f32 %v2147, %v2155
        %v2158 = vmul.f32 %v2156, 0.7978846
        %v2159 = vmul.f32 %v2157, 0.7978846
        %v2160 = vtanh.pop %v2158
        %v2161 = vtanh.pop %v2159
        %v2162 = vadd.f32 %v2160, 1.0
        %v2163 = vadd.f32 %v2161, 1.0
        %v2164 = vmul.f32 %v2162, 0.5
        %v2165 = vmul.f32 %v2163, 0.5
        %v2166 = vmul.f32 %v2144, %v2164
        %v2167 = vmul.f32 %v2147, %v2165
        %v2168 = vpack.c.bf16 %v2167, %v2166
        %v2169 = vld [vmem:[%s778] sm:$0xf]
        %v2170 = vld [vmem:[%s778 + $0x4] sm:$0xf]
        %v2171 = vld [vmem:[%s778 + $0x8] sm:$0xf]
        %v2172 = vld [vmem:[%s778 + $0xc] sm:$0xf]
        %v2173 = vld [vmem:[%s778 + $0x10] sm:$0xf]
        %v2174 = vld [vmem:[%s778 + $0x14] sm:$0xf]
        %v2175 = vld [vmem:[%s778 + $0x18] sm:$0xf]
        %v2176 = vld [vmem:[%s778 + $0x1c] sm:$0xf]
        %v2177 = vld [vmem:[%s781] sm:$0x1]
        %v2179 = vlaneseq
        %v2180 = vshrl.u32 %v2179, 7
        %v2181 = vsub.s32 0, %v2180
        %v2182 = vrot.slane %v2177, %v2181
        %v2192 = vunpack.c.l.b16 %v2169
        %v2193 = vunpack.c.l.b16 %v2170
        %v2194 = vunpack.c.l.b16 %v2171
        %v2195 = vunpack.c.l.b16 %v2172
        %v2196 = vunpack.c.l.b16 %v2173
        %v2197 = vunpack.c.l.b16 %v2174
        %v2198 = vunpack.c.l.b16 %v2175
        %v2199 = vunpack.c.l.b16 %v2176
        %v2200 = vpack.c.b16 %v2193, %v2192
        %v2201 = vpack.c.b16 %v2195, %v2194
        %v2202 = vpack.c.b16 %v2197, %v2196
        %v2203 = vpack.c.b16 %v2199, %v2198
        %vm2208 = vcmask 523264
        %v2210 = vsel %vm2208, %v2168, 0
        %2212 = vmatprep.subr.bf16.mxu0 0
        %2213 = vmatpush1.bf16.msra.mxu0 0
        %2214 = vmatprep.subr.bf16.mxu0 0
        %2215 = vmatpush1.bf16.msra.mxu0 0
        %2216 = vmatprep.subr.bf16.mxu0 0
        %2217 = vmatpush1.bf16.msra.mxu0 0
        %2218 = vmatprep.subr.bf16.mxu0 0
        %2219 = vmatpush1.bf16.msra.mxu0 0
        %2220 = vmatprep.subr.bf16.mxu0 0
        %2221 = vmatpush1.bf16.msra.mxu0 %v2203
        %2222 = vmatprep.subr.bf16.mxu0 0
        %2223 = vmatpush1.bf16.msra.mxu0 %v2202
        %2224 = vmatprep.subr.bf16.mxu0 0
        %2225 = vmatpush1.bf16.msra.mxu0 %v2201
        %2226 = vmatprep.subr.bf16.mxu0 0
        %2227 = vmatpush1.bf16.msra.mxu0 %v2200
        %2228 = vmatprep.subr.bf16.mxu0 0
        %2229 = vmatpush2.bf16.msra.mxu0 0
        %2230 = vmatprep.subr.bf16.mxu0 0
        %2231 = vmatpush2.bf16.msra.mxu0 0
        %2232 = vmatprep.subr.bf16.mxu0 0
        %2233 = vmatpush2.bf16.msra.mxu0 0
        %2234 = vmatprep.subr.bf16.mxu0 0
        %2235 = vmatpush2.bf16.msra.mxu0 0
        %2236 = vmatprep.subr.bf16.mxu0 0
        %2237 = vmatpush2.bf16.msra.mxu0 0
        %2238 = vmatprep.subr.bf16.mxu0 0
        %2239 = vmatpush2.bf16.msra.mxu0 0
        %2240 = vmatprep.subr.bf16.mxu0 0
        %2241 = vmatpush2.bf16.msra.mxu0 0
        %2242 = vmatprep.subr.bf16.mxu0 0
        %2243 = vmatpush2.bf16.msra.mxu0 0
        %2244 = vmatprep.mubr.bf16.mxu0 0
        %2245 = vmatmul.mubr.bf16.gmra.mxu0 %v2210
        %v2246 = vpop.f32.mrf.mxu0
        %v2247 = vadd.f32 %v2182, %v2246
        %v2248 = vpop.f32.mrf.mxu0
        %v2249 = vpop.f32.mrf.mxu0
        %v2250 = vadd.f32 %v2182, %v2249
        %v2251 = vpop.f32.mrf.mxu0
        %2252 = vdwg.mxu0
        %v2253 = vadd.f32 %v2247, %v2080
        %v2254 = vadd.f32 %v2250, %v2081
        %v2255 = vld [vmem:[%s784] sm:$0x1]
        %v2256 = vld [vmem:[%s787] sm:$0x1]
        %v2257 = vsel %vm869, %v2253, 0.0
        %2258 = vadd.xlane.f32.xlu0 %v2257
        %v2259 = vpop.xlane.xlu0 %2258
        %v2260 = vsel %vm869, %v2254, 0.0
        %2261 = vadd.xlane.f32.xlu0 %v2260
        %v2262 = vpop.xlane.xlu0 %2261
        %v2263 = vmul.f32 %v2259, %v2045
        %v2264 = vmul.f32 %v2262, %v2045
        %v2265 = vsub.f32 %v2253, %v2263
        %v2266 = vsub.f32 %v2254, %v2264
        %v2267 = vmul.f32 %v2265, %v2265
        %v2268 = vmul.f32 %v2266, %v2266
        %v2269 = vsel %vm869, %v2267, 0.0
        %2270 = vadd.xlane.f32.xlu0 %v2269
        %v2271 = vpop.xlane.xlu0 %2270
        %v2272 = vsel %vm869, %v2268, 0.0
        %2273 = vadd.xlane.f32.xlu0 %v2272
        %v2274 = vpop.xlane.xlu0 %2273
        %v2275 = vmul.f32 %v2271, %v2045
        %v2276 = vmul.f32 %v2274, %v2045
        %v2277 = vadd.f32 %v2275, 1e-12
        %v2278 = vadd.f32 %v2276, 1e-12
        %v2279 = vrsqrt.pop %v2277
        %v2280 = vrsqrt.pop %v2278
        %v2281 = vmul.f32 %v2265, %v2279
        %v2282 = vmul.f32 %v2266, %v2280
        %v2284 = vlaneseq
        %v2285 = vshrl.u32 %v2284, 7
        %v2286 = vsub.s32 0, %v2285
        %v2287 = vrot.slane %v2255, %v2286
        %v2289 = vmul.f32 %v2281, %v2287
        %v2290 = vmul.f32 %v2282, %v2287
        %v2292 = vlaneseq
        %v2293 = vshrl.u32 %v2292, 7
        %v2294 = vsub.s32 0, %v2293
        %v2295 = vrot.slane %v2256, %v2294
        %v2297 = vadd.f32 %v2289, %v2295
        %v2298 = vadd.f32 %v2290, %v2295
        %2299 = vst.msk [vmem:[#allocation2] sm:$0xff] %vm869, %v2297
        %2300 = vst.msk [vmem:[#allocation2 + $0x8] sm:$0xff] %vm869, %v2298
        %p2301 = scmp.eq.s32.totalorder %s32, 1
        // Predicated region
        $region105: #{bert_text_processor.1} parent=99 // pred_check
          %p2302 = pneg %p2301
        $region106: #{bert_text_processor.1} parent=99 // pred_check_branch
          %2304 = sbr.rel (%p2302) target = $region108
        $region107: #{bert_text_processor.1} parent=99 // pred_region
          %v2305 = vld [vmem:[#allocation2] ss:$8 sm:$0x3]
          %v2306 = vpack.c.bf16 %v2305, %v2305
          %v2307 = vld [vmem:[%s16] sm:$0xf]
          %v2308 = vld [vmem:[%s16 + $0x4] sm:$0xf]
          %v2309 = vld [vmem:[%s16 + $0x8] sm:$0xf]
          %v2310 = vld [vmem:[%s16 + $0xc] sm:$0xf]
          %v2311 = vld [vmem:[%s17] sm:$0x1]
          %v2313 = vlaneseq
          %v2314 = vshrl.u32 %v2313, 7
          %v2315 = vsub.s32 0, %v2314
          %v2316 = vrot.slane %v2311, %v2315
          %v2322 = vunpack.c.l.b16 %v2307
          %v2323 = vunpack.c.l.b16 %v2308
          %v2324 = vunpack.c.l.b16 %v2309
          %v2325 = vunpack.c.l.b16 %v2310
          %v2326 = vpack.c.b16 %v2323, %v2322
          %v2327 = vpack.c.b16 %v2325, %v2324
          %v2331 = vsel %vm869, %v2306, 0
          %2333 = vmatprep.subr.bf16.mxu0 0
          %2334 = vmatpush1.bf16.msra.mxu0 0
          %2335 = vmatprep.subr.bf16.mxu0 0
          %2336 = vmatpush1.bf16.msra.mxu0 0
          %2337 = vmatprep.subr.bf16.mxu0 0
          %2338 = vmatpush1.bf16.msra.mxu0 0
          %2339 = vmatprep.subr.bf16.mxu0 0
          %2340 = vmatpush1.bf16.msra.mxu0 0
          %2341 = vmatprep.subr.bf16.mxu0 0
          %2342 = vmatpush1.bf16.msra.mxu0 0
          %2343 = vmatprep.subr.bf16.mxu0 0
          %2344 = vmatpush1.bf16.msra.mxu0 0
          %2345 = vmatprep.subr.bf16.mxu0 0
          %2346 = vmatpush1.bf16.msra.mxu0 %v2327
          %2347 = vmatprep.subr.bf16.mxu0 0
          %2348 = vmatpush1.bf16.msra.mxu0 %v2326
          %2349 = vmatprep.subr.bf16.mxu0 0
          %2350 = vmatpush2.bf16.msra.mxu0 0
          %2351 = vmatprep.subr.bf16.mxu0 0
          %2352 = vmatpush2.bf16.msra.mxu0 0
          %2353 = vmatprep.subr.bf16.mxu0 0
          %2354 = vmatpush2.bf16.msra.mxu0 0
          %2355 = vmatprep.subr.bf16.mxu0 0
          %2356 = vmatpush2.bf16.msra.mxu0 0
          %2357 = vmatprep.subr.bf16.mxu0 0
          %2358 = vmatpush2.bf16.msra.mxu0 0
          %2359 = vmatprep.subr.bf16.mxu0 0
          %2360 = vmatpush2.bf16.msra.mxu0 0
          %2361 = vmatprep.subr.bf16.mxu0 0
          %2362 = vmatpush2.bf16.msra.mxu0 0
          %2363 = vmatprep.subr.bf16.mxu0 0
          %2364 = vmatpush2.bf16.msra.mxu0 0
          %2365 = vmatprep.mubr.bf16.mxu0 0
          %2366 = vmatmul.mubr.bf16.gmra.mxu0 %v2331
          %v2367 = vpop.f32.mrf.mxu0
          %v2368 = vadd.f32 %v2316, %v2367
          %v2369 = vpop.f32.mrf.mxu0
          %v2370 = vpop.f32.mrf.mxu0
          %v2371 = vpop.f32.mrf.mxu0
          %2372 = vdwg.mxu0
          %v2373 = vtanh.pop %v2368
          %v2374 = vpack.c.bf16 %v2373, %v2373
          %v2375 = vld [vmem:[%s18] sm:$0xf]
          %v2376 = vld [vmem:[%s18 + $0x4] sm:$0xf]
          %v2377 = vld [vmem:[%s18 + $0x8] sm:$0xf]
          %v2378 = vld [vmem:[%s18 + $0xc] sm:$0xf]
          %v2379 = vld [vmem:[%s19] sm:$0x1]
          %v2381 = vlaneseq
          %v2382 = vshrl.u32 %v2381, 7
          %v2383 = vsub.s32 0, %v2382
          %v2384 = vrot.slane %v2379, %v2383
          %v2390 = vunpack.c.l.b16 %v2375
          %v2391 = vunpack.c.l.b16 %v2376
          %v2392 = vunpack.c.l.b16 %v2377
          %v2393 = vunpack.c.l.b16 %v2378
          %v2394 = vpack.c.b16 %v2391, %v2390
          %v2395 = vpack.c.b16 %v2393, %v2392
          %v2399 = vsel %vm869, %v2374, 0
          %2401 = vmatprep.subr.bf16.mxu0 0
          %2402 = vmatpush1.bf16.msra.mxu0 0
          %2403 = vmatprep.subr.bf16.mxu0 0
          %2404 = vmatpush1.bf16.msra.mxu0 0
          %2405 = vmatprep.subr.bf16.mxu0 0
          %2406 = vmatpush1.bf16.msra.mxu0 0
          %2407 = vmatprep.subr.bf16.mxu0 0
          %2408 = vmatpush1.bf16.msra.mxu0 0
          %2409 = vmatprep.subr.bf16.mxu0 0
          %2410 = vmatpush1.bf16.msra.mxu0 0
          %2411 = vmatprep.subr.bf16.mxu0 0
          %2412 = vmatpush1.bf16.msra.mxu0 0
          %2413 = vmatprep.subr.bf16.mxu0 0
          %2414 = vmatpush1.bf16.msra.mxu0 %v2395
          %2415 = vmatprep.subr.bf16.mxu0 0
          %2416 = vmatpush1.bf16.msra.mxu0 %v2394
          %2417 = vmatprep.subr.bf16.mxu0 0
          %2418 = vmatpush2.bf16.msra.mxu0 0
          %2419 = vmatprep.subr.bf16.mxu0 0
          %2420 = vmatpush2.bf16.msra.mxu0 0
          %2421 = vmatprep.subr.bf16.mxu0 0
          %2422 = vmatpush2.bf16.msra.mxu0 0
          %2423 = vmatprep.subr.bf16.mxu0 0
          %2424 = vmatpush2.bf16.msra.mxu0 0
          %2425 = vmatprep.subr.bf16.mxu0 0
          %2426 = vmatpush2.bf16.msra.mxu0 0
          %2427 = vmatprep.subr.bf16.mxu0 0
          %2428 = vmatpush2.bf16.msra.mxu0 0
          %2429 = vmatprep.subr.bf16.mxu0 0
          %2430 = vmatpush2.bf16.msra.mxu0 0
          %2431 = vmatprep.subr.bf16.mxu0 0
          %2432 = vmatpush2.bf16.msra.mxu0 0
          %2433 = vmatprep.mubr.bf16.mxu0 0
          %2434 = vmatmul.mubr.bf16.gmra.mxu0 %v2399
          %v2435 = vpop.f32.mrf.mxu0
          %v2436 = vadd.f32 %v2384, %v2435
          %v2437 = vpop.f32.mrf.mxu0
          %v2438 = vpop.f32.mrf.mxu0
          %v2439 = vpop.f32.mrf.mxu0
          %2440 = vdwg.mxu0
          %vm2441 = vcmask 254976
          %2442 = vst.msk [vmem:[#allocation3] sm:$0x3] %vm2441, %v2436
        $region108: #{bert_text_processor.1} parent=99 // pred_fallthru
          _
        // Predicated region
        $region109: #{bert_text_processor.1} parent=99 // pred_check
          %p2443 = pneg %p525
        $region110: #{bert_text_processor.1} parent=99 // pred_check_branch
          %2445 = sbr.rel (%p2443) target = $region112
        $region111: #{bert_text_processor.1} parent=99 // pred_region
          %s2447 = ssub.s32 32, 32
          %2448 = vsyncadd [#allocation4], %s2447
          %s2450 = sshll.u32 [#allocation3], 4
          %s2451 = int_to_ptr.vmem [resolvable:$true] %s2450
          %2453 = dma.vmem_to_hbm [thread:$0]  %s2451, 32, %s20, [#allocation4]
        $region112: #{bert_text_processor.1} parent=99 // pred_fallthru
          _
        // Predicated region
        $region113: #{bert_text_processor.1} parent=99 // pred_check
          %p2454 = pneg %p525
        $region114: #{bert_text_processor.1} parent=99 // pred_check_branch
          %2456 = sbr.rel (%p2454) target = $region116
        $region115: #{bert_text_processor.1} parent=99 // pred_region
          %2457 = dma.done [#allocation4], 32
        $region116: #{bert_text_processor.1} parent=99 // pred_fallthru
          _
      $region100: #{bert_text_processor.1} parent=5 // pred_fallthru
        _
      %p2458 = scmp.le.s32.totalorder 2, %s27
      // Predicated region
      $region117: #{bert_text_processor.1} parent=5 // pred_check
        %p2459 = pneg %p2458
      $region118: #{bert_text_processor.1} parent=5 // pred_check_branch
        %2461 = sbr.rel (%p2459) target = $region120
      $region119: #{bert_text_processor.1} parent=5 // pred_region
        %s2462 = ssub.s32 %s27, 2
      $region120: #{bert_text_processor.1} parent=5 // pred_fallthru
        _
    $region6: #{bert_text_processor.1} parent=1 // loop_footer
      %s31 = sadd.s32 1, %s27
    $region7: #{bert_text_processor.1} parent=1 // loop_footer_branch
      %26 = sbr.rel target = $region3
    $region8: #{bert_text_processor.1} parent=1 // loop_exit
      _
    %2463 = vsyncpa [#allocation4], 1
    %s2464 = scalar_lea.sflag [#allocation4], 1
    %2465 = vsyncpa %s2464, 1

</llo_original>
